<compile_context>
chip_gen: v7x
topology: tpu7x:2x2x1
jax: 0.10.0
libtpu: 0.0.40
codegen_flags: <defaults>
</compile_context>

<pallas_src>
import functools
import math

import jax
import jax.numpy as jnp
from jax.experimental import pallas as pl
from jax.experimental.pallas import tpu as pltpu

BN_EPS = 1e-5
FUSE_MAX_OUT = 2048      # fuse the head into the trunk when padded out_dim <= this


def _round_up(x, m):
    return (x + m - 1) // m * m


def _vmem_capacity_bytes():
    try:
        return int(pltpu.get_tpu_info().vmem_capacity_bytes)
    except Exception:
        return 64 << 20          # conservative fallback (v7x per-core VMEM)


_VMEM_CAP = _vmem_capacity_bytes()


def _vmem_limit(nbytes):
    """Scoped-VMEM request: footprint + 50% headroom, generation-aware clamp."""
    hi = min(_VMEM_CAP * 3 // 4, 100 << 20)
    want = _round_up(int(nbytes * 1.5), 1 << 20)
    return max(8 << 20, min(hi, want))


def _head_layout(out_dim):
    """Returns (padded out_dim, fused?) for the final Linear+Tanh."""
    pad128 = _round_up(out_dim, 128)
    if pad128 <= FUSE_MAX_OUT:
        return pad128, True
    return _round_up(out_dim, 512), False


# ---------------------------------------------------------------------------
# Kernel bodies
# ---------------------------------------------------------------------------
def _lin_bn_relu(h, inv_b, w_ref, b_ref, g_ref, be_ref):
    """Linear (bf16 MXU operands, f32 acc) + training-mode BatchNorm1d + ReLU."""
    h = jnp.dot(h.astype(jnp.bfloat16), w_ref[...],
                preferred_element_type=jnp.float32) + b_ref[...]
    mean = jnp.sum(h, axis=0, keepdims=True) * inv_b
    c = h - mean                                           # mean-subtracted, two-pass
    var = jnp.sum(c * c, axis=0, keepdims=True) * inv_b    # biased var, like PyTorch
    scale = g_ref[...] * jax.lax.rsqrt(var + BN_EPS)
    return jnp.maximum(c * scale + be_ref[...], 0.0)


def _trunk_body(x_ref, w1, b1, w2, b2, g2, be2, w3, b3, g3, be3,
                w4, b4, g4, be4):
    inv_b = 1.0 / x_ref.shape[0]
    # block 1: Linear(input_dim, 128) + ReLU (no normalization)
    h = jnp.dot(x_ref[...].astype(jnp.bfloat16), w1[...],
                preferred_element_type=jnp.float32) + b1[...]
    h = jnp.maximum(h, 0.0)
    h = _lin_bn_relu(h, inv_b, w2, b2, g2, be2)   # 128  -> 256
    h = _lin_bn_relu(h, inv_b, w3, b3, g3, be3)   # 256  -> 512
    h = _lin_bn_relu(h, inv_b, w4, b4, g4, be4)   # 512  -> 1024
    return h


def _fused_kernel(x_ref, w1, b1, w2, b2, g2, be2, w3, b3, g3, be3,
                  w4, b4, g4, be4, w5, b5, o_ref):
    """Full generator (small head): trunk + Linear(1024, out_pad) + Tanh."""
    h = _trunk_body(x_ref, w1, b1, w2, b2, g2, be2, w3, b3, g3, be3,
                    w4, b4, g4, be4)
    out = jnp.dot(h.astype(jnp.bfloat16), w5[...],
                  preferred_element_type=jnp.float32) + b5[...]
    o_ref[...] = jnp.tanh(out)


def _trunk_kernel(x_ref, w1, b1, w2, b2, g2, be2, w3, b3, g3, be3,
                  w4, b4, g4, be4, h_ref):
    """Trunk only (large head path). Output stored bf16: it is only consumed
    as a bf16 matmul operand by the head, so this is lossless for the head."""
    h = _trunk_body(x_ref, w1, b1, w2, b2, g2, be2, w3, b3, g3, be3,
                    w4, b4, g4, be4)
    h_ref[...] = h.astype(jnp.bfloat16)


def _head_kernel(h_ref, w_ref, b_ref, o_ref):
    """One (tm, tn) tile of Linear(1024, out_pad) + Tanh."""
    out = jnp.dot(h_ref[...], w_ref[...],
                  preferred_element_type=jnp.float32) + b_ref[...]
    o_ref[...] = jnp.tanh(out)


# ---------------------------------------------------------------------------
# Parameter handling
# ---------------------------------------------------------------------------
def init_generator_params(key, input_dim, output_shape):
    """PyTorch-style uniform init. Linear weights stored as (in, out), f32."""
    out_dim = int(math.prod(output_shape))
    dims = [(input_dim, 128), (128, 256), (256, 512), (512, 1024), (1024, out_dim)]
    params = {}
    keys = jax.random.split(key, 2 * len(dims))
    for i, (fin, fout) in enumerate(dims):
        bound = 1.0 / math.sqrt(fin)
        params[f"w{i + 1}"] = jax.random.uniform(
            keys[2 * i], (fin, fout), jnp.float32, -bound, bound)
        params[f"b{i + 1}"] = jax.random.uniform(
            keys[2 * i + 1], (1, fout), jnp.float32, -bound, bound)
    for i in (2, 3, 4):
        fout = dims[i - 1][1]
        params[f"g{i}"] = jnp.ones((1, fout), jnp.float32)
        params[f"be{i}"] = jnp.zeros((1, fout), jnp.float32)
    return params


def prepare_generator_params(params, output_shape):
    """One-time weight prep (call once per parameter update, NOT per forward):
    bf16 matmul weights + lane-padded head weight/bias."""
    out_dim = int(math.prod(output_shape))
    out_dim_pad, _ = _head_layout(out_dim)
    prep = dict(params)
    for i in range(1, 6):
        prep[f"w{i}"] = params[f"w{i}"].astype(jnp.bfloat16)
    if out_dim_pad != out_dim:
        pad = out_dim_pad - out_dim
        prep["w5"] = jnp.pad(prep["w5"], ((0, 0), (0, pad)))
        prep["b5"] = jnp.pad(params["b5"], ((0, 0), (0, pad)))
    return prep


# ---------------------------------------------------------------------------
# Forward
# ---------------------------------------------------------------------------
@functools.partial(jax.jit, static_argnames=("output_shape",))
def generator_forward(x, prep, output_shape):
    """x: (B, input_dim) f32 noise -> (B, *output_shape) f32 image.
    `prep` must come from prepare_generator_params(params, output_shape)."""
    B, input_dim = x.shape
    out_dim = int(math.prod(output_shape))
    out_dim_pad, fused = _head_layout(out_dim)

    trunk_args = (
        x,
        prep["w1"], prep["b1"],
        prep["w2"], prep["b2"], prep["g2"], prep["be2"],
        prep["w3"], prep["b3"], prep["g3"], prep["be3"],
        prep["w4"], prep["b4"], prep["g4"], prep["be4"],
    )
    vmem = pl.BlockSpec(memory_space=pltpu.MemorySpace.VMEM)
    trunk_flops = 2 * B * (input_dim * 128 + 128 * 256 + 256 * 512 + 512 * 1024)
    trunk_arg_bytes = sum(int(a.size) * a.dtype.itemsize for a in trunk_args)
    # live f32 temps: h, centered, scale/shift broadcasts, bf16 cast copy
    trunk_tmp_bytes = 4 * B * 1024 * 4

    if fused:
        # -------- single fused kernel: trunk + head, no second launch --------
        args = trunk_args + (prep["w5"], prep["b5"])
        arg_bytes = sum(int(a.size) * a.dtype.itemsize for a in args)
        out_bytes = B * out_dim_pad * 4
        flat = pl.pallas_call(
            _fused_kernel,
            out_shape=jax.ShapeDtypeStruct((B, out_dim_pad), jnp.float32),
            in_specs=[vmem] * len(args),
            out_specs=vmem,
            compiler_params=pltpu.CompilerParams(
                vmem_limit_bytes=_vmem_limit(
                    arg_bytes + 2 * out_bytes + trunk_tmp_bytes)),
            cost_estimate=pl.CostEstimate(
                flops=trunk_flops + 2 * B * 1024 * out_dim_pad,
                transcendentals=B * out_dim_pad,
                bytes_accessed=arg_bytes + out_bytes),
        )(*args)
    else:
        # -------- trunk kernel, then tiled head kernel ------------------------
        trunk_out_bytes = B * 1024 * 2
        h4 = pl.pallas_call(
            _trunk_kernel,
            out_shape=jax.ShapeDtypeStruct((B, 1024), jnp.bfloat16),
            in_specs=[vmem] * len(trunk_args),
            out_specs=vmem,
            compiler_params=pltpu.CompilerParams(
                vmem_limit_bytes=_vmem_limit(
                    trunk_arg_bytes + trunk_out_bytes + trunk_tmp_bytes)),
            cost_estimate=pl.CostEstimate(
                flops=trunk_flops, transcendentals=0,
                bytes_accessed=trunk_arg_bytes + trunk_out_bytes),
        )(*trunk_args)

        w5, b5 = prep["w5"], prep["b5"]
        # Lane-dense N tile >= 512 (out_dim_pad is a multiple of 512).
        if out_dim_pad % 2048 == 0:
            tn = 2048
        elif out_dim_pad % 1024 == 0:
            tn = 1024
        else:
            tn = 512
        # Batch tile: whole batch in one tile whenever the double-buffered
        # blocks fit the VMEM budget — then w5 streams from HBM exactly once.
        budget = int(_VMEM_CAP * 0.4)
        fixed = 1024 * tn * 2 + tn * 4               # w5 + bias block
        per_row = 1024 * 2 + tn * 4                  # h + out rows
        tm_cap = max(8, (budget // 2 - fixed) // per_row)
        if B <= tm_cap:
            tm, b_pad, h_in = B, B, h4               # no activation padding
        else:
            tm = min(1024, max(128, (tm_cap // 128) * 128))
            b_pad = _round_up(B, tm)
            h_in = jnp.pad(h4, ((0, b_pad - B), (0, 0)))

        grid = (b_pad // tm, out_dim_pad // tn)
        block_bytes = tm * 1024 * 2 + 1024 * tn * 2 + tn * 4 + tm * tn * 4
        head_io_bytes = (b_pad * 1024 * 2
                         + grid[0] * 1024 * out_dim_pad * 2   # w5 re-read per i block
                         + out_dim_pad * 4
                         + b_pad * out_dim_pad * 4)

        flat = pl.pallas_call(
            _head_kernel,
            out_shape=jax.ShapeDtypeStruct((b_pad, out_dim_pad), jnp.float32),
            grid=grid,
            in_specs=[
                pl.BlockSpec((tm, 1024), lambda i, j: (i, 0)),   # hidden batch tile
                pl.BlockSpec((1024, tn), lambda i, j: (0, j)),   # w5 column tile
                pl.BlockSpec((1, tn), lambda i, j: (0, j)),      # bias column tile
            ],
            out_specs=pl.BlockSpec((tm, tn), lambda i, j: (i, j)),
            compiler_params=pltpu.CompilerParams(
                dimension_semantics=("parallel", "parallel"),
                vmem_limit_bytes=_vmem_limit(2 * block_bytes)),
            cost_estimate=pl.CostEstimate(
                flops=2 * b_pad * 1024 * out_dim_pad,
                transcendentals=b_pad * out_dim_pad,
                bytes_accessed=head_io_bytes),
        )(h_in, w5, b5)
        if b_pad != B:
            flat = flat[:B]

    if out_dim_pad != out_dim:
        flat = flat[:, :out_dim]
    return flat.reshape(B, *output_shape)


# ---------------------------------------------------------------------------
# Pure-JAX reference (mirrors the kernel math: bf16 matmul operands, f32
# accumulation, mean-subtracted training-mode BN).
# ---------------------------------------------------------------------------
def _reference_forward(x, params, output_shape):
    def dot_bf16(a, w):
        return jnp.dot(a.astype(jnp.bfloat16), w.astype(jnp.bfloat16),
                       preferred_element_type=jnp.float32)

    h = jnp.maximum(dot_bf16(x, params["w1"]) + params["b1"], 0.0)
    for i in (2, 3, 4):
        h = dot_bf16(h, params[f"w{i}"]) + params[f"b{i}"]
        mean = jnp.mean(h, axis=0, keepdims=True)
        c = h - mean
        var = jnp.mean(c * c, axis=0, keepdims=True)
        scale = params[f"g{i}"] * jax.lax.rsqrt(var + BN_EPS)
        h = jnp.maximum(c * scale + params[f"be{i}"], 0.0)
    out = jnp.tanh(dot_bf16(h, params["w5"]) + params["b5"])
    return out.reshape(x.shape[0], *output_shape)


if __name__ == "__main__":
    key = jax.random.PRNGKey(0)
    k_p1, k_n1, k_p2, k_n2 = jax.random.split(key, 4)

    input_dim = 128

    # Config 1: small head (out_dim = 256) -> fused single-kernel path.
    batch1, output_shape1 = 64, (1, 16, 16)
    params1 = init_generator_params(k_p1, input_dim, output_shape1)
    prep1 = prepare_generator_params(params1, output_shape1)
    noise1 = jax.random.normal(k_n1, (batch1, input_dim), jnp.float32)
    img1 = jax.block_until_ready(generator_forward(noise1, prep1, output_shape1))
    ref1 = _reference_forward(noise1, params1, output_shape1)
    assert img1.shape == (batch1,) + output_shape1
    assert jnp.allclose(img1, ref1, atol=5e-3, rtol=5e-3), \
        float(jnp.max(jnp.abs(img1 - ref1)))

    # Config 2: larger head (out_dim = 3072) -> trunk kernel + tiled head.
    batch2, output_shape2 = 64, (3, 32, 32)
    params2 = init_generator_params(k_p2, input_dim, output_shape2)
    prep2 = prepare_generator_params(params2, output_shape2)
    noise2 = jax.random.normal(k_n2, (batch2, input_dim), jnp.float32)
    img2 = jax.block_until_ready(generator_forward(noise2, prep2, output_shape2))
    ref2 = _reference_forward(noise2, params2, output_shape2)
    assert img2.shape == (batch2,) + output_shape2
    assert jnp.allclose(img2, ref2, atol=5e-3, rtol=5e-3), \
        float(jnp.max(jnp.abs(img2 - ref2)))

    print("KERNEL_OK")
</pallas_src>

<mosaic_0001>
module attributes {stable_mosaic.version = 11 : i64} {
  func.func @_fused_kernel(%arg0: memref<64x128xf32, #tpu.memory_space<vmem>>, %arg1: memref<128x128xbf16, #tpu.memory_space<vmem>>, %arg2: memref<1x128xf32, #tpu.memory_space<vmem>>, %arg3: memref<128x256xbf16, #tpu.memory_space<vmem>>, %arg4: memref<1x256xf32, #tpu.memory_space<vmem>>, %arg5: memref<1x256xf32, #tpu.memory_space<vmem>>, %arg6: memref<1x256xf32, #tpu.memory_space<vmem>>, %arg7: memref<256x512xbf16, #tpu.memory_space<vmem>>, %arg8: memref<1x512xf32, #tpu.memory_space<vmem>>, %arg9: memref<1x512xf32, #tpu.memory_space<vmem>>, %arg10: memref<1x512xf32, #tpu.memory_space<vmem>>, %arg11: memref<512x1024xbf16, #tpu.memory_space<vmem>>, %arg12: memref<1x1024xf32, #tpu.memory_space<vmem>>, %arg13: memref<1x1024xf32, #tpu.memory_space<vmem>>, %arg14: memref<1x1024xf32, #tpu.memory_space<vmem>>, %arg15: memref<1024x256xbf16, #tpu.memory_space<vmem>>, %arg16: memref<1x256xf32, #tpu.memory_space<vmem>>, %arg17: memref<64x256xf32, #tpu.memory_space<vmem>>) attributes {dimension_semantics = [], scalar_prefetch = 0 : i64, scratch_operands = 0 : i64, tpu.core_type = #tpu.core_type<tc>} {
    %c0 = arith.constant 0 : index
    %c0_0 = arith.constant 0 : index
    %0 = vector.load %arg0[%c0, %c0_0] : memref<64x128xf32, #tpu.memory_space<vmem>>, vector<64x128xf32>
    %1 = arith.truncf %0 : vector<64x128xf32> to vector<64x128xbf16>
    %c0_1 = arith.constant 0 : index
    %c0_2 = arith.constant 0 : index
    %2 = vector.load %arg1[%c0_1, %c0_2] : memref<128x128xbf16, #tpu.memory_space<vmem>>, vector<128x128xbf16>
    %cst = arith.constant dense<0.000000e+00> : vector<64x128xf32>
    %3 = tpu.matmul %1, %2, %cst {dimension_numbers = #tpu.dot_dimension_numbers<[1], [0], [0], [1], [0, 0, 1, 1], [], []>} : vector<64x128xbf16>, vector<128x128xbf16>, vector<64x128xf32> -> vector<64x128xf32>
    %c0_3 = arith.constant 0 : index
    %c0_4 = arith.constant 0 : index
    %4 = vector.load %arg2[%c0_3, %c0_4] : memref<1x128xf32, #tpu.memory_space<vmem>>, vector<1x128xf32>
    %5 = vector.broadcast %4 : vector<1x128xf32> to vector<64x128xf32>
    %6 = arith.addf %3, %5 : vector<64x128xf32>
    %cst_5 = arith.constant 0.000000e+00 : f32
    %7 = vector.broadcast %cst_5 : f32 to vector<64x128xf32>
    %8 = arith.maximumf %6, %7 : vector<64x128xf32>
    %9 = arith.truncf %8 : vector<64x128xf32> to vector<64x128xbf16>
    %c0_6 = arith.constant 0 : index
    %c0_7 = arith.constant 0 : index
    %10 = vector.load %arg3[%c0_6, %c0_7] : memref<128x256xbf16, #tpu.memory_space<vmem>>, vector<128x256xbf16>
    %cst_8 = arith.constant dense<0.000000e+00> : vector<64x256xf32>
    %11 = tpu.matmul %9, %10, %cst_8 {dimension_numbers = #tpu.dot_dimension_numbers<[1], [0], [0], [1], [0, 0, 1, 1], [], []>} : vector<64x128xbf16>, vector<128x256xbf16>, vector<64x256xf32> -> vector<64x256xf32>
    %c0_9 = arith.constant 0 : index
    %c0_10 = arith.constant 0 : index
    %12 = vector.load %arg4[%c0_9, %c0_10] : memref<1x256xf32, #tpu.memory_space<vmem>>, vector<1x256xf32>
    %13 = vector.broadcast %12 : vector<1x256xf32> to vector<64x256xf32>
    %14 = arith.addf %11, %13 : vector<64x256xf32>
    %cst_11 = arith.constant dense<0.000000e+00> : vector<256xf32>
    %15 = vector.multi_reduction <add>, %14, %cst_11 [0] : vector<64x256xf32> to vector<256xf32>
    %16 = vector.shape_cast %15 : vector<256xf32> to vector<1x256xf32>
    %cst_12 = arith.constant 1.562500e-02 : f32
    %17 = vector.broadcast %cst_12 : f32 to vector<1x256xf32>
    %18 = arith.mulf %16, %17 : vector<1x256xf32>
    %19 = vector.broadcast %18 : vector<1x256xf32> to vector<64x256xf32>
    %20 = arith.subf %14, %19 : vector<64x256xf32>
    %21 = arith.mulf %20, %20 : vector<64x256xf32>
    %cst_13 = arith.constant dense<0.000000e+00> : vector<256xf32>
    %22 = vector.multi_reduction <add>, %21, %cst_13 [0] : vector<64x256xf32> to vector<256xf32>
    %23 = vector.shape_cast %22 : vector<256xf32> to vector<1x256xf32>
    %cst_14 = arith.constant 1.562500e-02 : f32
    %24 = vector.broadcast %cst_14 : f32 to vector<1x256xf32>
    %25 = arith.mulf %23, %24 : vector<1x256xf32>
    %c0_15 = arith.constant 0 : index
    %c0_16 = arith.constant 0 : index
    %26 = vector.load %arg5[%c0_15, %c0_16] : memref<1x256xf32, #tpu.memory_space<vmem>>, vector<1x256xf32>
    %cst_17 = arith.constant 9.99999974E-6 : f32
    %27 = vector.broadcast %cst_17 : f32 to vector<1x256xf32>
    %28 = arith.addf %25, %27 : vector<1x256xf32>
    %29 = math.rsqrt %28 : vector<1x256xf32>
    %30 = arith.mulf %26, %29 : vector<1x256xf32>
    %31 = vector.broadcast %30 : vector<1x256xf32> to vector<64x256xf32>
    %32 = arith.mulf %20, %31 : vector<64x256xf32>
    %c0_18 = arith.constant 0 : index
    %c0_19 = arith.constant 0 : index
    %33 = vector.load %arg6[%c0_18, %c0_19] : memref<1x256xf32, #tpu.memory_space<vmem>>, vector<1x256xf32>
    %34 = vector.broadcast %33 : vector<1x256xf32> to vector<64x256xf32>
    %35 = arith.addf %32, %34 : vector<64x256xf32>
    %cst_20 = arith.constant 0.000000e+00 : f32
    %36 = vector.broadcast %cst_20 : f32 to vector<64x256xf32>
    %37 = arith.maximumf %35, %36 : vector<64x256xf32>
    %38 = arith.truncf %37 : vector<64x256xf32> to vector<64x256xbf16>
    %c0_21 = arith.constant 0 : index
    %c0_22 = arith.constant 0 : index
    %39 = vector.load %arg7[%c0_21, %c0_22] : memref<256x512xbf16, #tpu.memory_space<vmem>>, vector<256x512xbf16>
    %cst_23 = arith.constant dense<0.000000e+00> : vector<64x512xf32>
    %40 = tpu.matmul %38, %39, %cst_23 {dimension_numbers = #tpu.dot_dimension_numbers<[1], [0], [0], [1], [0, 0, 1, 1], [], []>} : vector<64x256xbf16>, vector<256x512xbf16>, vector<64x512xf32> -> vector<64x512xf32>
    %c0_24 = arith.constant 0 : index
    %c0_25 = arith.constant 0 : index
    %41 = vector.load %arg8[%c0_24, %c0_25] : memref<1x512xf32, #tpu.memory_space<vmem>>, vector<1x512xf32>
    %42 = vector.broadcast %41 : vector<1x512xf32> to vector<64x512xf32>
    %43 = arith.addf %40, %42 : vector<64x512xf32>
    %cst_26 = arith.constant dense<0.000000e+00> : vector<512xf32>
    %44 = vector.multi_reduction <add>, %43, %cst_26 [0] : vector<64x512xf32> to vector<512xf32>
    %45 = vector.shape_cast %44 : vector<512xf32> to vector<1x512xf32>
    %cst_27 = arith.constant 1.562500e-02 : f32
    %46 = vector.broadcast %cst_27 : f32 to vector<1x512xf32>
    %47 = arith.mulf %45, %46 : vector<1x512xf32>
    %48 = vector.broadcast %47 : vector<1x512xf32> to vector<64x512xf32>
    %49 = arith.subf %43, %48 : vector<64x512xf32>
    %50 = arith.mulf %49, %49 : vector<64x512xf32>
    %cst_28 = arith.constant dense<0.000000e+00> : vector<512xf32>
    %51 = vector.multi_reduction <add>, %50, %cst_28 [0] : vector<64x512xf32> to vector<512xf32>
    %52 = vector.shape_cast %51 : vector<512xf32> to vector<1x512xf32>
    %cst_29 = arith.constant 1.562500e-02 : f32
    %53 = vector.broadcast %cst_29 : f32 to vector<1x512xf32>
    %54 = arith.mulf %52, %53 : vector<1x512xf32>
    %c0_30 = arith.constant 0 : index
    %c0_31 = arith.constant 0 : index
    %55 = vector.load %arg9[%c0_30, %c0_31] : memref<1x512xf32, #tpu.memory_space<vmem>>, vector<1x512xf32>
    %cst_32 = arith.constant 9.99999974E-6 : f32
    %56 = vector.broadcast %cst_32 : f32 to vector<1x512xf32>
    %57 = arith.addf %54, %56 : vector<1x512xf32>
    %58 = math.rsqrt %57 : vector<1x512xf32>
    %59 = arith.mulf %55, %58 : vector<1x512xf32>
    %60 = vector.broadcast %59 : vector<1x512xf32> to vector<64x512xf32>
    %61 = arith.mulf %49, %60 : vector<64x512xf32>
    %c0_33 = arith.constant 0 : index
    %c0_34 = arith.constant 0 : index
    %62 = vector.load %arg10[%c0_33, %c0_34] : memref<1x512xf32, #tpu.memory_space<vmem>>, vector<1x512xf32>
    %63 = vector.broadcast %62 : vector<1x512xf32> to vector<64x512xf32>
    %64 = arith.addf %61, %63 : vector<64x512xf32>
    %cst_35 = arith.constant 0.000000e+00 : f32
    %65 = vector.broadcast %cst_35 : f32 to vector<64x512xf32>
    %66 = arith.maximumf %64, %65 : vector<64x512xf32>
    %67 = arith.truncf %66 : vector<64x512xf32> to vector<64x512xbf16>
    %c0_36 = arith.constant 0 : index
    %c0_37 = arith.constant 0 : index
    %68 = vector.load %arg11[%c0_36, %c0_37] : memref<512x1024xbf16, #tpu.memory_space<vmem>>, vector<512x1024xbf16>
    %cst_38 = arith.constant dense<0.000000e+00> : vector<64x1024xf32>
    %69 = tpu.matmul %67, %68, %cst_38 {dimension_numbers = #tpu.dot_dimension_numbers<[1], [0], [0], [1], [0, 0, 1, 1], [], []>} : vector<64x512xbf16>, vector<512x1024xbf16>, vector<64x1024xf32> -> vector<64x1024xf32>
    %c0_39 = arith.constant 0 : index
    %c0_40 = arith.constant 0 : index
    %70 = vector.load %arg12[%c0_39, %c0_40] : memref<1x1024xf32, #tpu.memory_space<vmem>>, vector<1x1024xf32>
    %71 = vector.broadcast %70 : vector<1x1024xf32> to vector<64x1024xf32>
    %72 = arith.addf %69, %71 : vector<64x1024xf32>
    %cst_41 = arith.constant dense<0.000000e+00> : vector<1024xf32>
    %73 = vector.multi_reduction <add>, %72, %cst_41 [0] : vector<64x1024xf32> to vector<1024xf32>
    %74 = vector.shape_cast %73 : vector<1024xf32> to vector<1x1024xf32>
    %cst_42 = arith.constant 1.562500e-02 : f32
    %75 = vector.broadcast %cst_42 : f32 to vector<1x1024xf32>
    %76 = arith.mulf %74, %75 : vector<1x1024xf32>
    %77 = vector.broadcast %76 : vector<1x1024xf32> to vector<64x1024xf32>
    %78 = arith.subf %72, %77 : vector<64x1024xf32>
    %79 = arith.mulf %78, %78 : vector<64x1024xf32>
    %cst_43 = arith.constant dense<0.000000e+00> : vector<1024xf32>
    %80 = vector.multi_reduction <add>, %79, %cst_43 [0] : vector<64x1024xf32> to vector<1024xf32>
    %81 = vector.shape_cast %80 : vector<1024xf32> to vector<1x1024xf32>
    %cst_44 = arith.constant 1.562500e-02 : f32
    %82 = vector.broadcast %cst_44 : f32 to vector<1x1024xf32>
    %83 = arith.mulf %81, %82 : vector<1x1024xf32>
    %c0_45 = arith.constant 0 : index
    %c0_46 = arith.constant 0 : index
    %84 = vector.load %arg13[%c0_45, %c0_46] : memref<1x1024xf32, #tpu.memory_space<vmem>>, vector<1x1024xf32>
    %cst_47 = arith.constant 9.99999974E-6 : f32
    %85 = vector.broadcast %cst_47 : f32 to vector<1x1024xf32>
    %86 = arith.addf %83, %85 : vector<1x1024xf32>
    %87 = math.rsqrt %86 : vector<1x1024xf32>
    %88 = arith.mulf %84, %87 : vector<1x1024xf32>
    %89 = vector.broadcast %88 : vector<1x1024xf32> to vector<64x1024xf32>
    %90 = arith.mulf %78, %89 : vector<64x1024xf32>
    %c0_48 = arith.constant 0 : index
    %c0_49 = arith.constant 0 : index
    %91 = vector.load %arg14[%c0_48, %c0_49] : memref<1x1024xf32, #tpu.memory_space<vmem>>, vector<1x1024xf32>
    %92 = vector.broadcast %91 : vector<1x1024xf32> to vector<64x1024xf32>
    %93 = arith.addf %90, %92 : vector<64x1024xf32>
    %cst_50 = arith.constant 0.000000e+00 : f32
    %94 = vector.broadcast %cst_50 : f32 to vector<64x1024xf32>
    %95 = arith.maximumf %93, %94 : vector<64x1024xf32>
    %96 = arith.truncf %95 : vector<64x1024xf32> to vector<64x1024xbf16>
    %c0_51 = arith.constant 0 : index
    %c0_52 = arith.constant 0 : index
    %97 = vector.load %arg15[%c0_51, %c0_52] : memref<1024x256xbf16, #tpu.memory_space<vmem>>, vector<1024x256xbf16>
    %cst_53 = arith.constant dense<0.000000e+00> : vector<64x256xf32>
    %98 = tpu.matmul %96, %97, %cst_53 {dimension_numbers = #tpu.dot_dimension_numbers<[1], [0], [0], [1], [0, 0, 1, 1], [], []>} : vector<64x1024xbf16>, vector<1024x256xbf16>, vector<64x256xf32> -> vector<64x256xf32>
    %c0_54 = arith.constant 0 : index
    %c0_55 = arith.constant 0 : index
    %99 = vector.load %arg16[%c0_54, %c0_55] : memref<1x256xf32, #tpu.memory_space<vmem>>, vector<1x256xf32>
    %100 = vector.broadcast %99 : vector<1x256xf32> to vector<64x256xf32>
    %101 = arith.addf %98, %100 : vector<64x256xf32>
    %102 = math.tanh %101 : vector<64x256xf32>
    %c0_56 = arith.constant 0 : index
    %c0_57 = arith.constant 0 : index
    %103 = vector.load %arg17[%c0_56, %c0_57] : memref<64x256xf32, #tpu.memory_space<vmem>>, vector<64x256xf32>
    tpu.vector_store %arg17[%c0_56, %c0_57], %102 {strides = array<i32>} : memref<64x256xf32, #tpu.memory_space<vmem>>, vector<64x256xf32>,
    return
  }
}

</mosaic_0001>

<llo_original>
// kernel: generator_forward.1
$region0: #{generator_forward.1}
  #allocation0 [shape = 'u32[]', space=smem, size = 0x4, offset = 0x4, fixed_abs, tag = 'smem constant byte address 0x4 - core index']
  #allocation1 [shape = 'u32[144,128]{1,0:T(1,128)}', space=vmem, size = 0x12000, scoped, tag = 'internal scratch']
  %s0 = inlined_call_operand.hbm [shape: f32[64,128], index: 0, kind: input, shape index: {}]
  %s1 = inlined_call_operand.hbm [shape: bf16[128,128], index: 1, kind: input, shape index: {}]
  %s2 = inlined_call_operand.hbm [shape: f32[1,128], index: 2, kind: input, shape index: {}]
  %s3 = inlined_call_operand.hbm [shape: bf16[128,256], index: 3, kind: input, shape index: {}]
  %s4 = inlined_call_operand.vmem [shape: f32[1,256], index: 4, kind: input, shape index: {}]
  %s5 = inlined_call_operand.vmem [shape: f32[1,256], index: 5, kind: input, shape index: {}]
  %s6 = inlined_call_operand.hbm [shape: f32[1,256], index: 6, kind: input, shape index: {}]
  %s7 = inlined_call_operand.hbm [shape: bf16[256,512], index: 7, kind: input, shape index: {}]
  %s8 = inlined_call_operand.hbm [shape: f32[1,512], index: 8, kind: input, shape index: {}]
  %s9 = inlined_call_operand.vmem [shape: f32[1,512], index: 9, kind: input, shape index: {}]
  %s10 = inlined_call_operand.hbm [shape: f32[1,512], index: 10, kind: input, shape index: {}]
  %s11 = inlined_call_operand.hbm [shape: bf16[512,1024], index: 11, kind: input, shape index: {}]
  %s12 = inlined_call_operand.vmem [shape: f32[1,1024], index: 12, kind: input, shape index: {}]
  %s13 = inlined_call_operand.vmem [shape: f32[1,1024], index: 13, kind: input, shape index: {}]
  %s14 = inlined_call_operand.vmem [shape: f32[1,1024], index: 14, kind: input, shape index: {}]
  %s15 = inlined_call_operand.hbm [shape: bf16[1024,256], index: 15, kind: input, shape index: {}]
  %s16 = inlined_call_operand.hbm [shape: f32[1,256], index: 16, kind: input, shape index: {}]
  %s17 = inlined_call_operand.vmem [shape: f32[64,256], index: 17, kind: output, shape index: {}]
  %s18 = sld [smem:[#allocation0]]
  $region122: #{generator_forward.1} parent=0
    _
  %s20 = ssub.s32 1, %s18
  %s21 = scalar_select 0, %s20, %s18
  $region1: #{generator_forward.1} parent=0
    #allocation2 [shape = 'u8[32768]{0}', space=vmem, size = 0x8000, scoped, tag = 'input window, operand 0, single buffered']
    #allocation3 [shape = 's32[1]{0}', space=sflag, size = 0x4, scoped, tag = 'scoped memory for generator_forward.1']
    #allocation4 [shape = 'u8[32768]{0}', space=vmem, size = 0x8000, scoped, tag = 'input window, operand 1, single buffered']
    #allocation5 [shape = 's32[1]{0}', space=sflag, size = 0x4, scoped, tag = 'scoped memory for generator_forward.1']
    #allocation6 [shape = 'u8[512]{0}', space=vmem, size = 0x400, scoped, tag = 'input window, operand 2, single buffered']
    #allocation7 [shape = 'u8[65536]{0}', space=vmem, size = 0x10000, scoped, tag = 'input window, operand 3, single buffered']
    #allocation8 [shape = 's32[1]{0}', space=sflag, size = 0x4, scoped, tag = 'scoped memory for generator_forward.1']
    #allocation9 [shape = 'u8[1024]{0}', space=vmem, size = 0x400, scoped, tag = 'input window, operand 6, single buffered']
    #allocation10 [shape = 'u8[262144]{0}', space=vmem, size = 0x40000, scoped, tag = 'input window, operand 7, single buffered']
    #allocation11 [shape = 's32[1]{0}', space=sflag, size = 0x4, scoped, tag = 'scoped memory for generator_forward.1']
    #allocation12 [shape = 'u8[2048]{0}', space=vmem, size = 0x800, scoped, tag = 'input window, operand 8, single buffered']
    #allocation13 [shape = 'u8[2048]{0}', space=vmem, size = 0x800, scoped, tag = 'input window, operand 10, single buffered']
    #allocation14 [shape = 's32[1]{0}', space=sflag, size = 0x4, scoped, tag = 'scoped memory for generator_forward.1']
    #allocation15 [shape = 'u8[1048576]{0}', space=vmem, size = 0x100000, scoped, tag = 'input window, operand 11, single buffered']
    #allocation16 [shape = 'u8[524288]{0}', space=vmem, size = 0x80000, scoped, tag = 'input window, operand 15, single buffered']
    #allocation17 [shape = 's32[1]{0}', space=sflag, size = 0x4, scoped, tag = 'scoped memory for generator_forward.1']
    #allocation18 [shape = 'u8[1024]{0}', space=vmem, size = 0x400, scoped, tag = 'input window, operand 16, single buffered']
    %22 = vsyncpa [#allocation3], 0
    %23 = vsyncpa [#allocation5], 0
    %24 = vsyncpa [#allocation8], 0
    %25 = vsyncpa [#allocation11], 0
    %26 = vsyncpa [#allocation14], 0
    %27 = vsyncpa [#allocation17], 0
    // Predicated region
    $region2: #{generator_forward.1} parent=1 // pred_check
      _
    $region3: #{generator_forward.1} parent=1 // pred_check_branch
      %29 = sbr.rel (0) target = $region5
    $region4: #{generator_forward.1} parent=1 // pred_region
      %s31 = ssub.s32 1024, 1024
      %32 = vsyncadd [#allocation3], %s31
      %s33 = sshll.u32 [#allocation2], 4
      %s34 = int_to_ptr.vmem [resolvable:$true] %s33
      %39 = dma.hbm_to_vmem [thread:$0]  %s0, 1024, %s34, [#allocation3], 128, 128, 8
    $region5: #{generator_forward.1} parent=1 // pred_fallthru
      _
    // Predicated region
    $region6: #{generator_forward.1} parent=1 // pred_check
      _
    $region7: #{generator_forward.1} parent=1 // pred_check_branch
      %41 = sbr.rel (0) target = $region9
    $region8: #{generator_forward.1} parent=1 // pred_region
      %s43 = ssub.s32 1024, 1024
      %44 = vsyncadd [#allocation5], %s43
      %s45 = sshll.u32 [#allocation4], 4
      %s46 = int_to_ptr.vmem [resolvable:$true] %s45
      %51 = dma.hbm_to_vmem [thread:$0]  %s1, 1024, %s46, [#allocation5], 64, 64, 4
    $region9: #{generator_forward.1} parent=1 // pred_fallthru
      _
    // Predicated region
    $region10: #{generator_forward.1} parent=1 // pred_check
      _
    $region11: #{generator_forward.1} parent=1 // pred_check_branch
      %53 = sbr.rel (0) target = $region13
    $region12: #{generator_forward.1} parent=1 // pred_region
      %s55 = ssub.s32 16, 16
      %56 = vsyncadd [#allocation5], %s55
      %s58 = sshll.u32 [#allocation6], 4
      %s59 = int_to_ptr.vmem [resolvable:$true] %s58
      %61 = dma.hbm_to_vmem [thread:$0]  %s2, 16, %s59, [#allocation5]
    $region13: #{generator_forward.1} parent=1 // pred_fallthru
      _
    // Predicated region
    $region14: #{generator_forward.1} parent=1 // pred_check
      _
    $region15: #{generator_forward.1} parent=1 // pred_check_branch
      %63 = sbr.rel (0) target = $region17
    $region16: #{generator_forward.1} parent=1 // pred_region
      %s65 = ssub.s32 2048, 2048
      %66 = vsyncadd [#allocation8], %s65
      %s67 = sshll.u32 [#allocation7], 4
      %s68 = int_to_ptr.vmem [resolvable:$true] %s67
      %73 = dma.hbm_to_vmem [thread:$0]  %s3, 2048, %s68, [#allocation8], 128, 128, 8
    $region17: #{generator_forward.1} parent=1 // pred_fallthru
      _
    // Predicated region
    $region18: #{generator_forward.1} parent=1 // pred_check
      _
    $region19: #{generator_forward.1} parent=1 // pred_check_branch
      %75 = sbr.rel (0) target = $region21
    $region20: #{generator_forward.1} parent=1 // pred_region
      _
    $region21: #{generator_forward.1} parent=1 // pred_fallthru
      _
    // Predicated region
    $region22: #{generator_forward.1} parent=1 // pred_check
      _
    $region23: #{generator_forward.1} parent=1 // pred_check_branch
      %77 = sbr.rel (0) target = $region25
    $region24: #{generator_forward.1} parent=1 // pred_region
      _
    $region25: #{generator_forward.1} parent=1 // pred_fallthru
      _
    // Predicated region
    $region26: #{generator_forward.1} parent=1 // pred_check
      _
    $region27: #{generator_forward.1} parent=1 // pred_check_branch
      %79 = sbr.rel (0) target = $region29
    $region28: #{generator_forward.1} parent=1 // pred_region
      %s81 = ssub.s32 32, 32
      %82 = vsyncadd [#allocation8], %s81
      %s84 = sshll.u32 [#allocation9], 4
      %s85 = int_to_ptr.vmem [resolvable:$true] %s84
      %87 = dma.hbm_to_vmem [thread:$0]  %s6, 32, %s85, [#allocation8]
    $region29: #{generator_forward.1} parent=1 // pred_fallthru
      _
    // Predicated region
    $region30: #{generator_forward.1} parent=1 // pred_check
      _
    $region31: #{generator_forward.1} parent=1 // pred_check_branch
      %89 = sbr.rel (0) target = $region33
    $region32: #{generator_forward.1} parent=1 // pred_region
      %s91 = ssub.s32 8192, 8192
      %92 = vsyncadd [#allocation11], %s91
      %s93 = sshll.u32 [#allocation10], 4
      %s94 = int_to_ptr.vmem [resolvable:$true] %s93
      %99 = dma.hbm_to_vmem [thread:$0]  %s7, 8192, %s94, [#allocation11], 256, 256, 16
    $region33: #{generator_forward.1} parent=1 // pred_fallthru
      _
    // Predicated region
    $region34: #{generator_forward.1} parent=1 // pred_check
      _
    $region35: #{generator_forward.1} parent=1 // pred_check_branch
      %101 = sbr.rel (0) target = $region37
    $region36: #{generator_forward.1} parent=1 // pred_region
      %s103 = ssub.s32 64, 64
      %104 = vsyncadd [#allocation11], %s103
      %s106 = sshll.u32 [#allocation12], 4
      %s107 = int_to_ptr.vmem [resolvable:$true] %s106
      %109 = dma.hbm_to_vmem [thread:$0]  %s8, 64, %s107, [#allocation11]
    $region37: #{generator_forward.1} parent=1 // pred_fallthru
      _
    // Predicated region
    $region38: #{generator_forward.1} parent=1 // pred_check
      _
    $region39: #{generator_forward.1} parent=1 // pred_check_branch
      %111 = sbr.rel (0) target = $region41
    $region40: #{generator_forward.1} parent=1 // pred_region
      _
    $region41: #{generator_forward.1} parent=1 // pred_fallthru
      _
    // Predicated region
    $region42: #{generator_forward.1} parent=1 // pred_check
      _
    $region43: #{generator_forward.1} parent=1 // pred_check_branch
      %113 = sbr.rel (0) target = $region45
    $region44: #{generator_forward.1} parent=1 // pred_region
      %s115 = ssub.s32 64, 64
      %116 = vsyncadd [#allocation14], %s115
      %s118 = sshll.u32 [#allocation13], 4
      %s119 = int_to_ptr.vmem [resolvable:$true] %s118
      %121 = dma.hbm_to_vmem [thread:$0]  %s10, 64, %s119, [#allocation14]
    $region45: #{generator_forward.1} parent=1 // pred_fallthru
      _
    // Predicated region
    $region46: #{generator_forward.1} parent=1 // pred_check
      _
    $region47: #{generator_forward.1} parent=1 // pred_check_branch
      %123 = sbr.rel (0) target = $region49
    $region48: #{generator_forward.1} parent=1 // pred_region
      %s125 = ssub.s32 32768, 32768
      %126 = vsyncadd [#allocation14], %s125
      %s127 = sshll.u32 [#allocation15], 4
      %s128 = int_to_ptr.vmem [resolvable:$true] %s127
      %133 = dma.hbm_to_vmem [thread:$0]  %s11, 32768, %s128, [#allocation14], 512, 512, 32
    $region49: #{generator_forward.1} parent=1 // pred_fallthru
      _
    // Predicated region
    $region50: #{generator_forward.1} parent=1 // pred_check
      _
    $region51: #{generator_forward.1} parent=1 // pred_check_branch
      %135 = sbr.rel (0) target = $region53
    $region52: #{generator_forward.1} parent=1 // pred_region
      _
    $region53: #{generator_forward.1} parent=1 // pred_fallthru
      _
    // Predicated region
    $region54: #{generator_forward.1} parent=1 // pred_check
      _
    $region55: #{generator_forward.1} parent=1 // pred_check_branch
      %137 = sbr.rel (0) target = $region57
    $region56: #{generator_forward.1} parent=1 // pred_region
      _
    $region57: #{generator_forward.1} parent=1 // pred_fallthru
      _
    // Predicated region
    $region58: #{generator_forward.1} parent=1 // pred_check
      _
    $region59: #{generator_forward.1} parent=1 // pred_check_branch
      %139 = sbr.rel (0) target = $region61
    $region60: #{generator_forward.1} parent=1 // pred_region
      _
    $region61: #{generator_forward.1} parent=1 // pred_fallthru
      _
    // Predicated region
    $region62: #{generator_forward.1} parent=1 // pred_check
      _
    $region63: #{generator_forward.1} parent=1 // pred_check_branch
      %141 = sbr.rel (0) target = $region65
    $region64: #{generator_forward.1} parent=1 // pred_region
      %s143 = ssub.s32 16384, 16384
      %144 = vsyncadd [#allocation17], %s143
      %s145 = sshll.u32 [#allocation16], 4
      %s146 = int_to_ptr.vmem [resolvable:$true] %s145
      %151 = dma.hbm_to_vmem [thread:$0]  %s15, 16384, %s146, [#allocation17], 128, 128, 8
    $region65: #{generator_forward.1} parent=1 // pred_fallthru
      _
    // Predicated region
    $region66: #{generator_forward.1} parent=1 // pred_check
      _
    $region67: #{generator_forward.1} parent=1 // pred_check_branch
      %153 = sbr.rel (0) target = $region69
    $region68: #{generator_forward.1} parent=1 // pred_region
      %s155 = ssub.s32 32, 32
      %156 = vsyncadd [#allocation17], %s155
      %s158 = sshll.u32 [#allocation18], 4
      %s159 = int_to_ptr.vmem [resolvable:$true] %s158
      %161 = dma.hbm_to_vmem [thread:$0]  %s16, 32, %s159, [#allocation17]
    $region69: #{generator_forward.1} parent=1 // pred_fallthru
      _
    // Predicated region
    $region70: #{generator_forward.1} parent=1 // pred_check
      _
    $region71: #{generator_forward.1} parent=1 // pred_check_branch
      %163 = sbr.rel (0) target = $region73
    $region72: #{generator_forward.1} parent=1 // pred_region
      %164 = dma.done [#allocation3], 1024
    $region73: #{generator_forward.1} parent=1 // pred_fallthru
      _
    // Predicated region
    $region74: #{generator_forward.1} parent=1 // pred_check
      _
    $region75: #{generator_forward.1} parent=1 // pred_check_branch
      %166 = sbr.rel (0) target = $region77
    $region76: #{generator_forward.1} parent=1 // pred_region
      %167 = dma.done [#allocation5], 1024
    $region77: #{generator_forward.1} parent=1 // pred_fallthru
      _
    // Predicated region
    $region78: #{generator_forward.1} parent=1 // pred_check
      _
    $region79: #{generator_forward.1} parent=1 // pred_check_branch
      %169 = sbr.rel (0) target = $region81
    $region80: #{generator_forward.1} parent=1 // pred_region
      %170 = dma.done [#allocation5], 16
    $region81: #{generator_forward.1} parent=1 // pred_fallthru
      _
    // Predicated region
    $region82: #{generator_forward.1} parent=1 // pred_check
      _
    $region83: #{generator_forward.1} parent=1 // pred_check_branch
      %172 = sbr.rel (0) target = $region85
    $region84: #{generator_forward.1} parent=1 // pred_region
      %173 = dma.done [#allocation8], 2048
    $region85: #{generator_forward.1} parent=1 // pred_fallthru
      _
    // Predicated region
    $region86: #{generator_forward.1} parent=1 // pred_check
      _
    $region87: #{generator_forward.1} parent=1 // pred_check_branch
      %175 = sbr.rel (0) target = $region89
    $region88: #{generator_forward.1} parent=1 // pred_region
      %176 = dma.done [#allocation8], 32
    $region89: #{generator_forward.1} parent=1 // pred_fallthru
      _
    // Predicated region
    $region90: #{generator_forward.1} parent=1 // pred_check
      _
    $region91: #{generator_forward.1} parent=1 // pred_check_branch
      %178 = sbr.rel (0) target = $region93
    $region92: #{generator_forward.1} parent=1 // pred_region
      %179 = dma.done [#allocation11], 8192
    $region93: #{generator_forward.1} parent=1 // pred_fallthru
      _
    // Predicated region
    $region94: #{generator_forward.1} parent=1 // pred_check
      _
    $region95: #{generator_forward.1} parent=1 // pred_check_branch
      %181 = sbr.rel (0) target = $region97
    $region96: #{generator_forward.1} parent=1 // pred_region
      %182 = dma.done [#allocation11], 64
    $region97: #{generator_forward.1} parent=1 // pred_fallthru
      _
    // Predicated region
    $region98: #{generator_forward.1} parent=1 // pred_check
      _
    $region99: #{generator_forward.1} parent=1 // pred_check_branch
      %184 = sbr.rel (0) target = $region101
    $region100: #{generator_forward.1} parent=1 // pred_region
      %185 = dma.done [#allocation14], 64
    $region101: #{generator_forward.1} parent=1 // pred_fallthru
      _
    // Predicated region
    $region102: #{generator_forward.1} parent=1 // pred_check
      _
    $region103: #{generator_forward.1} parent=1 // pred_check_branch
      %187 = sbr.rel (0) target = $region105
    $region104: #{generator_forward.1} parent=1 // pred_region
      %188 = dma.done [#allocation14], 32768
    $region105: #{generator_forward.1} parent=1 // pred_fallthru
      _
    // Predicated region
    $region106: #{generator_forward.1} parent=1 // pred_check
      _
    $region107: #{generator_forward.1} parent=1 // pred_check_branch
      %190 = sbr.rel (0) target = $region109
    $region108: #{generator_forward.1} parent=1 // pred_region
      %191 = dma.done [#allocation17], 16384
    $region109: #{generator_forward.1} parent=1 // pred_fallthru
      _
    // Predicated region
    $region110: #{generator_forward.1} parent=1 // pred_check
      _
    $region111: #{generator_forward.1} parent=1 // pred_check_branch
      %193 = sbr.rel (0) target = $region113
    $region112: #{generator_forward.1} parent=1 // pred_region
      %194 = dma.done [#allocation17], 32
    $region113: #{generator_forward.1} parent=1 // pred_fallthru
      _
    %v196 = vld [vmem:[#allocation2] sm:$0xff]
    %v197 = vld [vmem:[#allocation2 + $0x8] sm:$0xff]
    %v198 = vld [vmem:[#allocation2 + $0x10] sm:$0xff]
    %v199 = vld [vmem:[#allocation2 + $0x18] sm:$0xff]
    %v200 = vld [vmem:[#allocation2 + $0x20] sm:$0xff]
    %v201 = vld [vmem:[#allocation2 + $0x28] sm:$0xff]
    %v202 = vld [vmem:[#allocation2 + $0x30] sm:$0xff]
    %v203 = vld [vmem:[#allocation2 + $0x38] sm:$0xff]
    %v204 = vpack.c.bf16 %v197, %v196
    %v205 = vpack.c.bf16 %v199, %v198
    %v206 = vpack.c.bf16 %v201, %v200
    %v207 = vpack.c.bf16 %v203, %v202
    %v208 = vld [vmem:[#allocation4] sm:$0xf]
    %v209 = vld [vmem:[#allocation4 + $0x4] sm:$0xf]
    %v210 = vld [vmem:[#allocation4 + $0x8] sm:$0xf]
    %v211 = vld [vmem:[#allocation4 + $0xc] sm:$0xf]
    %v212 = vld [vmem:[#allocation4 + $0x10] sm:$0xf]
    %v213 = vld [vmem:[#allocation4 + $0x14] sm:$0xf]
    %v214 = vld [vmem:[#allocation4 + $0x18] sm:$0xf]
    %v215 = vld [vmem:[#allocation4 + $0x1c] sm:$0xf]
    %v216 = vld [vmem:[#allocation4 + $0x20] sm:$0xf]
    %v217 = vld [vmem:[#allocation4 + $0x24] sm:$0xf]
    %v218 = vld [vmem:[#allocation4 + $0x28] sm:$0xf]
    %v219 = vld [vmem:[#allocation4 + $0x2c] sm:$0xf]
    %v220 = vld [vmem:[#allocation4 + $0x30] sm:$0xf]
    %v221 = vld [vmem:[#allocation4 + $0x34] sm:$0xf]
    %v222 = vld [vmem:[#allocation4 + $0x38] sm:$0xf]
    %v223 = vld [vmem:[#allocation4 + $0x3c] sm:$0xf]
    %v224 = vld [vmem:[#allocation6] sm:$0x1]
    %v226 = vlaneseq
    %v227 = vshrl.u32 %v226, 7
    %v228 = vsub.s32 0, %v227
    %v229 = vrot.slane %v224, %v228
    %v247 = vunpack.c.l.b16 %v208
    %v248 = vunpack.c.l.b16 %v209
    %v249 = vunpack.c.l.b16 %v210
    %v250 = vunpack.c.l.b16 %v211
    %v251 = vunpack.c.l.b16 %v212
    %v252 = vunpack.c.l.b16 %v213
    %v253 = vunpack.c.l.b16 %v214
    %v254 = vunpack.c.l.b16 %v215
    %v255 = vunpack.c.l.b16 %v216
    %v256 = vunpack.c.l.b16 %v217
    %v257 = vunpack.c.l.b16 %v218
    %v258 = vunpack.c.l.b16 %v219
    %v259 = vunpack.c.l.b16 %v220
    %v260 = vunpack.c.l.b16 %v221
    %v261 = vunpack.c.l.b16 %v222
    %v262 = vunpack.c.l.b16 %v223
    %v263 = vpack.c.b16 %v248, %v247
    %v264 = vpack.c.b16 %v250, %v249
    %v265 = vpack.c.b16 %v252, %v251
    %v266 = vpack.c.b16 %v254, %v253
    %v267 = vpack.c.b16 %v256, %v255
    %v268 = vpack.c.b16 %v258, %v257
    %v269 = vpack.c.b16 %v260, %v259
    %v270 = vpack.c.b16 %v262, %v261
    %279 = vmatprep.subr.bf16.mxu0 0
    %280 = vmatpush1.bf16.msra.mxu0 %v263
    %281 = vmatprep.subr.bf16.mxu0 0
    %282 = vmatpush1.bf16.msra.mxu0 %v264
    %283 = vmatprep.subr.bf16.mxu0 0
    %284 = vmatpush1.bf16.msra.mxu0 %v265
    %285 = vmatprep.subr.bf16.mxu0 0
    %286 = vmatpush1.bf16.msra.mxu0 %v266
    %287 = vmatprep.subr.bf16.mxu0 0
    %288 = vmatpush1.bf16.msra.mxu0 %v267
    %289 = vmatprep.subr.bf16.mxu0 0
    %290 = vmatpush1.bf16.msra.mxu0 %v268
    %291 = vmatprep.subr.bf16.mxu0 0
    %292 = vmatpush1.bf16.msra.mxu0 %v269
    %293 = vmatprep.subr.bf16.mxu0 0
    %294 = vmatpush1.bf16.msra.mxu0 %v270
    %295 = vmatprep.subr.bf16.mxu0 0
    %296 = vmatpush1.bf16.msra.mxu0 0
    %297 = vmatprep.subr.bf16.mxu0 0
    %298 = vmatpush1.bf16.msra.mxu0 0
    %299 = vmatprep.subr.bf16.mxu0 0
    %300 = vmatpush1.bf16.msra.mxu0 0
    %301 = vmatprep.subr.bf16.mxu0 0
    %302 = vmatpush1.bf16.msra.mxu0 0
    %303 = vmatprep.subr.bf16.mxu0 0
    %304 = vmatpush1.bf16.msra.mxu0 0
    %305 = vmatprep.subr.bf16.mxu0 0
    %306 = vmatpush1.bf16.msra.mxu0 0
    %307 = vmatprep.subr.bf16.mxu0 0
    %308 = vmatpush1.bf16.msra.mxu0 0
    %309 = vmatprep.subr.bf16.mxu0 0
    %310 = vmatpush1.bf16.msra.mxu0 0
    %311 = vmatprep.mubr.bf16.mxu0 0
    %312 = vmatmul.mubr.bf16.gmra.mrb[0].mxu0 %v204
    %v313 = vpop.f32.mrb[0].mxu0
    %v314 = vadd.f32 %v229, %v313
    %v315 = vpop.f32.mrb[0].mxu0
    %v316 = vpop.f32.mrb[0].mxu0
    %v317 = vadd.f32 %v229, %v316
    %v318 = vpop.f32.mrb[0].mxu0
    %319 = vmatprep.mubr.bf16.mxu0 0
    %320 = vmatmul.mubr.bf16.gmra.mrb[0].mxu0 %v205
    %v321 = vpop.f32.mrb[0].mxu0
    %v322 = vadd.f32 %v229, %v321
    %v323 = vpop.f32.mrb[0].mxu0
    %v324 = vpop.f32.mrb[0].mxu0
    %v325 = vadd.f32 %v229, %v324
    %v326 = vpop.f32.mrb[0].mxu0
    %327 = vmatprep.mubr.bf16.mxu0 0
    %328 = vmatmul.mubr.bf16.gmra.mrb[0].mxu0 %v206
    %v329 = vpop.f32.mrb[0].mxu0
    %v330 = vadd.f32 %v229, %v329
    %v331 = vpop.f32.mrb[0].mxu0
    %v332 = vpop.f32.mrb[0].mxu0
    %v333 = vadd.f32 %v229, %v332
    %v334 = vpop.f32.mrb[0].mxu0
    %335 = vmatprep.mubr.bf16.mxu0 0
    %336 = vmatmul.mubr.bf16.gmra.mrb[0].mxu0 %v207
    %v337 = vpop.f32.mrb[0].mxu0
    %v338 = vadd.f32 %v229, %v337
    %v339 = vpop.f32.mrb[0].mxu0
    %v340 = vpop.f32.mrb[0].mxu0
    %v341 = vadd.f32 %v229, %v340
    %v342 = vpop.f32.mrb[0].mxu0
    %343 = vdwg.mxu0
    %v344 = vmax.f32 %v314, 0.0
    %v345 = vmax.f32 %v317, 0.0
    %v346 = vmax.f32 %v322, 0.0
    %v347 = vmax.f32 %v325, 0.0
    %v348 = vmax.f32 %v330, 0.0
    %v349 = vmax.f32 %v333, 0.0
    %v350 = vmax.f32 %v338, 0.0
    %v351 = vmax.f32 %v341, 0.0
    %v352 = vpack.c.bf16 %v345, %v344
    %v353 = vpack.c.bf16 %v347, %v346
    %v354 = vpack.c.bf16 %v349, %v348
    %v355 = vpack.c.bf16 %v351, %v350
    %v356 = vld [vmem:[#allocation7] sm:$0xff]
    %v357 = vld [vmem:[#allocation7 + $0x8] sm:$0xff]
    %v358 = vld [vmem:[#allocation7 + $0x10] sm:$0xff]
    %v359 = vld [vmem:[#allocation7 + $0x18] sm:$0xff]
    %v360 = vld [vmem:[#allocation7 + $0x20] sm:$0xff]
    %v361 = vld [vmem:[#allocation7 + $0x28] sm:$0xff]
    %v362 = vld [vmem:[#allocation7 + $0x30] sm:$0xff]
    %v363 = vld [vmem:[#allocation7 + $0x38] sm:$0xff]
    %v364 = vld [vmem:[#allocation7 + $0x40] sm:$0xff]
    %v365 = vld [vmem:[#allocation7 + $0x48] sm:$0xff]
    %v366 = vld [vmem:[#allocation7 + $0x50] sm:$0xff]
    %v367 = vld [vmem:[#allocation7 + $0x58] sm:$0xff]
    %v368 = vld [vmem:[#allocation7 + $0x60] sm:$0xff]
    %v369 = vld [vmem:[#allocation7 + $0x68] sm:$0xff]
    %v370 = vld [vmem:[#allocation7 + $0x70] sm:$0xff]
    %v371 = vld [vmem:[#allocation7 + $0x78] sm:$0xff]
    %v372 = vld [vmem:[%s4] sm:$0x3]
    %v374 = vlaneseq
    %v375 = vshrl.u32 %v374, 7
    %v376 = vsub.s32 0, %v375
    %v377 = vrot.slane %v372, %v376
    %v378 = vlaneseq
    %v379 = vshrl.u32 %v378, 7
    %v380 = vsub.s32 1, %v379
    %v381 = vrot.slane %v372, %v380
    %v400 = vunpack.c.l.b16 %v356
    %v401 = vunpack.c.h.b16 %v356
    %v402 = vunpack.c.l.b16 %v357
    %v403 = vunpack.c.h.b16 %v357
    %v404 = vunpack.c.l.b16 %v358
    %v405 = vunpack.c.h.b16 %v358
    %v406 = vunpack.c.l.b16 %v359
    %v407 = vunpack.c.h.b16 %v359
    %v408 = vunpack.c.l.b16 %v360
    %v409 = vunpack.c.h.b16 %v360
    %v410 = vunpack.c.l.b16 %v361
    %v411 = vunpack.c.h.b16 %v361
    %v412 = vunpack.c.l.b16 %v362
    %v413 = vunpack.c.h.b16 %v362
    %v414 = vunpack.c.l.b16 %v363
    %v415 = vunpack.c.h.b16 %v363
    %v416 = vunpack.c.l.b16 %v364
    %v417 = vunpack.c.h.b16 %v364
    %v418 = vunpack.c.l.b16 %v365
    %v419 = vunpack.c.h.b16 %v365
    %v420 = vunpack.c.l.b16 %v366
    %v421 = vunpack.c.h.b16 %v366
    %v422 = vunpack.c.l.b16 %v367
    %v423 = vunpack.c.h.b16 %v367
    %v424 = vunpack.c.l.b16 %v368
    %v425 = vunpack.c.h.b16 %v368
    %v426 = vunpack.c.l.b16 %v369
    %v427 = vunpack.c.h.b16 %v369
    %v428 = vunpack.c.l.b16 %v370
    %v429 = vunpack.c.h.b16 %v370
    %v430 = vunpack.c.l.b16 %v371
    %v431 = vunpack.c.h.b16 %v371
    %v432 = vpack.c.b16 %v402, %v400
    %v433 = vpack.c.b16 %v403, %v401
    %v434 = vpack.c.b16 %v406, %v404
    %v435 = vpack.c.b16 %v407, %v405
    %v436 = vpack.c.b16 %v410, %v408
    %v437 = vpack.c.b16 %v411, %v409
    %v438 = vpack.c.b16 %v414, %v412
    %v439 = vpack.c.b16 %v415, %v413
    %v440 = vpack.c.b16 %v418, %v416
    %v441 = vpack.c.b16 %v419, %v417
    %v442 = vpack.c.b16 %v422, %v420
    %v443 = vpack.c.b16 %v423, %v421
    %v444 = vpack.c.b16 %v426, %v424
    %v445 = vpack.c.b16 %v427, %v425
    %v446 = vpack.c.b16 %v430, %v428
    %v447 = vpack.c.b16 %v431, %v429
    %464 = vmatprep.subr.bf16.mxu0 %v433
    %465 = vmatpush1.bf16.msra.mxu0 %v432
    %466 = vmatprep.subr.bf16.mxu0 %v435
    %467 = vmatpush1.bf16.msra.mxu0 %v434
    %468 = vmatprep.subr.bf16.mxu0 %v437
    %469 = vmatpush1.bf16.msra.mxu0 %v436
    %470 = vmatprep.subr.bf16.mxu0 %v439
    %471 = vmatpush1.bf16.msra.mxu0 %v438
    %472 = vmatprep.subr.bf16.mxu0 %v441
    %473 = vmatpush1.bf16.msra.mxu0 %v440
    %474 = vmatprep.subr.bf16.mxu0 %v443
    %475 = vmatpush1.bf16.msra.mxu0 %v442
    %476 = vmatprep.subr.bf16.mxu0 %v445
    %477 = vmatpush1.bf16.msra.mxu0 %v444
    %478 = vmatprep.subr.bf16.mxu0 %v447
    %479 = vmatpush1.bf16.msra.mxu0 %v446
    %480 = vmatprep.subr.bf16.mxu0 0
    %481 = vmatpush1.bf16.msra.mxu0 0
    %482 = vmatprep.subr.bf16.mxu0 0
    %483 = vmatpush1.bf16.msra.mxu0 0
    %484 = vmatprep.subr.bf16.mxu0 0
    %485 = vmatpush1.bf16.msra.mxu0 0
    %486 = vmatprep.subr.bf16.mxu0 0
    %487 = vmatpush1.bf16.msra.mxu0 0
    %488 = vmatprep.subr.bf16.mxu0 0
    %489 = vmatpush1.bf16.msra.mxu0 0
    %490 = vmatprep.subr.bf16.mxu0 0
    %491 = vmatpush1.bf16.msra.mxu0 0
    %492 = vmatprep.subr.bf16.mxu0 0
    %493 = vmatpush1.bf16.msra.mxu0 0
    %494 = vmatprep.subr.bf16.mxu0 0
    %495 = vmatpush1.bf16.msra.mxu0 0
    %496 = vmatprep.mubr.bf16.mxu0 0
    %497 = vmatmul.mubr.bf16.gmra.mrb[0].mxu0 %v352
    %v498 = vpop.f32.mrb[0].mxu0
    %v499 = vadd.f32 %v377, %v498
    %v500 = vpop.f32.mrb[0].mxu0
    %v501 = vadd.f32 %v381, %v500
    %v502 = vpop.f32.mrb[0].mxu0
    %v503 = vadd.f32 %v377, %v502
    %v504 = vpop.f32.mrb[0].mxu0
    %v505 = vadd.f32 %v381, %v504
    %506 = vmatprep.mubr.bf16.mxu0 0
    %507 = vmatmul.mubr.bf16.gmra.mrb[0].mxu0 %v353
    %v508 = vpop.f32.mrb[0].mxu0
    %v509 = vadd.f32 %v377, %v508
    %v510 = vpop.f32.mrb[0].mxu0
    %v511 = vadd.f32 %v381, %v510
    %v512 = vpop.f32.mrb[0].mxu0
    %v513 = vadd.f32 %v377, %v512
    %v514 = vpop.f32.mrb[0].mxu0
    %v515 = vadd.f32 %v381, %v514
    %516 = vmatprep.mubr.bf16.mxu0 0
    %517 = vmatmul.mubr.bf16.gmra.mrb[0].mxu0 %v354
    %v518 = vpop.f32.mrb[0].mxu0
    %v519 = vadd.f32 %v377, %v518
    %v520 = vpop.f32.mrb[0].mxu0
    %v521 = vadd.f32 %v381, %v520
    %v522 = vpop.f32.mrb[0].mxu0
    %v523 = vadd.f32 %v377, %v522
    %v524 = vpop.f32.mrb[0].mxu0
    %v525 = vadd.f32 %v381, %v524
    %526 = vmatprep.mubr.bf16.mxu0 0
    %527 = vmatmul.mubr.bf16.gmra.mrb[0].mxu0 %v355
    %v528 = vpop.f32.mrb[0].mxu0
    %v529 = vadd.f32 %v377, %v528
    %v530 = vpop.f32.mrb[0].mxu0
    %v531 = vadd.f32 %v381, %v530
    %v532 = vpop.f32.mrb[0].mxu0
    %v533 = vadd.f32 %v377, %v532
    %v534 = vpop.f32.mrb[0].mxu0
    %v535 = vadd.f32 %v381, %v534
    %536 = vdwg.mxu0
    %v537 = vadd.f32 %v499, %v503
    %v538 = vadd.f32 %v537, %v509
    %v539 = vadd.f32 %v538, %v513
    %v540 = vadd.f32 %v539, %v519
    %v541 = vadd.f32 %v540, %v523
    %v542 = vadd.f32 %v541, %v529
    %v543 = vadd.f32 %v542, %v533
    %v544 = vrot.slane %v543, 4
    %v545 = vadd.f32 %v543, %v544
    %v546 = vrot.slane %v545, 2
    %v547 = vadd.f32 %v545, %v546
    %v548 = vrot.slane %v547, 1
    %v549 = vadd.f32 %v547, %v548
    %v550 = vadd.f32 %v501, %v505
    %v551 = vadd.f32 %v550, %v511
    %v552 = vadd.f32 %v551, %v515
    %v553 = vadd.f32 %v552, %v521
    %v554 = vadd.f32 %v553, %v525
    %v555 = vadd.f32 %v554, %v531
    %v556 = vadd.f32 %v555, %v535
    %v557 = vrot.slane %v556, 4
    %v558 = vadd.f32 %v556, %v557
    %v559 = vrot.slane %v558, 2
    %v560 = vadd.f32 %v558, %v559
    %v561 = vrot.slane %v560, 1
    %v562 = vadd.f32 %v560, %v561
    %v563 = vmul.f32 %v549, 0.015625
    %v564 = vmul.f32 %v562, 0.015625
    %v565 = vsub.f32 %v499, %v563
    %v566 = vsub.f32 %v501, %v564
    %v567 = vsub.f32 %v503, %v563
    %v568 = vsub.f32 %v505, %v564
    %v569 = vsub.f32 %v509, %v563
    %v570 = vsub.f32 %v511, %v564
    %v571 = vsub.f32 %v513, %v563
    %v572 = vsub.f32 %v515, %v564
    %v573 = vsub.f32 %v519, %v563
    %v574 = vsub.f32 %v521, %v564
    %v575 = vsub.f32 %v523, %v563
    %v576 = vsub.f32 %v525, %v564
    %v577 = vsub.f32 %v529, %v563
    %v578 = vsub.f32 %v531, %v564
    %v579 = vsub.f32 %v533, %v563
    %v580 = vsub.f32 %v535, %v564
    %v581 = vmul.f32 %v565, %v565
    %v582 = vmul.f32 %v566, %v566
    %v583 = vmul.f32 %v567, %v567
    %v584 = vmul.f32 %v568, %v568
    %v585 = vmul.f32 %v569, %v569
    %v586 = vmul.f32 %v570, %v570
    %v587 = vmul.f32 %v571, %v571
    %v588 = vmul.f32 %v572, %v572
    %v589 = vmul.f32 %v573, %v573
    %v590 = vmul.f32 %v574, %v574
    %v591 = vmul.f32 %v575, %v575
    %v592 = vmul.f32 %v576, %v576
    %v593 = vmul.f32 %v577, %v577
    %v594 = vmul.f32 %v578, %v578
    %v595 = vmul.f32 %v579, %v579
    %v596 = vmul.f32 %v580, %v580
    %v597 = vadd.f32 %v581, %v583
    %v598 = vadd.f32 %v597, %v585
    %v599 = vadd.f32 %v598, %v587
    %v600 = vadd.f32 %v599, %v589
    %v601 = vadd.f32 %v600, %v591
    %v602 = vadd.f32 %v601, %v593
    %v603 = vadd.f32 %v602, %v595
    %v604 = vrot.slane %v603, 4
    %v605 = vadd.f32 %v603, %v604
    %v606 = vrot.slane %v605, 2
    %v607 = vadd.f32 %v605, %v606
    %v608 = vrot.slane %v607, 1
    %v609 = vadd.f32 %v607, %v608
    %v610 = vadd.f32 %v582, %v584
    %v611 = vadd.f32 %v610, %v586
    %v612 = vadd.f32 %v611, %v588
    %v613 = vadd.f32 %v612, %v590
    %v614 = vadd.f32 %v613, %v592
    %v615 = vadd.f32 %v614, %v594
    %v616 = vadd.f32 %v615, %v596
    %v617 = vrot.slane %v616, 4
    %v618 = vadd.f32 %v616, %v617
    %v619 = vrot.slane %v618, 2
    %v620 = vadd.f32 %v618, %v619
    %v621 = vrot.slane %v620, 1
    %v622 = vadd.f32 %v620, %v621
    %v623 = vmul.f32 %v609, 0.015625
    %v624 = vmul.f32 %v622, 0.015625
    %v625 = vld [vmem:[%s5] sm:$0x3]
    %v626 = vadd.f32 %v623, 1e-05
    %v627 = vadd.f32 %v624, 1e-05
    %v628 = vrsqrt.pop %v626
    %v629 = vrsqrt.pop %v627
    %v632 = vcombine.low %v628, %v629
    %v634 = vunpack.c.l.s4 1966171168
    %v635 = vunpack.c.0.s8 %v634
    %v636 = vlaneseq
    %v637 = vshrl.u32 %v636, 7
    %v638 = vsub.s32 %v635, %v637
    %v639 = vrot.slane %v632, %v638
    %v641 = vunpack.c.l.s4 1966171168
    %v642 = vunpack.c.0.s8 %v641
    %v643 = vlaneseq
    %v644 = vshrl.u32 %v643, 7
    %v645 = vsub.s32 %v642, %v644
    %v646 = vrot.slane %v639, %v645
    %v648 = vmul.f32 %v625, %v646
    %v650 = vlaneseq
    %v651 = vshrl.u32 %v650, 7
    %v652 = vsub.s32 0, %v651
    %v653 = vrot.slane %v648, %v652
    %v654 = vlaneseq
    %v655 = vshrl.u32 %v654, 7
    %v656 = vsub.s32 1, %v655
    %v657 = vrot.slane %v648, %v656
    %v660 = vmul.f32 %v565, %v653
    %v661 = vmul.f32 %v566, %v657
    %v662 = vmul.f32 %v567, %v653
    %v663 = vmul.f32 %v568, %v657
    %v664 = vmul.f32 %v569, %v653
    %v665 = vmul.f32 %v570, %v657
    %v666 = vmul.f32 %v571, %v653
    %v667 = vmul.f32 %v572, %v657
    %v668 = vmul.f32 %v573, %v653
    %v669 = vmul.f32 %v574, %v657
    %v670 = vmul.f32 %v575, %v653
    %v671 = vmul.f32 %v576, %v657
    %v672 = vmul.f32 %v577, %v653
    %v673 = vmul.f32 %v578, %v657
    %v674 = vmul.f32 %v579, %v653
    %v675 = vmul.f32 %v580, %v657
    %v676 = vld [vmem:[#allocation9] sm:$0x3]
    %v678 = vlaneseq
    %v679 = vshrl.u32 %v678, 7
    %v680 = vsub.s32 0, %v679
    %v681 = vrot.slane %v676, %v680
    %v682 = vlaneseq
    %v683 = vshrl.u32 %v682, 7
    %v684 = vsub.s32 1, %v683
    %v685 = vrot.slane %v676, %v684
    %v688 = vadd.f32 %v660, %v681
    %v689 = vadd.f32 %v661, %v685
    %v690 = vadd.f32 %v662, %v681
    %v691 = vadd.f32 %v663, %v685
    %v692 = vadd.f32 %v664, %v681
    %v693 = vadd.f32 %v665, %v685
    %v694 = vadd.f32 %v666, %v681
    %v695 = vadd.f32 %v667, %v685
    %v696 = vadd.f32 %v668, %v681
    %v697 = vadd.f32 %v669, %v685
    %v698 = vadd.f32 %v670, %v681
    %v699 = vadd.f32 %v671, %v685
    %v700 = vadd.f32 %v672, %v681
    %v701 = vadd.f32 %v673, %v685
    %v702 = vadd.f32 %v674, %v681
    %v703 = vadd.f32 %v675, %v685
    %v704 = vmax.f32 %v688, 0.0
    %v705 = vmax.f32 %v689, 0.0
    %v706 = vmax.f32 %v690, 0.0
    %v707 = vmax.f32 %v691, 0.0
    %v708 = vmax.f32 %v692, 0.0
    %v709 = vmax.f32 %v693, 0.0
    %v710 = vmax.f32 %v694, 0.0
    %v711 = vmax.f32 %v695, 0.0
    %v712 = vmax.f32 %v696, 0.0
    %v713 = vmax.f32 %v697, 0.0
    %v714 = vmax.f32 %v698, 0.0
    %v715 = vmax.f32 %v699, 0.0
    %v716 = vmax.f32 %v700, 0.0
    %v717 = vmax.f32 %v701, 0.0
    %v718 = vmax.f32 %v702, 0.0
    %v719 = vmax.f32 %v703, 0.0
    %v720 = vpack.c.bf16 %v706, %v704
    %v721 = vpack.c.bf16 %v707, %v705
    %v722 = vpack.c.bf16 %v710, %v708
    %v723 = vpack.c.bf16 %v711, %v709
    %v724 = vpack.c.bf16 %v714, %v712
    %v725 = vpack.c.bf16 %v715, %v713
    %v726 = vpack.c.bf16 %v718, %v716
    %v727 = vpack.c.bf16 %v719, %v717
    %v728 = vld [vmem:[#allocation10] sm:$0xff]
    %v729 = vld [vmem:[#allocation10 + $0x8] sm:$0xff]
    %v730 = vld [vmem:[#allocation10 + $0x10] sm:$0xff]
    %v731 = vld [vmem:[#allocation10 + $0x18] sm:$0xff]
    %v732 = vld [vmem:[#allocation10 + $0x20] sm:$0xff]
    %v733 = vld [vmem:[#allocation10 + $0x28] sm:$0xff]
    %v734 = vld [vmem:[#allocation10 + $0x30] sm:$0xff]
    %v735 = vld [vmem:[#allocation10 + $0x38] sm:$0xff]
    %v736 = vld [vmem:[#allocation10 + $0x40] sm:$0xff]
    %v737 = vld [vmem:[#allocation10 + $0x48] sm:$0xff]
    %v738 = vld [vmem:[#allocation10 + $0x50] sm:$0xff]
    %v739 = vld [vmem:[#allocation10 + $0x58] sm:$0xff]
    %v740 = vld [vmem:[#allocation10 + $0x60] sm:$0xff]
    %v741 = vld [vmem:[#allocation10 + $0x68] sm:$0xff]
    %v742 = vld [vmem:[#allocation10 + $0x70] sm:$0xff]
    %v743 = vld [vmem:[#allocation10 + $0x78] sm:$0xff]
    %v744 = vld [vmem:[#allocation10 + $0x80] sm:$0xff]
    %v745 = vld [vmem:[#allocation10 + $0x88] sm:$0xff]
    %v746 = vld [vmem:[#allocation10 + $0x90] sm:$0xff]
    %v747 = vld [vmem:[#allocation10 + $0x98] sm:$0xff]
    %v748 = vld [vmem:[#allocation10 + $0xa0] sm:$0xff]
    %v749 = vld [vmem:[#allocation10 + $0xa8] sm:$0xff]
    %v750 = vld [vmem:[#allocation10 + $0xb0] sm:$0xff]
    %v751 = vld [vmem:[#allocation10 + $0xb8] sm:$0xff]
    %v752 = vld [vmem:[#allocation10 + $0xc0] sm:$0xff]
    %v753 = vld [vmem:[#allocation10 + $0xc8] sm:$0xff]
    %v754 = vld [vmem:[#allocation10 + $0xd0] sm:$0xff]
    %v755 = vld [vmem:[#allocation10 + $0xd8] sm:$0xff]
    %v756 = vld [vmem:[#allocation10 + $0xe0] sm:$0xff]
    %v757 = vld [vmem:[#allocation10 + $0xe8] sm:$0xff]
    %v758 = vld [vmem:[#allocation10 + $0xf0] sm:$0xff]
    %v759 = vld [vmem:[#allocation10 + $0xf8] sm:$0xff]
    %v760 = vld [vmem:[#allocation10 + $0x100] sm:$0xff]
    %v761 = vld [vmem:[#allocation10 + $0x108] sm:$0xff]
    %v762 = vld [vmem:[#allocation10 + $0x110] sm:$0xff]
    %v763 = vld [vmem:[#allocation10 + $0x118] sm:$0xff]
    %v764 = vld [vmem:[#allocation10 + $0x120] sm:$0xff]
    %v765 = vld [vmem:[#allocation10 + $0x128] sm:$0xff]
    %v766 = vld [vmem:[#allocation10 + $0x130] sm:$0xff]
    %v767 = vld [vmem:[#allocation10 + $0x138] sm:$0xff]
    %v768 = vld [vmem:[#allocation10 + $0x140] sm:$0xff]
    %v769 = vld [vmem:[#allocation10 + $0x148] sm:$0xff]
    %v770 = vld [vmem:[#allocation10 + $0x150] sm:$0xff]
    %v771 = vld [vmem:[#allocation10 + $0x158] sm:$0xff]
    %v772 = vld [vmem:[#allocation10 + $0x160] sm:$0xff]
    %v773 = vld [vmem:[#allocation10 + $0x168] sm:$0xff]
    %v774 = vld [vmem:[#allocation10 + $0x170] sm:$0xff]
    %v775 = vld [vmem:[#allocation10 + $0x178] sm:$0xff]
    %v776 = vld [vmem:[#allocation10 + $0x180] sm:$0xff]
    %v777 = vld [vmem:[#allocation10 + $0x188] sm:$0xff]
    %v778 = vld [vmem:[#allocation10 + $0x190] sm:$0xff]
    %v779 = vld [vmem:[#allocation10 + $0x198] sm:$0xff]
    %v780 = vld [vmem:[#allocation10 + $0x1a0] sm:$0xff]
    %v781 = vld [vmem:[#allocation10 + $0x1a8] sm:$0xff]
    %v782 = vld [vmem:[#allocation10 + $0x1b0] sm:$0xff]
    %v783 = vld [vmem:[#allocation10 + $0x1b8] sm:$0xff]
    %v784 = vld [vmem:[#allocation10 + $0x1c0] sm:$0xff]
    %v785 = vld [vmem:[#allocation10 + $0x1c8] sm:$0xff]
    %v786 = vld [vmem:[#allocation10 + $0x1d0] sm:$0xff]
    %v787 = vld [vmem:[#allocation10 + $0x1d8] sm:$0xff]
    %v788 = vld [vmem:[#allocation10 + $0x1e0] sm:$0xff]
    %v789 = vld [vmem:[#allocation10 + $0x1e8] sm:$0xff]
    %v790 = vld [vmem:[#allocation10 + $0x1f0] sm:$0xff]
    %v791 = vld [vmem:[#allocation10 + $0x1f8] sm:$0xff]
    %v792 = vld [vmem:[#allocation12] sm:$0xf]
    %v794 = vlaneseq
    %v795 = vshrl.u32 %v794, 7
    %v796 = vsub.s32 0, %v795
    %v797 = vrot.slane %v792, %v796
    %v798 = vlaneseq
    %v799 = vshrl.u32 %v798, 7
    %v800 = vsub.s32 1, %v799
    %v801 = vrot.slane %v792, %v800
    %v802 = vlaneseq
    %v803 = vshrl.u32 %v802, 7
    %v804 = vsub.s32 2, %v803
    %v805 = vrot.slane %v792, %v804
    %v806 = vlaneseq
    %v807 = vshrl.u32 %v806, 7
    %v808 = vsub.s32 3, %v807
    %v809 = vrot.slane %v792, %v808
    %v878 = vunpack.c.l.b16 %v728
    %v879 = vunpack.c.h.b16 %v728
    %v880 = vunpack.c.l.b16 %v729
    %v881 = vunpack.c.h.b16 %v729
    %v882 = vunpack.c.l.b16 %v730
    %v883 = vunpack.c.h.b16 %v730
    %v884 = vunpack.c.l.b16 %v731
    %v885 = vunpack.c.h.b16 %v731
    %v886 = vunpack.c.l.b16 %v732
    %v887 = vunpack.c.h.b16 %v732
    %v888 = vunpack.c.l.b16 %v733
    %v889 = vunpack.c.h.b16 %v733
    %v890 = vunpack.c.l.b16 %v734
    %v891 = vunpack.c.h.b16 %v734
    %v892 = vunpack.c.l.b16 %v735
    %v893 = vunpack.c.h.b16 %v735
    %v894 = vunpack.c.l.b16 %v736
    %v895 = vunpack.c.h.b16 %v736
    %v896 = vunpack.c.l.b16 %v737
    %v897 = vunpack.c.h.b16 %v737
    %v898 = vunpack.c.l.b16 %v738
    %v899 = vunpack.c.h.b16 %v738
    %v900 = vunpack.c.l.b16 %v739
    %v901 = vunpack.c.h.b16 %v739
    %v902 = vunpack.c.l.b16 %v740
    %v903 = vunpack.c.h.b16 %v740
    %v904 = vunpack.c.l.b16 %v741
    %v905 = vunpack.c.h.b16 %v741
    %v906 = vunpack.c.l.b16 %v742
    %v907 = vunpack.c.h.b16 %v742
    %v908 = vunpack.c.l.b16 %v743
    %v909 = vunpack.c.h.b16 %v743
    %v910 = vunpack.c.l.b16 %v744
    %v911 = vunpack.c.h.b16 %v744
    %v912 = vunpack.c.l.b16 %v745
    %v913 = vunpack.c.h.b16 %v745
    %v914 = vunpack.c.l.b16 %v746
    %v915 = vunpack.c.h.b16 %v746
    %v916 = vunpack.c.l.b16 %v747
    %v917 = vunpack.c.h.b16 %v747
    %v918 = vunpack.c.l.b16 %v748
    %v919 = vunpack.c.h.b16 %v748
    %v920 = vunpack.c.l.b16 %v749
    %v921 = vunpack.c.h.b16 %v749
    %v922 = vunpack.c.l.b16 %v750
    %v923 = vunpack.c.h.b16 %v750
    %v924 = vunpack.c.l.b16 %v751
    %v925 = vunpack.c.h.b16 %v751
    %v926 = vunpack.c.l.b16 %v752
    %v927 = vunpack.c.h.b16 %v752
    %v928 = vunpack.c.l.b16 %v753
    %v929 = vunpack.c.h.b16 %v753
    %v930 = vunpack.c.l.b16 %v754
    %v931 = vunpack.c.h.b16 %v754
    %v932 = vunpack.c.l.b16 %v755
    %v933 = vunpack.c.h.b16 %v755
    %v934 = vunpack.c.l.b16 %v756
    %v935 = vunpack.c.h.b16 %v756
    %v936 = vunpack.c.l.b16 %v757
    %v937 = vunpack.c.h.b16 %v757
    %v938 = vunpack.c.l.b16 %v758
    %v939 = vunpack.c.h.b16 %v758
    %v940 = vunpack.c.l.b16 %v759
    %v941 = vunpack.c.h.b16 %v759
    %v942 = vunpack.c.l.b16 %v760
    %v943 = vunpack.c.h.b16 %v760
    %v944 = vunpack.c.l.b16 %v761
    %v945 = vunpack.c.h.b16 %v761
    %v946 = vunpack.c.l.b16 %v762
    %v947 = vunpack.c.h.b16 %v762
    %v948 = vunpack.c.l.b16 %v763
    %v949 = vunpack.c.h.b16 %v763
    %v950 = vunpack.c.l.b16 %v764
    %v951 = vunpack.c.h.b16 %v764
    %v952 = vunpack.c.l.b16 %v765
    %v953 = vunpack.c.h.b16 %v765
    %v954 = vunpack.c.l.b16 %v766
    %v955 = vunpack.c.h.b16 %v766
    %v956 = vunpack.c.l.b16 %v767
    %v957 = vunpack.c.h.b16 %v767
    %v958 = vunpack.c.l.b16 %v768
    %v959 = vunpack.c.h.b16 %v768
    %v960 = vunpack.c.l.b16 %v769
    %v961 = vunpack.c.h.b16 %v769
    %v962 = vunpack.c.l.b16 %v770
    %v963 = vunpack.c.h.b16 %v770
    %v964 = vunpack.c.l.b16 %v771
    %v965 = vunpack.c.h.b16 %v771
    %v966 = vunpack.c.l.b16 %v772
    %v967 = vunpack.c.h.b16 %v772
    %v968 = vunpack.c.l.b16 %v773
    %v969 = vunpack.c.h.b16 %v773
    %v970 = vunpack.c.l.b16 %v774
    %v971 = vunpack.c.h.b16 %v774
    %v972 = vunpack.c.l.b16 %v775
    %v973 = vunpack.c.h.b16 %v775
    %v974 = vunpack.c.l.b16 %v776
    %v975 = vunpack.c.h.b16 %v776
    %v976 = vunpack.c.l.b16 %v777
    %v977 = vunpack.c.h.b16 %v777
    %v978 = vunpack.c.l.b16 %v778
    %v979 = vunpack.c.h.b16 %v778
    %v980 = vunpack.c.l.b16 %v779
    %v981 = vunpack.c.h.b16 %v779
    %v982 = vunpack.c.l.b16 %v780
    %v983 = vunpack.c.h.b16 %v780
    %v984 = vunpack.c.l.b16 %v781
    %v985 = vunpack.c.h.b16 %v781
    %v986 = vunpack.c.l.b16 %v782
    %v987 = vunpack.c.h.b16 %v782
    %v988 = vunpack.c.l.b16 %v783
    %v989 = vunpack.c.h.b16 %v783
    %v990 = vunpack.c.l.b16 %v784
    %v991 = vunpack.c.h.b16 %v784
    %v992 = vunpack.c.l.b16 %v785
    %v993 = vunpack.c.h.b16 %v785
    %v994 = vunpack.c.l.b16 %v786
    %v995 = vunpack.c.h.b16 %v786
    %v996 = vunpack.c.l.b16 %v787
    %v997 = vunpack.c.h.b16 %v787
    %v998 = vunpack.c.l.b16 %v788
    %v999 = vunpack.c.h.b16 %v788
    %v1000 = vunpack.c.l.b16 %v789
    %v1001 = vunpack.c.h.b16 %v789
    %v1002 = vunpack.c.l.b16 %v790
    %v1003 = vunpack.c.h.b16 %v790
    %v1004 = vunpack.c.l.b16 %v791
    %v1005 = vunpack.c.h.b16 %v791
    %v1006 = vpack.c.b16 %v882, %v878
    %v1007 = vpack.c.b16 %v883, %v879
    %v1008 = vpack.c.b16 %v884, %v880
    %v1009 = vpack.c.b16 %v885, %v881
    %v1010 = vpack.c.b16 %v890, %v886
    %v1011 = vpack.c.b16 %v891, %v887
    %v1012 = vpack.c.b16 %v892, %v888
    %v1013 = vpack.c.b16 %v893, %v889
    %v1014 = vpack.c.b16 %v898, %v894
    %v1015 = vpack.c.b16 %v899, %v895
    %v1016 = vpack.c.b16 %v900, %v896
    %v1017 = vpack.c.b16 %v901, %v897
    %v1018 = vpack.c.b16 %v906, %v902
    %v1019 = vpack.c.b16 %v907, %v903
    %v1020 = vpack.c.b16 %v908, %v904
    %v1021 = vpack.c.b16 %v909, %v905
    %v1022 = vpack.c.b16 %v914, %v910
    %v1023 = vpack.c.b16 %v915, %v911
    %v1024 = vpack.c.b16 %v916, %v912
    %v1025 = vpack.c.b16 %v917, %v913
    %v1026 = vpack.c.b16 %v922, %v918
    %v1027 = vpack.c.b16 %v923, %v919
    %v1028 = vpack.c.b16 %v924, %v920
    %v1029 = vpack.c.b16 %v925, %v921
    %v1030 = vpack.c.b16 %v930, %v926
    %v1031 = vpack.c.b16 %v931, %v927
    %v1032 = vpack.c.b16 %v932, %v928
    %v1033 = vpack.c.b16 %v933, %v929
    %v1034 = vpack.c.b16 %v938, %v934
    %v1035 = vpack.c.b16 %v939, %v935
    %v1036 = vpack.c.b16 %v940, %v936
    %v1037 = vpack.c.b16 %v941, %v937
    %v1038 = vpack.c.b16 %v946, %v942
    %v1039 = vpack.c.b16 %v947, %v943
    %v1040 = vpack.c.b16 %v948, %v944
    %v1041 = vpack.c.b16 %v949, %v945
    %v1042 = vpack.c.b16 %v954, %v950
    %v1043 = vpack.c.b16 %v955, %v951
    %v1044 = vpack.c.b16 %v956, %v952
    %v1045 = vpack.c.b16 %v957, %v953
    %v1046 = vpack.c.b16 %v962, %v958
    %v1047 = vpack.c.b16 %v963, %v959
    %v1048 = vpack.c.b16 %v964, %v960
    %v1049 = vpack.c.b16 %v965, %v961
    %v1050 = vpack.c.b16 %v970, %v966
    %v1051 = vpack.c.b16 %v971, %v967
    %v1052 = vpack.c.b16 %v972, %v968
    %v1053 = vpack.c.b16 %v973, %v969
    %v1054 = vpack.c.b16 %v978, %v974
    %v1055 = vpack.c.b16 %v979, %v975
    %v1056 = vpack.c.b16 %v980, %v976
    %v1057 = vpack.c.b16 %v981, %v977
    %v1058 = vpack.c.b16 %v986, %v982
    %v1059 = vpack.c.b16 %v987, %v983
    %v1060 = vpack.c.b16 %v988, %v984
    %v1061 = vpack.c.b16 %v989, %v985
    %v1062 = vpack.c.b16 %v994, %v990
    %v1063 = vpack.c.b16 %v995, %v991
    %v1064 = vpack.c.b16 %v996, %v992
    %v1065 = vpack.c.b16 %v997, %v993
    %v1066 = vpack.c.b16 %v1002, %v998
    %v1067 = vpack.c.b16 %v1003, %v999
    %v1068 = vpack.c.b16 %v1004, %v1000
    %v1069 = vpack.c.b16 %v1005, %v1001
    %1134 = vmatprep.subr.bf16.mxu0 %v1007
    %1135 = vmatpush1.bf16.msra.mxu0 %v1006
    %1136 = vmatprep.subr.bf16.mxu0 %v1011
    %1137 = vmatpush1.bf16.msra.mxu0 %v1010
    %1138 = vmatprep.subr.bf16.mxu0 %v1015
    %1139 = vmatpush1.bf16.msra.mxu0 %v1014
    %1140 = vmatprep.subr.bf16.mxu0 %v1019
    %1141 = vmatpush1.bf16.msra.mxu0 %v1018
    %1142 = vmatprep.subr.bf16.mxu0 %v1023
    %1143 = vmatpush1.bf16.msra.mxu0 %v1022
    %1144 = vmatprep.subr.bf16.mxu0 %v1027
    %1145 = vmatpush1.bf16.msra.mxu0 %v1026
    %1146 = vmatprep.subr.bf16.mxu0 %v1031
    %1147 = vmatpush1.bf16.msra.mxu0 %v1030
    %1148 = vmatprep.subr.bf16.mxu0 %v1035
    %1149 = vmatpush1.bf16.msra.mxu0 %v1034
    %1150 = vmatprep.subr.bf16.mxu0 %v1039
    %1151 = vmatpush1.bf16.msra.mxu0 %v1038
    %1152 = vmatprep.subr.bf16.mxu0 %v1043
    %1153 = vmatpush1.bf16.msra.mxu0 %v1042
    %1154 = vmatprep.subr.bf16.mxu0 %v1047
    %1155 = vmatpush1.bf16.msra.mxu0 %v1046
    %1156 = vmatprep.subr.bf16.mxu0 %v1051
    %1157 = vmatpush1.bf16.msra.mxu0 %v1050
    %1158 = vmatprep.subr.bf16.mxu0 %v1055
    %1159 = vmatpush1.bf16.msra.mxu0 %v1054
    %1160 = vmatprep.subr.bf16.mxu0 %v1059
    %1161 = vmatpush1.bf16.msra.mxu0 %v1058
    %1162 = vmatprep.subr.bf16.mxu0 %v1063
    %1163 = vmatpush1.bf16.msra.mxu0 %v1062
    %1164 = vmatprep.subr.bf16.mxu0 %v1067
    %1165 = vmatpush1.bf16.msra.mxu0 %v1066
    %1166 = vmatprep.mubr.bf16.mxu0 %v721
    %1167 = vmatmul.mubr.bf16.gmra.mrb[0].mxu0 %v720
    %v1168 = vpop.f32.mrb[0].mxu0
    %v1169 = vadd.f32 %v797, %v1168
    %v1170 = vpop.f32.mrb[0].mxu0
    %v1171 = vadd.f32 %v801, %v1170
    %v1172 = vpop.f32.mrb[0].mxu0
    %v1173 = vadd.f32 %v797, %v1172
    %v1174 = vpop.f32.mrb[0].mxu0
    %v1175 = vadd.f32 %v801, %v1174
    %1176 = vmatprep.mubr.bf16.mxu0 %v723
    %1177 = vmatmul.mubr.bf16.gmra.mrb[0].mxu0 %v722
    %v1178 = vpop.f32.mrb[0].mxu0
    %v1179 = vadd.f32 %v797, %v1178
    %v1180 = vpop.f32.mrb[0].mxu0
    %v1181 = vadd.f32 %v801, %v1180
    %v1182 = vpop.f32.mrb[0].mxu0
    %v1183 = vadd.f32 %v797, %v1182
    %v1184 = vpop.f32.mrb[0].mxu0
    %v1185 = vadd.f32 %v801, %v1184
    %1186 = vmatprep.mubr.bf16.mxu0 %v725
    %1187 = vmatmul.mubr.bf16.gmra.mrb[0].mxu0 %v724
    %v1188 = vpop.f32.mrb[0].mxu0
    %v1189 = vadd.f32 %v797, %v1188
    %v1190 = vpop.f32.mrb[0].mxu0
    %v1191 = vadd.f32 %v801, %v1190
    %v1192 = vpop.f32.mrb[0].mxu0
    %v1193 = vadd.f32 %v797, %v1192
    %v1194 = vpop.f32.mrb[0].mxu0
    %v1195 = vadd.f32 %v801, %v1194
    %1196 = vmatprep.mubr.bf16.mxu0 %v727
    %1197 = vmatmul.mubr.bf16.gmra.mrb[0].mxu0 %v726
    %v1198 = vpop.f32.mrb[0].mxu0
    %v1199 = vadd.f32 %v797, %v1198
    %v1200 = vpop.f32.mrb[0].mxu0
    %v1201 = vadd.f32 %v801, %v1200
    %v1202 = vpop.f32.mrb[0].mxu0
    %v1203 = vadd.f32 %v797, %v1202
    %v1204 = vpop.f32.mrb[0].mxu0
    %v1205 = vadd.f32 %v801, %v1204
    %1206 = vdwg.mxu0
    %1207 = vmatprep.subr.bf16.mxu0 %v1009
    %1208 = vmatpush1.bf16.msra.mxu0 %v1008
    %1209 = vmatprep.subr.bf16.mxu0 %v1013
    %1210 = vmatpush1.bf16.msra.mxu0 %v1012
    %1211 = vmatprep.subr.bf16.mxu0 %v1017
    %1212 = vmatpush1.bf16.msra.mxu0 %v1016
    %1213 = vmatprep.subr.bf16.mxu0 %v1021
    %1214 = vmatpush1.bf16.msra.mxu0 %v1020
    %1215 = vmatprep.subr.bf16.mxu0 %v1025
    %1216 = vmatpush1.bf16.msra.mxu0 %v1024
    %1217 = vmatprep.subr.bf16.mxu0 %v1029
    %1218 = vmatpush1.bf16.msra.mxu0 %v1028
    %1219 = vmatprep.subr.bf16.mxu0 %v1033
    %1220 = vmatpush1.bf16.msra.mxu0 %v1032
    %1221 = vmatprep.subr.bf16.mxu0 %v1037
    %1222 = vmatpush1.bf16.msra.mxu0 %v1036
    %1223 = vmatprep.subr.bf16.mxu0 %v1041
    %1224 = vmatpush1.bf16.msra.mxu0 %v1040
    %1225 = vmatprep.subr.bf16.mxu0 %v1045
    %1226 = vmatpush1.bf16.msra.mxu0 %v1044
    %1227 = vmatprep.subr.bf16.mxu0 %v1049
    %1228 = vmatpush1.bf16.msra.mxu0 %v1048
    %1229 = vmatprep.subr.bf16.mxu0 %v1053
    %1230 = vmatpush1.bf16.msra.mxu0 %v1052
    %1231 = vmatprep.subr.bf16.mxu0 %v1057
    %1232 = vmatpush1.bf16.msra.mxu0 %v1056
    %1233 = vmatprep.subr.bf16.mxu0 %v1061
    %1234 = vmatpush1.bf16.msra.mxu0 %v1060
    %1235 = vmatprep.subr.bf16.mxu0 %v1065
    %1236 = vmatpush1.bf16.msra.mxu0 %v1064
    %1237 = vmatprep.subr.bf16.mxu0 %v1069
    %1238 = vmatpush1.bf16.msra.mxu0 %v1068
    %1239 = vmatprep.mubr.bf16.mxu0 %v721
    %1240 = vmatmul.mubr.bf16.gmra.mrb[0].mxu0 %v720
    %v1241 = vpop.f32.mrb[0].mxu0
    %v1242 = vadd.f32 %v805, %v1241
    %v1243 = vpop.f32.mrb[0].mxu0
    %v1244 = vadd.f32 %v809, %v1243
    %v1245 = vpop.f32.mrb[0].mxu0
    %v1246 = vadd.f32 %v805, %v1245
    %v1247 = vpop.f32.mrb[0].mxu0
    %v1248 = vadd.f32 %v809, %v1247
    %1249 = vmatprep.mubr.bf16.mxu0 %v723
    %1250 = vmatmul.mubr.bf16.gmra.mrb[0].mxu0 %v722
    %v1251 = vpop.f32.mrb[0].mxu0
    %v1252 = vadd.f32 %v805, %v1251
    %v1253 = vpop.f32.mrb[0].mxu0
    %v1254 = vadd.f32 %v809, %v1253
    %v1255 = vpop.f32.mrb[0].mxu0
    %v1256 = vadd.f32 %v805, %v1255
    %v1257 = vpop.f32.mrb[0].mxu0
    %v1258 = vadd.f32 %v809, %v1257
    %1259 = vmatprep.mubr.bf16.mxu0 %v725
    %1260 = vmatmul.mubr.bf16.gmra.mrb[0].mxu0 %v724
    %v1261 = vpop.f32.mrb[0].mxu0
    %v1262 = vadd.f32 %v805, %v1261
    %v1263 = vpop.f32.mrb[0].mxu0
    %v1264 = vadd.f32 %v809, %v1263
    %v1265 = vpop.f32.mrb[0].mxu0
    %v1266 = vadd.f32 %v805, %v1265
    %v1267 = vpop.f32.mrb[0].mxu0
    %v1268 = vadd.f32 %v809, %v1267
    %1269 = vmatprep.mubr.bf16.mxu0 %v727
    %1270 = vmatmul.mubr.bf16.gmra.mrb[0].mxu0 %v726
    %v1271 = vpop.f32.mrb[0].mxu0
    %v1272 = vadd.f32 %v805, %v1271
    %v1273 = vpop.f32.mrb[0].mxu0
    %v1274 = vadd.f32 %v809, %v1273
    %v1275 = vpop.f32.mrb[0].mxu0
    %v1276 = vadd.f32 %v805, %v1275
    %v1277 = vpop.f32.mrb[0].mxu0
    %v1278 = vadd.f32 %v809, %v1277
    %1279 = vdwg.mxu0
    %v1280 = vadd.f32 %v1169, %v1173
    %v1281 = vadd.f32 %v1280, %v1179
    %v1282 = vadd.f32 %v1281, %v1183
    %v1283 = vadd.f32 %v1282, %v1189
    %v1284 = vadd.f32 %v1283, %v1193
    %v1285 = vadd.f32 %v1284, %v1199
    %v1286 = vadd.f32 %v1285, %v1203
    %v1287 = vrot.slane %v1286, 4
    %v1288 = vadd.f32 %v1286, %v1287
    %v1289 = vrot.slane %v1288, 2
    %v1290 = vadd.f32 %v1288, %v1289
    %v1291 = vrot.slane %v1290, 1
    %v1292 = vadd.f32 %v1290, %v1291
    %v1293 = vadd.f32 %v1171, %v1175
    %v1294 = vadd.f32 %v1293, %v1181
    %v1295 = vadd.f32 %v1294, %v1185
    %v1296 = vadd.f32 %v1295, %v1191
    %v1297 = vadd.f32 %v1296, %v1195
    %v1298 = vadd.f32 %v1297, %v1201
    %v1299 = vadd.f32 %v1298, %v1205
    %v1300 = vrot.slane %v1299, 4
    %v1301 = vadd.f32 %v1299, %v1300
    %v1302 = vrot.slane %v1301, 2
    %v1303 = vadd.f32 %v1301, %v1302
    %v1304 = vrot.slane %v1303, 1
    %v1305 = vadd.f32 %v1303, %v1304
    %v1306 = vadd.f32 %v1242, %v1246
    %v1307 = vadd.f32 %v1306, %v1252
    %v1308 = vadd.f32 %v1307, %v1256
    %v1309 = vadd.f32 %v1308, %v1262
    %v1310 = vadd.f32 %v1309, %v1266
    %v1311 = vadd.f32 %v1310, %v1272
    %v1312 = vadd.f32 %v1311, %v1276
    %v1313 = vrot.slane %v1312, 4
    %v1314 = vadd.f32 %v1312, %v1313
    %v1315 = vrot.slane %v1314, 2
    %v1316 = vadd.f32 %v1314, %v1315
    %v1317 = vrot.slane %v1316, 1
    %v1318 = vadd.f32 %v1316, %v1317
    %v1319 = vadd.f32 %v1244, %v1248
    %v1320 = vadd.f32 %v1319, %v1254
    %v1321 = vadd.f32 %v1320, %v1258
    %v1322 = vadd.f32 %v1321, %v1264
    %v1323 = vadd.f32 %v1322, %v1268
    %v1324 = vadd.f32 %v1323, %v1274
    %v1325 = vadd.f32 %v1324, %v1278
    %v1326 = vrot.slane %v1325, 4
    %v1327 = vadd.f32 %v1325, %v1326
    %v1328 = vrot.slane %v1327, 2
    %v1329 = vadd.f32 %v1327, %v1328
    %v1330 = vrot.slane %v1329, 1
    %v1331 = vadd.f32 %v1329, %v1330
    %v1332 = vmul.f32 %v1292, 0.015625
    %v1333 = vmul.f32 %v1305, 0.015625
    %v1334 = vmul.f32 %v1318, 0.015625
    %v1335 = vmul.f32 %v1331, 0.015625
    %v1336 = vsub.f32 %v1169, %v1332
    %v1337 = vsub.f32 %v1171, %v1333
    %v1338 = vsub.f32 %v1242, %v1334
    %v1339 = vsub.f32 %v1244, %v1335
    %v1340 = vsub.f32 %v1173, %v1332
    %v1341 = vsub.f32 %v1175, %v1333
    %v1342 = vsub.f32 %v1246, %v1334
    %v1343 = vsub.f32 %v1248, %v1335
    %v1344 = vsub.f32 %v1179, %v1332
    %v1345 = vsub.f32 %v1181, %v1333
    %v1346 = vsub.f32 %v1252, %v1334
    %v1347 = vsub.f32 %v1254, %v1335
    %v1348 = vsub.f32 %v1183, %v1332
    %v1349 = vsub.f32 %v1185, %v1333
    %v1350 = vsub.f32 %v1256, %v1334
    %v1351 = vsub.f32 %v1258, %v1335
    %v1352 = vsub.f32 %v1189, %v1332
    %v1353 = vsub.f32 %v1191, %v1333
    %v1354 = vsub.f32 %v1262, %v1334
    %v1355 = vsub.f32 %v1264, %v1335
    %v1356 = vsub.f32 %v1193, %v1332
    %v1357 = vsub.f32 %v1195, %v1333
    %v1358 = vsub.f32 %v1266, %v1334
    %v1359 = vsub.f32 %v1268, %v1335
    %v1360 = vsub.f32 %v1199, %v1332
    %v1361 = vsub.f32 %v1201, %v1333
    %v1362 = vsub.f32 %v1272, %v1334
    %v1363 = vsub.f32 %v1274, %v1335
    %v1364 = vsub.f32 %v1203, %v1332
    %v1365 = vsub.f32 %v1205, %v1333
    %v1366 = vsub.f32 %v1276, %v1334
    %v1367 = vsub.f32 %v1278, %v1335
    %v1368 = vmul.f32 %v1336, %v1336
    %v1369 = vmul.f32 %v1337, %v1337
    %v1370 = vmul.f32 %v1338, %v1338
    %v1371 = vmul.f32 %v1339, %v1339
    %v1372 = vmul.f32 %v1340, %v1340
    %v1373 = vmul.f32 %v1341, %v1341
    %v1374 = vmul.f32 %v1342, %v1342
    %v1375 = vmul.f32 %v1343, %v1343
    %v1376 = vmul.f32 %v1344, %v1344
    %v1377 = vmul.f32 %v1345, %v1345
    %v1378 = vmul.f32 %v1346, %v1346
    %v1379 = vmul.f32 %v1347, %v1347
    %v1380 = vmul.f32 %v1348, %v1348
    %v1381 = vmul.f32 %v1349, %v1349
    %v1382 = vmul.f32 %v1350, %v1350
    %v1383 = vmul.f32 %v1351, %v1351
    %v1384 = vmul.f32 %v1352, %v1352
    %v1385 = vmul.f32 %v1353, %v1353
    %v1386 = vmul.f32 %v1354, %v1354
    %v1387 = vmul.f32 %v1355, %v1355
    %v1388 = vmul.f32 %v1356, %v1356
    %v1389 = vmul.f32 %v1357, %v1357
    %v1390 = vmul.f32 %v1358, %v1358
    %v1391 = vmul.f32 %v1359, %v1359
    %v1392 = vmul.f32 %v1360, %v1360
    %v1393 = vmul.f32 %v1361, %v1361
    %v1394 = vmul.f32 %v1362, %v1362
    %v1395 = vmul.f32 %v1363, %v1363
    %v1396 = vmul.f32 %v1364, %v1364
    %v1397 = vmul.f32 %v1365, %v1365
    %v1398 = vmul.f32 %v1366, %v1366
    %v1399 = vmul.f32 %v1367, %v1367
    %v1400 = vadd.f32 %v1368, %v1372
    %v1401 = vadd.f32 %v1400, %v1376
    %v1402 = vadd.f32 %v1401, %v1380
    %v1403 = vadd.f32 %v1402, %v1384
    %v1404 = vadd.f32 %v1403, %v1388
    %v1405 = vadd.f32 %v1404, %v1392
    %v1406 = vadd.f32 %v1405, %v1396
    %v1407 = vrot.slane %v1406, 4
    %v1408 = vadd.f32 %v1406, %v1407
    %v1409 = vrot.slane %v1408, 2
    %v1410 = vadd.f32 %v1408, %v1409
    %v1411 = vrot.slane %v1410, 1
    %v1412 = vadd.f32 %v1410, %v1411
    %v1413 = vadd.f32 %v1369, %v1373
    %v1414 = vadd.f32 %v1413, %v1377
    %v1415 = vadd.f32 %v1414, %v1381
    %v1416 = vadd.f32 %v1415, %v1385
    %v1417 = vadd.f32 %v1416, %v1389
    %v1418 = vadd.f32 %v1417, %v1393
    %v1419 = vadd.f32 %v1418, %v1397
    %v1420 = vrot.slane %v1419, 4
    %v1421 = vadd.f32 %v1419, %v1420
    %v1422 = vrot.slane %v1421, 2
    %v1423 = vadd.f32 %v1421, %v1422
    %v1424 = vrot.slane %v1423, 1
    %v1425 = vadd.f32 %v1423, %v1424
    %v1426 = vadd.f32 %v1370, %v1374
    %v1427 = vadd.f32 %v1426, %v1378
    %v1428 = vadd.f32 %v1427, %v1382
    %v1429 = vadd.f32 %v1428, %v1386
    %v1430 = vadd.f32 %v1429, %v1390
    %v1431 = vadd.f32 %v1430, %v1394
    %v1432 = vadd.f32 %v1431, %v1398
    %v1433 = vrot.slane %v1432, 4
    %v1434 = vadd.f32 %v1432, %v1433
    %v1435 = vrot.slane %v1434, 2
    %v1436 = vadd.f32 %v1434, %v1435
    %v1437 = vrot.slane %v1436, 1
    %v1438 = vadd.f32 %v1436, %v1437
    %v1439 = vadd.f32 %v1371, %v1375
    %v1440 = vadd.f32 %v1439, %v1379
    %v1441 = vadd.f32 %v1440, %v1383
    %v1442 = vadd.f32 %v1441, %v1387
    %v1443 = vadd.f32 %v1442, %v1391
    %v1444 = vadd.f32 %v1443, %v1395
    %v1445 = vadd.f32 %v1444, %v1399
    %v1446 = vrot.slane %v1445, 4
    %v1447 = vadd.f32 %v1445, %v1446
    %v1448 = vrot.slane %v1447, 2
    %v1449 = vadd.f32 %v1447, %v1448
    %v1450 = vrot.slane %v1449, 1
    %v1451 = vadd.f32 %v1449, %v1450
    %v1452 = vmul.f32 %v1412, 0.015625
    %v1453 = vmul.f32 %v1425, 0.015625
    %v1454 = vmul.f32 %v1438, 0.015625
    %v1455 = vmul.f32 %v1451, 0.015625
    %v1456 = vld [vmem:[%s9] sm:$0xf]
    %v1457 = vadd.f32 %v1452, 1e-05
    %v1458 = vadd.f32 %v1453, 1e-05
    %v1459 = vadd.f32 %v1454, 1e-05
    %v1460 = vadd.f32 %v1455, 1e-05
    %v1461 = vrsqrt.pop %v1457
    %v1462 = vrsqrt.pop %v1458
    %v1463 = vrsqrt.pop %v1459
    %v1464 = vrsqrt.pop %v1460
    %v1469 = vcombine.low %v1461, %v1462
    %v1470 = vcombine.low %v1463, %v1464
    %v1472 = vunpack.c.l.s4 1966171168
    %v1473 = vunpack.c.0.s8 %v1472
    %v1474 = vlaneseq
    %v1475 = vshrl.u32 %v1474, 7
    %v1476 = vsub.s32 %v1473, %v1475
    %v1477 = vrot.slane %v1469, %v1476
    %v1479 = vunpack.c.l.s4 1966171168
    %v1480 = vunpack.c.0.s8 %v1479
    %v1481 = vlaneseq
    %v1482 = vshrl.u32 %v1481, 7
    %v1483 = vsub.s32 %v1480, %v1482
    %v1484 = vrot.slane %v1470, %v1483
    %v1485 = vcombine.low %v1477, %v1484
    %v1487 = vunpack.c.l.s4 1966171168
    %v1488 = vunpack.c.0.s8 %v1487
    %v1489 = vlaneseq
    %v1490 = vshrl.u32 %v1489, 7
    %v1491 = vsub.s32 %v1488, %v1490
    %v1492 = vrot.slane %v1485, %v1491
    %v1494 = vmul.f32 %v1456, %v1492
    %v1496 = vlaneseq
    %v1497 = vshrl.u32 %v1496, 7
    %v1498 = vsub.s32 0, %v1497
    %v1499 = vrot.slane %v1494, %v1498
    %v1500 = vlaneseq
    %v1501 = vshrl.u32 %v1500, 7
    %v1502 = vsub.s32 1, %v1501
    %v1503 = vrot.slane %v1494, %v1502
    %v1504 = vlaneseq
    %v1505 = vshrl.u32 %v1504, 7
    %v1506 = vsub.s32 2, %v1505
    %v1507 = vrot.slane %v1494, %v1506
    %v1508 = vlaneseq
    %v1509 = vshrl.u32 %v1508, 7
    %v1510 = vsub.s32 3, %v1509
    %v1511 = vrot.slane %v1494, %v1510
    %v1516 = vmul.f32 %v1336, %v1499
    %v1517 = vmul.f32 %v1337, %v1503
    %v1518 = vmul.f32 %v1338, %v1507
    %v1519 = vmul.f32 %v1339, %v1511
    %v1520 = vmul.f32 %v1340, %v1499
    %v1521 = vmul.f32 %v1341, %v1503
    %v1522 = vmul.f32 %v1342, %v1507
    %v1523 = vmul.f32 %v1343, %v1511
    %v1524 = vmul.f32 %v1344, %v1499
    %v1525 = vmul.f32 %v1345, %v1503
    %v1526 = vmul.f32 %v1346, %v1507
    %v1527 = vmul.f32 %v1347, %v1511
    %v1528 = vmul.f32 %v1348, %v1499
    %v1529 = vmul.f32 %v1349, %v1503
    %v1530 = vmul.f32 %v1350, %v1507
    %v1531 = vmul.f32 %v1351, %v1511
    %v1532 = vmul.f32 %v1352, %v1499
    %v1533 = vmul.f32 %v1353, %v1503
    %v1534 = vmul.f32 %v1354, %v1507
    %v1535 = vmul.f32 %v1355, %v1511
    %v1536 = vmul.f32 %v1356, %v1499
    %v1537 = vmul.f32 %v1357, %v1503
    %v1538 = vmul.f32 %v1358, %v1507
    %v1539 = vmul.f32 %v1359, %v1511
    %v1540 = vmul.f32 %v1360, %v1499
    %v1541 = vmul.f32 %v1361, %v1503
    %v1542 = vmul.f32 %v1362, %v1507
    %v1543 = vmul.f32 %v1363, %v1511
    %v1544 = vmul.f32 %v1364, %v1499
    %v1545 = vmul.f32 %v1365, %v1503
    %v1546 = vmul.f32 %v1366, %v1507
    %v1547 = vmul.f32 %v1367, %v1511
    %v1548 = vld [vmem:[#allocation13] sm:$0xf]
    %v1550 = vlaneseq
    %v1551 = vshrl.u32 %v1550, 7
    %v1552 = vsub.s32 0, %v1551
    %v1553 = vrot.slane %v1548, %v1552
    %v1554 = vlaneseq
    %v1555 = vshrl.u32 %v1554, 7
    %v1556 = vsub.s32 1, %v1555
    %v1557 = vrot.slane %v1548, %v1556
    %v1558 = vlaneseq
    %v1559 = vshrl.u32 %v1558, 7
    %v1560 = vsub.s32 2, %v1559
    %v1561 = vrot.slane %v1548, %v1560
    %v1562 = vlaneseq
    %v1563 = vshrl.u32 %v1562, 7
    %v1564 = vsub.s32 3, %v1563
    %v1565 = vrot.slane %v1548, %v1564
    %v1570 = vadd.f32 %v1516, %v1553
    %v1571 = vadd.f32 %v1517, %v1557
    %v1572 = vadd.f32 %v1518, %v1561
    %v1573 = vadd.f32 %v1519, %v1565
    %v1574 = vadd.f32 %v1520, %v1553
    %v1575 = vadd.f32 %v1521, %v1557
    %v1576 = vadd.f32 %v1522, %v1561
    %v1577 = vadd.f32 %v1523, %v1565
    %v1578 = vadd.f32 %v1524, %v1553
    %v1579 = vadd.f32 %v1525, %v1557
    %v1580 = vadd.f32 %v1526, %v1561
    %v1581 = vadd.f32 %v1527, %v1565
    %v1582 = vadd.f32 %v1528, %v1553
    %v1583 = vadd.f32 %v1529, %v1557
    %v1584 = vadd.f32 %v1530, %v1561
    %v1585 = vadd.f32 %v1531, %v1565
    %v1586 = vadd.f32 %v1532, %v1553
    %v1587 = vadd.f32 %v1533, %v1557
    %v1588 = vadd.f32 %v1534, %v1561
    %v1589 = vadd.f32 %v1535, %v1565
    %v1590 = vadd.f32 %v1536, %v1553
    %v1591 = vadd.f32 %v1537, %v1557
    %v1592 = vadd.f32 %v1538, %v1561
    %v1593 = vadd.f32 %v1539, %v1565
    %v1594 = vadd.f32 %v1540, %v1553
    %v1595 = vadd.f32 %v1541, %v1557
    %v1596 = vadd.f32 %v1542, %v1561
    %v1597 = vadd.f32 %v1543, %v1565
    %v1598 = vadd.f32 %v1544, %v1553
    %v1599 = vadd.f32 %v1545, %v1557
    %v1600 = vadd.f32 %v1546, %v1561
    %v1601 = vadd.f32 %v1547, %v1565
    %v1602 = vmax.f32 %v1570, 0.0
    %v1603 = vmax.f32 %v1571, 0.0
    %v1604 = vmax.f32 %v1572, 0.0
    %v1605 = vmax.f32 %v1573, 0.0
    %v1606 = vmax.f32 %v1574, 0.0
    %v1607 = vmax.f32 %v1575, 0.0
    %v1608 = vmax.f32 %v1576, 0.0
    %v1609 = vmax.f32 %v1577, 0.0
    %v1610 = vmax.f32 %v1578, 0.0
    %v1611 = vmax.f32 %v1579, 0.0
    %v1612 = vmax.f32 %v1580, 0.0
    %v1613 = vmax.f32 %v1581, 0.0
    %v1614 = vmax.f32 %v1582, 0.0
    %v1615 = vmax.f32 %v1583, 0.0
    %v1616 = vmax.f32 %v1584, 0.0
    %v1617 = vmax.f32 %v1585, 0.0
    %v1618 = vmax.f32 %v1586, 0.0
    %v1619 = vmax.f32 %v1587, 0.0
    %v1620 = vmax.f32 %v1588, 0.0
    %v1621 = vmax.f32 %v1589, 0.0
    %v1622 = vmax.f32 %v1590, 0.0
    %v1623 = vmax.f32 %v1591, 0.0
    %v1624 = vmax.f32 %v1592, 0.0
    %v1625 = vmax.f32 %v1593, 0.0
    %v1626 = vmax.f32 %v1594, 0.0
    %v1627 = vmax.f32 %v1595, 0.0
    %v1628 = vmax.f32 %v1596, 0.0
    %v1629 = vmax.f32 %v1597, 0.0
    %v1630 = vmax.f32 %v1598, 0.0
    %v1631 = vmax.f32 %v1599, 0.0
    %v1632 = vmax.f32 %v1600, 0.0
    %v1633 = vmax.f32 %v1601, 0.0
    %v1634 = vpack.c.bf16 %v1606, %v1602
    %v1635 = vpack.c.bf16 %v1607, %v1603
    %v1636 = vpack.c.bf16 %v1608, %v1604
    %v1637 = vpack.c.bf16 %v1609, %v1605
    %v1638 = vpack.c.bf16 %v1614, %v1610
    %v1639 = vpack.c.bf16 %v1615, %v1611
    %v1640 = vpack.c.bf16 %v1616, %v1612
    %v1641 = vpack.c.bf16 %v1617, %v1613
    %v1642 = vpack.c.bf16 %v1622, %v1618
    %v1643 = vpack.c.bf16 %v1623, %v1619
    %v1644 = vpack.c.bf16 %v1624, %v1620
    %v1645 = vpack.c.bf16 %v1625, %v1621
    %v1646 = vpack.c.bf16 %v1630, %v1626
    %v1647 = vpack.c.bf16 %v1631, %v1627
    %v1648 = vpack.c.bf16 %v1632, %v1628
    %v1649 = vpack.c.bf16 %v1633, %v1629
    %v1650 = vld [vmem:[#allocation15] sm:$0xff]
    %v1651 = vld [vmem:[#allocation15 + $0x8] sm:$0xff]
    %v1652 = vld [vmem:[#allocation15 + $0x10] sm:$0xff]
    %v1653 = vld [vmem:[#allocation15 + $0x18] sm:$0xff]
    %v1654 = vld [vmem:[#allocation15 + $0x20] sm:$0xff]
    %v1655 = vld [vmem:[#allocation15 + $0x28] sm:$0xff]
    %v1656 = vld [vmem:[#allocation15 + $0x30] sm:$0xff]
    %v1657 = vld [vmem:[#allocation15 + $0x38] sm:$0xff]
    %v1658 = vld [vmem:[#allocation15 + $0x40] sm:$0xff]
    %v1659 = vld [vmem:[#allocation15 + $0x48] sm:$0xff]
    %v1660 = vld [vmem:[#allocation15 + $0x50] sm:$0xff]
    %v1661 = vld [vmem:[#allocation15 + $0x58] sm:$0xff]
    %v1662 = vld [vmem:[#allocation15 + $0x60] sm:$0xff]
    %v1663 = vld [vmem:[#allocation15 + $0x68] sm:$0xff]
    %v1664 = vld [vmem:[#allocation15 + $0x70] sm:$0xff]
    %v1665 = vld [vmem:[#allocation15 + $0x78] sm:$0xff]
    %v1666 = vld [vmem:[#allocation15 + $0x80] sm:$0xff]
    %v1667 = vld [vmem:[#allocation15 + $0x88] sm:$0xff]
    %v1668 = vld [vmem:[#allocation15 + $0x90] sm:$0xff]
    %v1669 = vld [vmem:[#allocation15 + $0x98] sm:$0xff]
    %v1670 = vld [vmem:[#allocation15 + $0xa0] sm:$0xff]
    %v1671 = vld [vmem:[#allocation15 + $0xa8] sm:$0xff]
    %v1672 = vld [vmem:[#allocation15 + $0xb0] sm:$0xff]
    %v1673 = vld [vmem:[#allocation15 + $0xb8] sm:$0xff]
    %v1674 = vld [vmem:[#allocation15 + $0xc0] sm:$0xff]
    %v1675 = vld [vmem:[#allocation15 + $0xc8] sm:$0xff]
    %v1676 = vld [vmem:[#allocation15 + $0xd0] sm:$0xff]
    %v1677 = vld [vmem:[#allocation15 + $0xd8] sm:$0xff]
    %v1678 = vld [vmem:[#allocation15 + $0xe0] sm:$0xff]
    %v1679 = vld [vmem:[#allocation15 + $0xe8] sm:$0xff]
    %v1680 = vld [vmem:[#allocation15 + $0xf0] sm:$0xff]
    %v1681 = vld [vmem:[#allocation15 + $0xf8] sm:$0xff]
    %v1682 = vld [vmem:[#allocation15 + $0x100] sm:$0xff]
    %v1683 = vld [vmem:[#allocation15 + $0x108] sm:$0xff]
    %v1684 = vld [vmem:[#allocation15 + $0x110] sm:$0xff]
    %v1685 = vld [vmem:[#allocation15 + $0x118] sm:$0xff]
    %v1686 = vld [vmem:[#allocation15 + $0x120] sm:$0xff]
    %v1687 = vld [vmem:[#allocation15 + $0x128] sm:$0xff]
    %v1688 = vld [vmem:[#allocation15 + $0x130] sm:$0xff]
    %v1689 = vld [vmem:[#allocation15 + $0x138] sm:$0xff]
    %v1690 = vld [vmem:[#allocation15 + $0x140] sm:$0xff]
    %v1691 = vld [vmem:[#allocation15 + $0x148] sm:$0xff]
    %v1692 = vld [vmem:[#allocation15 + $0x150] sm:$0xff]
    %v1693 = vld [vmem:[#allocation15 + $0x158] sm:$0xff]
    %v1694 = vld [vmem:[#allocation15 + $0x160] sm:$0xff]
    %v1695 = vld [vmem:[#allocation15 + $0x168] sm:$0xff]
    %v1696 = vld [vmem:[#allocation15 + $0x170] sm:$0xff]
    %v1697 = vld [vmem:[#allocation15 + $0x178] sm:$0xff]
    %v1698 = vld [vmem:[#allocation15 + $0x180] sm:$0xff]
    %v1699 = vld [vmem:[#allocation15 + $0x188] sm:$0xff]
    %v1700 = vld [vmem:[#allocation15 + $0x190] sm:$0xff]
    %v1701 = vld [vmem:[#allocation15 + $0x198] sm:$0xff]
    %v1702 = vld [vmem:[#allocation15 + $0x1a0] sm:$0xff]
    %v1703 = vld [vmem:[#allocation15 + $0x1a8] sm:$0xff]
    %v1704 = vld [vmem:[#allocation15 + $0x1b0] sm:$0xff]
    %v1705 = vld [vmem:[#allocation15 + $0x1b8] sm:$0xff]
    %v1706 = vld [vmem:[#allocation15 + $0x1c0] sm:$0xff]
    %v1707 = vld [vmem:[#allocation15 + $0x1c8] sm:$0xff]
    %v1708 = vld [vmem:[#allocation15 + $0x1d0] sm:$0xff]
    %v1709 = vld [vmem:[#allocation15 + $0x1d8] sm:$0xff]
    %v1710 = vld [vmem:[#allocation15 + $0x1e0] sm:$0xff]
    %v1711 = vld [vmem:[#allocation15 + $0x1e8] sm:$0xff]
    %v1712 = vld [vmem:[#allocation15 + $0x1f0] sm:$0xff]
    %v1713 = vld [vmem:[#allocation15 + $0x1f8] sm:$0xff]
    %v1714 = vld [vmem:[#allocation15 + $0x200] sm:$0xff]
    %v1715 = vld [vmem:[#allocation15 + $0x208] sm:$0xff]
    %v1716 = vld [vmem:[#allocation15 + $0x210] sm:$0xff]
    %v1717 = vld [vmem:[#allocation15 + $0x218] sm:$0xff]
    %v1718 = vld [vmem:[#allocation15 + $0x220] sm:$0xff]
    %v1719 = vld [vmem:[#allocation15 + $0x228] sm:$0xff]
    %v1720 = vld [vmem:[#allocation15 + $0x230] sm:$0xff]
    %v1721 = vld [vmem:[#allocation15 + $0x238] sm:$0xff]
    %v1722 = vld [vmem:[#allocation15 + $0x240] sm:$0xff]
    %v1723 = vld [vmem:[#allocation15 + $0x248] sm:$0xff]
    %v1724 = vld [vmem:[#allocation15 + $0x250] sm:$0xff]
    %v1725 = vld [vmem:[#allocation15 + $0x258] sm:$0xff]
    %v1726 = vld [vmem:[#allocation15 + $0x260] sm:$0xff]
    %v1727 = vld [vmem:[#allocation15 + $0x268] sm:$0xff]
    %v1728 = vld [vmem:[#allocation15 + $0x270] sm:$0xff]
    %v1729 = vld [vmem:[#allocation15 + $0x278] sm:$0xff]
    %v1730 = vld [vmem:[#allocation15 + $0x280] sm:$0xff]
    %v1731 = vld [vmem:[#allocation15 + $0x288] sm:$0xff]
    %v1732 = vld [vmem:[#allocation15 + $0x290] sm:$0xff]
    %v1733 = vld [vmem:[#allocation15 + $0x298] sm:$0xff]
    %v1734 = vld [vmem:[#allocation15 + $0x2a0] sm:$0xff]
    %v1735 = vld [vmem:[#allocation15 + $0x2a8] sm:$0xff]
    %v1736 = vld [vmem:[#allocation15 + $0x2b0] sm:$0xff]
    %v1737 = vld [vmem:[#allocation15 + $0x2b8] sm:$0xff]
    %v1738 = vld [vmem:[#allocation15 + $0x2c0] sm:$0xff]
    %v1739 = vld [vmem:[#allocation15 + $0x2c8] sm:$0xff]
    %v1740 = vld [vmem:[#allocation15 + $0x2d0] sm:$0xff]
    %v1741 = vld [vmem:[#allocation15 + $0x2d8] sm:$0xff]
    %v1742 = vld [vmem:[#allocation15 + $0x2e0] sm:$0xff]
    %v1743 = vld [vmem:[#allocation15 + $0x2e8] sm:$0xff]
    %v1744 = vld [vmem:[#allocation15 + $0x2f0] sm:$0xff]
    %v1745 = vld [vmem:[#allocation15 + $0x2f8] sm:$0xff]
    %v1746 = vld [vmem:[#allocation15 + $0x300] sm:$0xff]
    %v1747 = vld [vmem:[#allocation15 + $0x308] sm:$0xff]
    %v1748 = vld [vmem:[#allocation15 + $0x310] sm:$0xff]
    %v1749 = vld [vmem:[#allocation15 + $0x318] sm:$0xff]
    %v1750 = vld [vmem:[#allocation15 + $0x320] sm:$0xff]
    %v1751 = vld [vmem:[#allocation15 + $0x328] sm:$0xff]
    %v1752 = vld [vmem:[#allocation15 + $0x330] sm:$0xff]
    %v1753 = vld [vmem:[#allocation15 + $0x338] sm:$0xff]
    %v1754 = vld [vmem:[#allocation15 + $0x340] sm:$0xff]
    %v1755 = vld [vmem:[#allocation15 + $0x348] sm:$0xff]
    %v1756 = vld [vmem:[#allocation15 + $0x350] sm:$0xff]
    %v1757 = vld [vmem:[#allocation15 + $0x358] sm:$0xff]
    %v1758 = vld [vmem:[#allocation15 + $0x360] sm:$0xff]
    %v1759 = vld [vmem:[#allocation15 + $0x368] sm:$0xff]
    %v1760 = vld [vmem:[#allocation15 + $0x370] sm:$0xff]
    %v1761 = vld [vmem:[#allocation15 + $0x378] sm:$0xff]
    %v1762 = vld [vmem:[#allocation15 + $0x380] sm:$0xff]
    %v1763 = vld [vmem:[#allocation15 + $0x388] sm:$0xff]
    %v1764 = vld [vmem:[#allocation15 + $0x390] sm:$0xff]
    %v1765 = vld [vmem:[#allocation15 + $0x398] sm:$0xff]
    %v1766 = vld [vmem:[#allocation15 + $0x3a0] sm:$0xff]
    %v1767 = vld [vmem:[#allocation15 + $0x3a8] sm:$0xff]
    %v1768 = vld [vmem:[#allocation15 + $0x3b0] sm:$0xff]
    %v1769 = vld [vmem:[#allocation15 + $0x3b8] sm:$0xff]
    %v1770 = vld [vmem:[#allocation15 + $0x3c0] sm:$0xff]
    %v1771 = vld [vmem:[#allocation15 + $0x3c8] sm:$0xff]
    %v1772 = vld [vmem:[#allocation15 + $0x3d0] sm:$0xff]
    %v1773 = vld [vmem:[#allocation15 + $0x3d8] sm:$0xff]
    %v1774 = vld [vmem:[#allocation15 + $0x3e0] sm:$0xff]
    %v1775 = vld [vmem:[#allocation15 + $0x3e8] sm:$0xff]
    %v1776 = vld [vmem:[#allocation15 + $0x3f0] sm:$0xff]
    %v1777 = vld [vmem:[#allocation15 + $0x3f8] sm:$0xff]
    %v1778 = vld [vmem:[#allocation15 + $0x400] sm:$0xff]
    %v1779 = vld [vmem:[#allocation15 + $0x408] sm:$0xff]
    %v1780 = vld [vmem:[#allocation15 + $0x410] sm:$0xff]
    %v1781 = vld [vmem:[#allocation15 + $0x418] sm:$0xff]
    %v1782 = vld [vmem:[#allocation15 + $0x420] sm:$0xff]
    %v1783 = vld [vmem:[#allocation15 + $0x428] sm:$0xff]
    %v1784 = vld [vmem:[#allocation15 + $0x430] sm:$0xff]
    %v1785 = vld [vmem:[#allocation15 + $0x438] sm:$0xff]
    %v1786 = vld [vmem:[#allocation15 + $0x440] sm:$0xff]
    %v1787 = vld [vmem:[#allocation15 + $0x448] sm:$0xff]
    %v1788 = vld [vmem:[#allocation15 + $0x450] sm:$0xff]
    %v1789 = vld [vmem:[#allocation15 + $0x458] sm:$0xff]
    %v1790 = vld [vmem:[#allocation15 + $0x460] sm:$0xff]
    %v1791 = vld [vmem:[#allocation15 + $0x468] sm:$0xff]
    %v1792 = vld [vmem:[#allocation15 + $0x470] sm:$0xff]
    %v1793 = vld [vmem:[#allocation15 + $0x478] sm:$0xff]
    %v1794 = vld [vmem:[#allocation15 + $0x480] sm:$0xff]
    %v1795 = vld [vmem:[#allocation15 + $0x488] sm:$0xff]
    %v1796 = vld [vmem:[#allocation15 + $0x490] sm:$0xff]
    %v1797 = vld [vmem:[#allocation15 + $0x498] sm:$0xff]
    %v1798 = vld [vmem:[#allocation15 + $0x4a0] sm:$0xff]
    %v1799 = vld [vmem:[#allocation15 + $0x4a8] sm:$0xff]
    %v1800 = vld [vmem:[#allocation15 + $0x4b0] sm:$0xff]
    %v1801 = vld [vmem:[#allocation15 + $0x4b8] sm:$0xff]
    %v1802 = vld [vmem:[#allocation15 + $0x4c0] sm:$0xff]
    %v1803 = vld [vmem:[#allocation15 + $0x4c8] sm:$0xff]
    %v1804 = vld [vmem:[#allocation15 + $0x4d0] sm:$0xff]
    %v1805 = vld [vmem:[#allocation15 + $0x4d8] sm:$0xff]
    %v1806 = vld [vmem:[#allocation15 + $0x4e0] sm:$0xff]
    %v1807 = vld [vmem:[#allocation15 + $0x4e8] sm:$0xff]
    %v1808 = vld [vmem:[#allocation15 + $0x4f0] sm:$0xff]
    %v1809 = vld [vmem:[#allocation15 + $0x4f8] sm:$0xff]
    %v1810 = vld [vmem:[#allocation15 + $0x500] sm:$0xff]
    %v1811 = vld [vmem:[#allocation15 + $0x508] sm:$0xff]
    %v1812 = vld [vmem:[#allocation15 + $0x510] sm:$0xff]
    %v1813 = vld [vmem:[#allocation15 + $0x518] sm:$0xff]
    %v1814 = vld [vmem:[#allocation15 + $0x520] sm:$0xff]
    %v1815 = vld [vmem:[#allocation15 + $0x528] sm:$0xff]
    %v1816 = vld [vmem:[#allocation15 + $0x530] sm:$0xff]
    %v1817 = vld [vmem:[#allocation15 + $0x538] sm:$0xff]
    %v1818 = vld [vmem:[#allocation15 + $0x540] sm:$0xff]
    %v1819 = vld [vmem:[#allocation15 + $0x548] sm:$0xff]
    %v1820 = vld [vmem:[#allocation15 + $0x550] sm:$0xff]
    %v1821 = vld [vmem:[#allocation15 + $0x558] sm:$0xff]
    %v1822 = vld [vmem:[#allocation15 + $0x560] sm:$0xff]
    %v1823 = vld [vmem:[#allocation15 + $0x568] sm:$0xff]
    %v1824 = vld [vmem:[#allocation15 + $0x570] sm:$0xff]
    %v1825 = vld [vmem:[#allocation15 + $0x578] sm:$0xff]
    %v1826 = vld [vmem:[#allocation15 + $0x580] sm:$0xff]
    %v1827 = vld [vmem:[#allocation15 + $0x588] sm:$0xff]
    %v1828 = vld [vmem:[#allocation15 + $0x590] sm:$0xff]
    %v1829 = vld [vmem:[#allocation15 + $0x598] sm:$0xff]
    %v1830 = vld [vmem:[#allocation15 + $0x5a0] sm:$0xff]
    %v1831 = vld [vmem:[#allocation15 + $0x5a8] sm:$0xff]
    %v1832 = vld [vmem:[#allocation15 + $0x5b0] sm:$0xff]
    %v1833 = vld [vmem:[#allocation15 + $0x5b8] sm:$0xff]
    %v1834 = vld [vmem:[#allocation15 + $0x5c0] sm:$0xff]
    %v1835 = vld [vmem:[#allocation15 + $0x5c8] sm:$0xff]
    %v1836 = vld [vmem:[#allocation15 + $0x5d0] sm:$0xff]
    %v1837 = vld [vmem:[#allocation15 + $0x5d8] sm:$0xff]
    %v1838 = vld [vmem:[#allocation15 + $0x5e0] sm:$0xff]
    %v1839 = vld [vmem:[#allocation15 + $0x5e8] sm:$0xff]
    %v1840 = vld [vmem:[#allocation15 + $0x5f0] sm:$0xff]
    %v1841 = vld [vmem:[#allocation15 + $0x5f8] sm:$0xff]
    %v1842 = vld [vmem:[#allocation15 + $0x600] sm:$0xff]
    %v1843 = vld [vmem:[#allocation15 + $0x608] sm:$0xff]
    %v1844 = vld [vmem:[#allocation15 + $0x610] sm:$0xff]
    %v1845 = vld [vmem:[#allocation15 + $0x618] sm:$0xff]
    %v1846 = vld [vmem:[#allocation15 + $0x620] sm:$0xff]
    %v1847 = vld [vmem:[#allocation15 + $0x628] sm:$0xff]
    %v1848 = vld [vmem:[#allocation15 + $0x630] sm:$0xff]
    %v1849 = vld [vmem:[#allocation15 + $0x638] sm:$0xff]
    %v1850 = vld [vmem:[#allocation15 + $0x640] sm:$0xff]
    %v1851 = vld [vmem:[#allocation15 + $0x648] sm:$0xff]
    %v1852 = vld [vmem:[#allocation15 + $0x650] sm:$0xff]
    %v1853 = vld [vmem:[#allocation15 + $0x658] sm:$0xff]
    %v1854 = vld [vmem:[#allocation15 + $0x660] sm:$0xff]
    %v1855 = vld [vmem:[#allocation15 + $0x668] sm:$0xff]
    %v1856 = vld [vmem:[#allocation15 + $0x670] sm:$0xff]
    %v1857 = vld [vmem:[#allocation15 + $0x678] sm:$0xff]
    %v1858 = vld [vmem:[#allocation15 + $0x680] sm:$0xff]
    %v1859 = vld [vmem:[#allocation15 + $0x688] sm:$0xff]
    %v1860 = vld [vmem:[#allocation15 + $0x690] sm:$0xff]
    %v1861 = vld [vmem:[#allocation15 + $0x698] sm:$0xff]
    %v1862 = vld [vmem:[#allocation15 + $0x6a0] sm:$0xff]
    %v1863 = vld [vmem:[#allocation15 + $0x6a8] sm:$0xff]
    %v1864 = vld [vmem:[#allocation15 + $0x6b0] sm:$0xff]
    %v1865 = vld [vmem:[#allocation15 + $0x6b8] sm:$0xff]
    %v1866 = vld [vmem:[#allocation15 + $0x6c0] sm:$0xff]
    %v1867 = vld [vmem:[#allocation15 + $0x6c8] sm:$0xff]
    %v1868 = vld [vmem:[#allocation15 + $0x6d0] sm:$0xff]
    %v1869 = vld [vmem:[#allocation15 + $0x6d8] sm:$0xff]
    %v1870 = vld [vmem:[#allocation15 + $0x6e0] sm:$0xff]
    %v1871 = vld [vmem:[#allocation15 + $0x6e8] sm:$0xff]
    %v1872 = vld [vmem:[#allocation15 + $0x6f0] sm:$0xff]
    %v1873 = vld [vmem:[#allocation15 + $0x6f8] sm:$0xff]
    %v1874 = vld [vmem:[#allocation15 + $0x700] sm:$0xff]
    %v1875 = vld [vmem:[#allocation15 + $0x708] sm:$0xff]
    %v1876 = vld [vmem:[#allocation15 + $0x710] sm:$0xff]
    %v1877 = vld [vmem:[#allocation15 + $0x718] sm:$0xff]
    %v1878 = vld [vmem:[#allocation15 + $0x720] sm:$0xff]
    %v1879 = vld [vmem:[#allocation15 + $0x728] sm:$0xff]
    %v1880 = vld [vmem:[#allocation15 + $0x730] sm:$0xff]
    %v1881 = vld [vmem:[#allocation15 + $0x738] sm:$0xff]
    %v1882 = vld [vmem:[#allocation15 + $0x740] sm:$0xff]
    %v1883 = vld [vmem:[#allocation15 + $0x748] sm:$0xff]
    %v1884 = vld [vmem:[#allocation15 + $0x750] sm:$0xff]
    %v1885 = vld [vmem:[#allocation15 + $0x758] sm:$0xff]
    %v1886 = vld [vmem:[#allocation15 + $0x760] sm:$0xff]
    %v1887 = vld [vmem:[#allocation15 + $0x768] sm:$0xff]
    %v1888 = vld [vmem:[#allocation15 + $0x770] sm:$0xff]
    %v1889 = vld [vmem:[#allocation15 + $0x778] sm:$0xff]
    %v1890 = vld [vmem:[#allocation15 + $0x780] sm:$0xff]
    %v1891 = vld [vmem:[#allocation15 + $0x788] sm:$0xff]
    %v1892 = vld [vmem:[#allocation15 + $0x790] sm:$0xff]
    %v1893 = vld [vmem:[#allocation15 + $0x798] sm:$0xff]
    %v1894 = vld [vmem:[#allocation15 + $0x7a0] sm:$0xff]
    %v1895 = vld [vmem:[#allocation15 + $0x7a8] sm:$0xff]
    %v1896 = vld [vmem:[#allocation15 + $0x7b0] sm:$0xff]
    %v1897 = vld [vmem:[#allocation15 + $0x7b8] sm:$0xff]
    %v1898 = vld [vmem:[#allocation15 + $0x7c0] sm:$0xff]
    %v1899 = vld [vmem:[#allocation15 + $0x7c8] sm:$0xff]
    %v1900 = vld [vmem:[#allocation15 + $0x7d0] sm:$0xff]
    %v1901 = vld [vmem:[#allocation15 + $0x7d8] sm:$0xff]
    %v1902 = vld [vmem:[#allocation15 + $0x7e0] sm:$0xff]
    %v1903 = vld [vmem:[#allocation15 + $0x7e8] sm:$0xff]
    %v1904 = vld [vmem:[#allocation15 + $0x7f0] sm:$0xff]
    %v1905 = vld [vmem:[#allocation15 + $0x7f8] sm:$0xff]
    %v1906 = vld [vmem:[%s12] sm:$0xff]
    %v1908 = vlaneseq
    %v1909 = vshrl.u32 %v1908, 7
    %v1910 = vsub.s32 0, %v1909
    %v1911 = vrot.slane %v1906, %v1910
    %v1912 = vlaneseq
    %v1913 = vshrl.u32 %v1912, 7
    %v1914 = vsub.s32 1, %v1913
    %v1915 = vrot.slane %v1906, %v1914
    %v1916 = vlaneseq
    %v1917 = vshrl.u32 %v1916, 7
    %v1918 = vsub.s32 2, %v1917
    %v1919 = vrot.slane %v1906, %v1918
    %v1920 = vlaneseq
    %v1921 = vshrl.u32 %v1920, 7
    %v1922 = vsub.s32 3, %v1921
    %v1923 = vrot.slane %v1906, %v1922
    %v1924 = vlaneseq
    %v1925 = vshrl.u32 %v1924, 7
    %v1926 = vsub.s32 4, %v1925
    %v1927 = vrot.slane %v1906, %v1926
    %v1928 = vlaneseq
    %v1929 = vshrl.u32 %v1928, 7
    %v1930 = vsub.s32 5, %v1929
    %v1931 = vrot.slane %v1906, %v1930
    %v1932 = vlaneseq
    %v1933 = vshrl.u32 %v1932, 7
    %v1934 = vsub.s32 6, %v1933
    %v1935 = vrot.slane %v1906, %v1934
    %v1936 = vlaneseq
    %v1937 = vshrl.u32 %v1936, 7
    %v1938 = vsub.s32 7, %v1937
    %v1939 = vrot.slane %v1906, %v1938
    %v2204 = vunpack.c.l.b16 %v1650
    %v2205 = vunpack.c.h.b16 %v1650
    %v2206 = vunpack.c.l.b16 %v1651
    %v2207 = vunpack.c.h.b16 %v1651
    %v2208 = vunpack.c.l.b16 %v1652
    %v2209 = vunpack.c.h.b16 %v1652
    %v2210 = vunpack.c.l.b16 %v1653
    %v2211 = vunpack.c.h.b16 %v1653
    %v2212 = vunpack.c.l.b16 %v1654
    %v2213 = vunpack.c.h.b16 %v1654
    %v2214 = vunpack.c.l.b16 %v1655
    %v2215 = vunpack.c.h.b16 %v1655
    %v2216 = vunpack.c.l.b16 %v1656
    %v2217 = vunpack.c.h.b16 %v1656
    %v2218 = vunpack.c.l.b16 %v1657
    %v2219 = vunpack.c.h.b16 %v1657
    %v2220 = vunpack.c.l.b16 %v1658
    %v2221 = vunpack.c.h.b16 %v1658
    %v2222 = vunpack.c.l.b16 %v1659
    %v2223 = vunpack.c.h.b16 %v1659
    %v2224 = vunpack.c.l.b16 %v1660
    %v2225 = vunpack.c.h.b16 %v1660
    %v2226 = vunpack.c.l.b16 %v1661
    %v2227 = vunpack.c.h.b16 %v1661
    %v2228 = vunpack.c.l.b16 %v1662
    %v2229 = vunpack.c.h.b16 %v1662
    %v2230 = vunpack.c.l.b16 %v1663
    %v2231 = vunpack.c.h.b16 %v1663
    %v2232 = vunpack.c.l.b16 %v1664
    %v2233 = vunpack.c.h.b16 %v1664
    %v2234 = vunpack.c.l.b16 %v1665
    %v2235 = vunpack.c.h.b16 %v1665
    %v2236 = vunpack.c.l.b16 %v1666
    %v2237 = vunpack.c.h.b16 %v1666
    %v2238 = vunpack.c.l.b16 %v1667
    %v2239 = vunpack.c.h.b16 %v1667
    %v2240 = vunpack.c.l.b16 %v1668
    %v2241 = vunpack.c.h.b16 %v1668
    %v2242 = vunpack.c.l.b16 %v1669
    %v2243 = vunpack.c.h.b16 %v1669
    %v2244 = vunpack.c.l.b16 %v1670
    %v2245 = vunpack.c.h.b16 %v1670
    %v2246 = vunpack.c.l.b16 %v1671
    %v2247 = vunpack.c.h.b16 %v1671
    %v2248 = vunpack.c.l.b16 %v1672
    %v2249 = vunpack.c.h.b16 %v1672
    %v2250 = vunpack.c.l.b16 %v1673
    %v2251 = vunpack.c.h.b16 %v1673
    %v2252 = vunpack.c.l.b16 %v1674
    %v2253 = vunpack.c.h.b16 %v1674
    %v2254 = vunpack.c.l.b16 %v1675
    %v2255 = vunpack.c.h.b16 %v1675
    %v2256 = vunpack.c.l.b16 %v1676
    %v2257 = vunpack.c.h.b16 %v1676
    %v2258 = vunpack.c.l.b16 %v1677
    %v2259 = vunpack.c.h.b16 %v1677
    %v2260 = vunpack.c.l.b16 %v1678
    %v2261 = vunpack.c.h.b16 %v1678
    %v2262 = vunpack.c.l.b16 %v1679
    %v2263 = vunpack.c.h.b16 %v1679
    %v2264 = vunpack.c.l.b16 %v1680
    %v2265 = vunpack.c.h.b16 %v1680
    %v2266 = vunpack.c.l.b16 %v1681
    %v2267 = vunpack.c.h.b16 %v1681
    %v2268 = vunpack.c.l.b16 %v1682
    %v2269 = vunpack.c.h.b16 %v1682
    %v2270 = vunpack.c.l.b16 %v1683
    %v2271 = vunpack.c.h.b16 %v1683
    %v2272 = vunpack.c.l.b16 %v1684
    %v2273 = vunpack.c.h.b16 %v1684
    %v2274 = vunpack.c.l.b16 %v1685
    %v2275 = vunpack.c.h.b16 %v1685
    %v2276 = vunpack.c.l.b16 %v1686
    %v2277 = vunpack.c.h.b16 %v1686
    %v2278 = vunpack.c.l.b16 %v1687
    %v2279 = vunpack.c.h.b16 %v1687
    %v2280 = vunpack.c.l.b16 %v1688
    %v2281 = vunpack.c.h.b16 %v1688
    %v2282 = vunpack.c.l.b16 %v1689
    %v2283 = vunpack.c.h.b16 %v1689
    %v2284 = vunpack.c.l.b16 %v1690
    %v2285 = vunpack.c.h.b16 %v1690
    %v2286 = vunpack.c.l.b16 %v1691
    %v2287 = vunpack.c.h.b16 %v1691
    %v2288 = vunpack.c.l.b16 %v1692
    %v2289 = vunpack.c.h.b16 %v1692
    %v2290 = vunpack.c.l.b16 %v1693
    %v2291 = vunpack.c.h.b16 %v1693
    %v2292 = vunpack.c.l.b16 %v1694
    %v2293 = vunpack.c.h.b16 %v1694
    %v2294 = vunpack.c.l.b16 %v1695
    %v2295 = vunpack.c.h.b16 %v1695
    %v2296 = vunpack.c.l.b16 %v1696
    %v2297 = vunpack.c.h.b16 %v1696
    %v2298 = vunpack.c.l.b16 %v1697
    %v2299 = vunpack.c.h.b16 %v1697
    %v2300 = vunpack.c.l.b16 %v1698
    %v2301 = vunpack.c.h.b16 %v1698
    %v2302 = vunpack.c.l.b16 %v1699
    %v2303 = vunpack.c.h.b16 %v1699
    %v2304 = vunpack.c.l.b16 %v1700
    %v2305 = vunpack.c.h.b16 %v1700
    %v2306 = vunpack.c.l.b16 %v1701
    %v2307 = vunpack.c.h.b16 %v1701
    %v2308 = vunpack.c.l.b16 %v1702
    %v2309 = vunpack.c.h.b16 %v1702
    %v2310 = vunpack.c.l.b16 %v1703
    %v2311 = vunpack.c.h.b16 %v1703
    %v2312 = vunpack.c.l.b16 %v1704
    %v2313 = vunpack.c.h.b16 %v1704
    %v2314 = vunpack.c.l.b16 %v1705
    %v2315 = vunpack.c.h.b16 %v1705
    %v2316 = vunpack.c.l.b16 %v1706
    %v2317 = vunpack.c.h.b16 %v1706
    %v2318 = vunpack.c.l.b16 %v1707
    %v2319 = vunpack.c.h.b16 %v1707
    %v2320 = vunpack.c.l.b16 %v1708
    %v2321 = vunpack.c.h.b16 %v1708
    %v2322 = vunpack.c.l.b16 %v1709
    %v2323 = vunpack.c.h.b16 %v1709
    %v2324 = vunpack.c.l.b16 %v1710
    %v2325 = vunpack.c.h.b16 %v1710
    %v2326 = vunpack.c.l.b16 %v1711
    %v2327 = vunpack.c.h.b16 %v1711
    %v2328 = vunpack.c.l.b16 %v1712
    %v2329 = vunpack.c.h.b16 %v1712
    %v2330 = vunpack.c.l.b16 %v1713
    %v2331 = vunpack.c.h.b16 %v1713
    %v2332 = vunpack.c.l.b16 %v1714
    %v2333 = vunpack.c.h.b16 %v1714
    %v2334 = vunpack.c.l.b16 %v1715
    %v2335 = vunpack.c.h.b16 %v1715
    %v2336 = vunpack.c.l.b16 %v1716
    %v2337 = vunpack.c.h.b16 %v1716
    %v2338 = vunpack.c.l.b16 %v1717
    %v2339 = vunpack.c.h.b16 %v1717
    %v2340 = vunpack.c.l.b16 %v1718
    %v2341 = vunpack.c.h.b16 %v1718
    %v2342 = vunpack.c.l.b16 %v1719
    %v2343 = vunpack.c.h.b16 %v1719
    %v2344 = vunpack.c.l.b16 %v1720
    %v2345 = vunpack.c.h.b16 %v1720
    %v2346 = vunpack.c.l.b16 %v1721
    %v2347 = vunpack.c.h.b16 %v1721
    %v2348 = vunpack.c.l.b16 %v1722
    %v2349 = vunpack.c.h.b16 %v1722
    %v2350 = vunpack.c.l.b16 %v1723
    %v2351 = vunpack.c.h.b16 %v1723
    %v2352 = vunpack.c.l.b16 %v1724
    %v2353 = vunpack.c.h.b16 %v1724
    %v2354 = vunpack.c.l.b16 %v1725
    %v2355 = vunpack.c.h.b16 %v1725
    %v2356 = vunpack.c.l.b16 %v1726
    %v2357 = vunpack.c.h.b16 %v1726
    %v2358 = vunpack.c.l.b16 %v1727
    %v2359 = vunpack.c.h.b16 %v1727
    %v2360 = vunpack.c.l.b16 %v1728
    %v2361 = vunpack.c.h.b16 %v1728
    %v2362 = vunpack.c.l.b16 %v1729
    %v2363 = vunpack.c.h.b16 %v1729
    %v2364 = vunpack.c.l.b16 %v1730
    %v2365 = vunpack.c.h.b16 %v1730
    %v2366 = vunpack.c.l.b16 %v1731
    %v2367 = vunpack.c.h.b16 %v1731
    %v2368 = vunpack.c.l.b16 %v1732
    %v2369 = vunpack.c.h.b16 %v1732
    %v2370 = vunpack.c.l.b16 %v1733
    %v2371 = vunpack.c.h.b16 %v1733
    %v2372 = vunpack.c.l.b16 %v1734
    %v2373 = vunpack.c.h.b16 %v1734
    %v2374 = vunpack.c.l.b16 %v1735
    %v2375 = vunpack.c.h.b16 %v1735
    %v2376 = vunpack.c.l.b16 %v1736
    %v2377 = vunpack.c.h.b16 %v1736
    %v2378 = vunpack.c.l.b16 %v1737
    %v2379 = vunpack.c.h.b16 %v1737
    %v2380 = vunpack.c.l.b16 %v1738
    %v2381 = vunpack.c.h.b16 %v1738
    %v2382 = vunpack.c.l.b16 %v1739
    %v2383 = vunpack.c.h.b16 %v1739
    %v2384 = vunpack.c.l.b16 %v1740
    %v2385 = vunpack.c.h.b16 %v1740
    %v2386 = vunpack.c.l.b16 %v1741
    %v2387 = vunpack.c.h.b16 %v1741
    %v2388 = vunpack.c.l.b16 %v1742
    %v2389 = vunpack.c.h.b16 %v1742
    %v2390 = vunpack.c.l.b16 %v1743
    %v2391 = vunpack.c.h.b16 %v1743
    %v2392 = vunpack.c.l.b16 %v1744
    %v2393 = vunpack.c.h.b16 %v1744
    %v2394 = vunpack.c.l.b16 %v1745
    %v2395 = vunpack.c.h.b16 %v1745
    %v2396 = vunpack.c.l.b16 %v1746
    %v2397 = vunpack.c.h.b16 %v1746
    %v2398 = vunpack.c.l.b16 %v1747
    %v2399 = vunpack.c.h.b16 %v1747
    %v2400 = vunpack.c.l.b16 %v1748
    %v2401 = vunpack.c.h.b16 %v1748
    %v2402 = vunpack.c.l.b16 %v1749
    %v2403 = vunpack.c.h.b16 %v1749
    %v2404 = vunpack.c.l.b16 %v1750
    %v2405 = vunpack.c.h.b16 %v1750
    %v2406 = vunpack.c.l.b16 %v1751
    %v2407 = vunpack.c.h.b16 %v1751
    %v2408 = vunpack.c.l.b16 %v1752
    %v2409 = vunpack.c.h.b16 %v1752
    %v2410 = vunpack.c.l.b16 %v1753
    %v2411 = vunpack.c.h.b16 %v1753
    %v2412 = vunpack.c.l.b16 %v1754
    %v2413 = vunpack.c.h.b16 %v1754
    %v2414 = vunpack.c.l.b16 %v1755
    %v2415 = vunpack.c.h.b16 %v1755
    %v2416 = vunpack.c.l.b16 %v1756
    %v2417 = vunpack.c.h.b16 %v1756
    %v2418 = vunpack.c.l.b16 %v1757
    %v2419 = vunpack.c.h.b16 %v1757
    %v2420 = vunpack.c.l.b16 %v1758
    %v2421 = vunpack.c.h.b16 %v1758
    %v2422 = vunpack.c.l.b16 %v1759
    %v2423 = vunpack.c.h.b16 %v1759
    %v2424 = vunpack.c.l.b16 %v1760
    %v2425 = vunpack.c.h.b16 %v1760
    %v2426 = vunpack.c.l.b16 %v1761
    %v2427 = vunpack.c.h.b16 %v1761
    %v2428 = vunpack.c.l.b16 %v1762
    %v2429 = vunpack.c.h.b16 %v1762
    %v2430 = vunpack.c.l.b16 %v1763
    %v2431 = vunpack.c.h.b16 %v1763
    %v2432 = vunpack.c.l.b16 %v1764
    %v2433 = vunpack.c.h.b16 %v1764
    %v2434 = vunpack.c.l.b16 %v1765
    %v2435 = vunpack.c.h.b16 %v1765
    %v2436 = vunpack.c.l.b16 %v1766
    %v2437 = vunpack.c.h.b16 %v1766
    %v2438 = vunpack.c.l.b16 %v1767
    %v2439 = vunpack.c.h.b16 %v1767
    %v2440 = vunpack.c.l.b16 %v1768
    %v2441 = vunpack.c.h.b16 %v1768
    %v2442 = vunpack.c.l.b16 %v1769
    %v2443 = vunpack.c.h.b16 %v1769
    %v2444 = vunpack.c.l.b16 %v1770
    %v2445 = vunpack.c.h.b16 %v1770
    %v2446 = vunpack.c.l.b16 %v1771
    %v2447 = vunpack.c.h.b16 %v1771
    %v2448 = vunpack.c.l.b16 %v1772
    %v2449 = vunpack.c.h.b16 %v1772
    %v2450 = vunpack.c.l.b16 %v1773
    %v2451 = vunpack.c.h.b16 %v1773
    %v2452 = vunpack.c.l.b16 %v1774
    %v2453 = vunpack.c.h.b16 %v1774
    %v2454 = vunpack.c.l.b16 %v1775
    %v2455 = vunpack.c.h.b16 %v1775
    %v2456 = vunpack.c.l.b16 %v1776
    %v2457 = vunpack.c.h.b16 %v1776
    %v2458 = vunpack.c.l.b16 %v1777
    %v2459 = vunpack.c.h.b16 %v1777
    %v2460 = vunpack.c.l.b16 %v1778
    %v2461 = vunpack.c.h.b16 %v1778
    %v2462 = vunpack.c.l.b16 %v1779
    %v2463 = vunpack.c.h.b16 %v1779
    %v2464 = vunpack.c.l.b16 %v1780
    %v2465 = vunpack.c.h.b16 %v1780
    %v2466 = vunpack.c.l.b16 %v1781
    %v2467 = vunpack.c.h.b16 %v1781
    %v2468 = vunpack.c.l.b16 %v1782
    %v2469 = vunpack.c.h.b16 %v1782
    %v2470 = vunpack.c.l.b16 %v1783
    %v2471 = vunpack.c.h.b16 %v1783
    %v2472 = vunpack.c.l.b16 %v1784
    %v2473 = vunpack.c.h.b16 %v1784
    %v2474 = vunpack.c.l.b16 %v1785
    %v2475 = vunpack.c.h.b16 %v1785
    %v2476 = vunpack.c.l.b16 %v1786
    %v2477 = vunpack.c.h.b16 %v1786
    %v2478 = vunpack.c.l.b16 %v1787
    %v2479 = vunpack.c.h.b16 %v1787
    %v2480 = vunpack.c.l.b16 %v1788
    %v2481 = vunpack.c.h.b16 %v1788
    %v2482 = vunpack.c.l.b16 %v1789
    %v2483 = vunpack.c.h.b16 %v1789
    %v2484 = vunpack.c.l.b16 %v1790
    %v2485 = vunpack.c.h.b16 %v1790
    %v2486 = vunpack.c.l.b16 %v1791
    %v2487 = vunpack.c.h.b16 %v1791
    %v2488 = vunpack.c.l.b16 %v1792
    %v2489 = vunpack.c.h.b16 %v1792
    %v2490 = vunpack.c.l.b16 %v1793
    %v2491 = vunpack.c.h.b16 %v1793
    %v2492 = vunpack.c.l.b16 %v1794
    %v2493 = vunpack.c.h.b16 %v1794
    %v2494 = vunpack.c.l.b16 %v1795
    %v2495 = vunpack.c.h.b16 %v1795
    %v2496 = vunpack.c.l.b16 %v1796
    %v2497 = vunpack.c.h.b16 %v1796
    %v2498 = vunpack.c.l.b16 %v1797
    %v2499 = vunpack.c.h.b16 %v1797
    %v2500 = vunpack.c.l.b16 %v1798
    %v2501 = vunpack.c.h.b16 %v1798
    %v2502 = vunpack.c.l.b16 %v1799
    %v2503 = vunpack.c.h.b16 %v1799
    %v2504 = vunpack.c.l.b16 %v1800
    %v2505 = vunpack.c.h.b16 %v1800
    %v2506 = vunpack.c.l.b16 %v1801
    %v2507 = vunpack.c.h.b16 %v1801
    %v2508 = vunpack.c.l.b16 %v1802
    %v2509 = vunpack.c.h.b16 %v1802
    %v2510 = vunpack.c.l.b16 %v1803
    %v2511 = vunpack.c.h.b16 %v1803
    %v2512 = vunpack.c.l.b16 %v1804
    %v2513 = vunpack.c.h.b16 %v1804
    %v2514 = vunpack.c.l.b16 %v1805
    %v2515 = vunpack.c.h.b16 %v1805
    %v2516 = vunpack.c.l.b16 %v1806
    %v2517 = vunpack.c.h.b16 %v1806
    %v2518 = vunpack.c.l.b16 %v1807
    %v2519 = vunpack.c.h.b16 %v1807
    %v2520 = vunpack.c.l.b16 %v1808
    %v2521 = vunpack.c.h.b16 %v1808
    %v2522 = vunpack.c.l.b16 %v1809
    %v2523 = vunpack.c.h.b16 %v1809
    %v2524 = vunpack.c.l.b16 %v1810
    %v2525 = vunpack.c.h.b16 %v1810
    %v2526 = vunpack.c.l.b16 %v1811
    %v2527 = vunpack.c.h.b16 %v1811
    %v2528 = vunpack.c.l.b16 %v1812
    %v2529 = vunpack.c.h.b16 %v1812
    %v2530 = vunpack.c.l.b16 %v1813
    %v2531 = vunpack.c.h.b16 %v1813
    %v2532 = vunpack.c.l.b16 %v1814
    %v2533 = vunpack.c.h.b16 %v1814
    %v2534 = vunpack.c.l.b16 %v1815
    %v2535 = vunpack.c.h.b16 %v1815
    %v2536 = vunpack.c.l.b16 %v1816
    %v2537 = vunpack.c.h.b16 %v1816
    %v2538 = vunpack.c.l.b16 %v1817
    %v2539 = vunpack.c.h.b16 %v1817
    %v2540 = vunpack.c.l.b16 %v1818
    %v2541 = vunpack.c.h.b16 %v1818
    %v2542 = vunpack.c.l.b16 %v1819
    %v2543 = vunpack.c.h.b16 %v1819
    %v2544 = vunpack.c.l.b16 %v1820
    %v2545 = vunpack.c.h.b16 %v1820
    %v2546 = vunpack.c.l.b16 %v1821
    %v2547 = vunpack.c.h.b16 %v1821
    %v2548 = vunpack.c.l.b16 %v1822
    %v2549 = vunpack.c.h.b16 %v1822
    %v2550 = vunpack.c.l.b16 %v1823
    %v2551 = vunpack.c.h.b16 %v1823
    %v2552 = vunpack.c.l.b16 %v1824
    %v2553 = vunpack.c.h.b16 %v1824
    %v2554 = vunpack.c.l.b16 %v1825
    %v2555 = vunpack.c.h.b16 %v1825
    %v2556 = vunpack.c.l.b16 %v1826
    %v2557 = vunpack.c.h.b16 %v1826
    %v2558 = vunpack.c.l.b16 %v1827
    %v2559 = vunpack.c.h.b16 %v1827
    %v2560 = vunpack.c.l.b16 %v1828
    %v2561 = vunpack.c.h.b16 %v1828
    %v2562 = vunpack.c.l.b16 %v1829
    %v2563 = vunpack.c.h.b16 %v1829
    %v2564 = vunpack.c.l.b16 %v1830
    %v2565 = vunpack.c.h.b16 %v1830
    %v2566 = vunpack.c.l.b16 %v1831
    %v2567 = vunpack.c.h.b16 %v1831
    %v2568 = vunpack.c.l.b16 %v1832
    %v2569 = vunpack.c.h.b16 %v1832
    %v2570 = vunpack.c.l.b16 %v1833
    %v2571 = vunpack.c.h.b16 %v1833
    %v2572 = vunpack.c.l.b16 %v1834
    %v2573 = vunpack.c.h.b16 %v1834
    %v2574 = vunpack.c.l.b16 %v1835
    %v2575 = vunpack.c.h.b16 %v1835
    %v2576 = vunpack.c.l.b16 %v1836
    %v2577 = vunpack.c.h.b16 %v1836
    %v2578 = vunpack.c.l.b16 %v1837
    %v2579 = vunpack.c.h.b16 %v1837
    %v2580 = vunpack.c.l.b16 %v1838
    %v2581 = vunpack.c.h.b16 %v1838
    %v2582 = vunpack.c.l.b16 %v1839
    %v2583 = vunpack.c.h.b16 %v1839
    %v2584 = vunpack.c.l.b16 %v1840
    %v2585 = vunpack.c.h.b16 %v1840
    %v2586 = vunpack.c.l.b16 %v1841
    %v2587 = vunpack.c.h.b16 %v1841
    %v2588 = vunpack.c.l.b16 %v1842
    %v2589 = vunpack.c.h.b16 %v1842
    %v2590 = vunpack.c.l.b16 %v1843
    %v2591 = vunpack.c.h.b16 %v1843
    %v2592 = vunpack.c.l.b16 %v1844
    %v2593 = vunpack.c.h.b16 %v1844
    %v2594 = vunpack.c.l.b16 %v1845
    %v2595 = vunpack.c.h.b16 %v1845
    %v2596 = vunpack.c.l.b16 %v1846
    %v2597 = vunpack.c.h.b16 %v1846
    %v2598 = vunpack.c.l.b16 %v1847
    %v2599 = vunpack.c.h.b16 %v1847
    %v2600 = vunpack.c.l.b16 %v1848
    %v2601 = vunpack.c.h.b16 %v1848
    %v2602 = vunpack.c.l.b16 %v1849
    %v2603 = vunpack.c.h.b16 %v1849
    %v2604 = vunpack.c.l.b16 %v1850
    %v2605 = vunpack.c.h.b16 %v1850
    %v2606 = vunpack.c.l.b16 %v1851
    %v2607 = vunpack.c.h.b16 %v1851
    %v2608 = vunpack.c.l.b16 %v1852
    %v2609 = vunpack.c.h.b16 %v1852
    %v2610 = vunpack.c.l.b16 %v1853
    %v2611 = vunpack.c.h.b16 %v1853
    %v2612 = vunpack.c.l.b16 %v1854
    %v2613 = vunpack.c.h.b16 %v1854
    %v2614 = vunpack.c.l.b16 %v1855
    %v2615 = vunpack.c.h.b16 %v1855
    %v2616 = vunpack.c.l.b16 %v1856
    %v2617 = vunpack.c.h.b16 %v1856
    %v2618 = vunpack.c.l.b16 %v1857
    %v2619 = vunpack.c.h.b16 %v1857
    %v2620 = vunpack.c.l.b16 %v1858
    %v2621 = vunpack.c.h.b16 %v1858
    %v2622 = vunpack.c.l.b16 %v1859
    %v2623 = vunpack.c.h.b16 %v1859
    %v2624 = vunpack.c.l.b16 %v1860
    %v2625 = vunpack.c.h.b16 %v1860
    %v2626 = vunpack.c.l.b16 %v1861
    %v2627 = vunpack.c.h.b16 %v1861
    %v2628 = vunpack.c.l.b16 %v1862
    %v2629 = vunpack.c.h.b16 %v1862
    %v2630 = vunpack.c.l.b16 %v1863
    %v2631 = vunpack.c.h.b16 %v1863
    %v2632 = vunpack.c.l.b16 %v1864
    %v2633 = vunpack.c.h.b16 %v1864
    %v2634 = vunpack.c.l.b16 %v1865
    %v2635 = vunpack.c.h.b16 %v1865
    %v2636 = vunpack.c.l.b16 %v1866
    %v2637 = vunpack.c.h.b16 %v1866
    %v2638 = vunpack.c.l.b16 %v1867
    %v2639 = vunpack.c.h.b16 %v1867
    %v2640 = vunpack.c.l.b16 %v1868
    %v2641 = vunpack.c.h.b16 %v1868
    %v2642 = vunpack.c.l.b16 %v1869
    %v2643 = vunpack.c.h.b16 %v1869
    %v2644 = vunpack.c.l.b16 %v1870
    %v2645 = vunpack.c.h.b16 %v1870
    %v2646 = vunpack.c.l.b16 %v1871
    %v2647 = vunpack.c.h.b16 %v1871
    %v2648 = vunpack.c.l.b16 %v1872
    %v2649 = vunpack.c.h.b16 %v1872
    %v2650 = vunpack.c.l.b16 %v1873
    %v2651 = vunpack.c.h.b16 %v1873
    %v2652 = vunpack.c.l.b16 %v1874
    %v2653 = vunpack.c.h.b16 %v1874
    %v2654 = vunpack.c.l.b16 %v1875
    %v2655 = vunpack.c.h.b16 %v1875
    %v2656 = vunpack.c.l.b16 %v1876
    %v2657 = vunpack.c.h.b16 %v1876
    %v2658 = vunpack.c.l.b16 %v1877
    %v2659 = vunpack.c.h.b16 %v1877
    %v2660 = vunpack.c.l.b16 %v1878
    %v2661 = vunpack.c.h.b16 %v1878
    %v2662 = vunpack.c.l.b16 %v1879
    %v2663 = vunpack.c.h.b16 %v1879
    %v2664 = vunpack.c.l.b16 %v1880
    %v2665 = vunpack.c.h.b16 %v1880
    %v2666 = vunpack.c.l.b16 %v1881
    %v2667 = vunpack.c.h.b16 %v1881
    %v2668 = vunpack.c.l.b16 %v1882
    %v2669 = vunpack.c.h.b16 %v1882
    %v2670 = vunpack.c.l.b16 %v1883
    %v2671 = vunpack.c.h.b16 %v1883
    %v2672 = vunpack.c.l.b16 %v1884
    %v2673 = vunpack.c.h.b16 %v1884
    %v2674 = vunpack.c.l.b16 %v1885
    %v2675 = vunpack.c.h.b16 %v1885
    %v2676 = vunpack.c.l.b16 %v1886
    %v2677 = vunpack.c.h.b16 %v1886
    %v2678 = vunpack.c.l.b16 %v1887
    %v2679 = vunpack.c.h.b16 %v1887
    %v2680 = vunpack.c.l.b16 %v1888
    %v2681 = vunpack.c.h.b16 %v1888
    %v2682 = vunpack.c.l.b16 %v1889
    %v2683 = vunpack.c.h.b16 %v1889
    %v2684 = vunpack.c.l.b16 %v1890
    %v2685 = vunpack.c.h.b16 %v1890
    %v2686 = vunpack.c.l.b16 %v1891
    %v2687 = vunpack.c.h.b16 %v1891
    %v2688 = vunpack.c.l.b16 %v1892
    %v2689 = vunpack.c.h.b16 %v1892
    %v2690 = vunpack.c.l.b16 %v1893
    %v2691 = vunpack.c.h.b16 %v1893
    %v2692 = vunpack.c.l.b16 %v1894
    %v2693 = vunpack.c.h.b16 %v1894
    %v2694 = vunpack.c.l.b16 %v1895
    %v2695 = vunpack.c.h.b16 %v1895
    %v2696 = vunpack.c.l.b16 %v1896
    %v2697 = vunpack.c.h.b16 %v1896
    %v2698 = vunpack.c.l.b16 %v1897
    %v2699 = vunpack.c.h.b16 %v1897
    %v2700 = vunpack.c.l.b16 %v1898
    %v2701 = vunpack.c.h.b16 %v1898
    %v2702 = vunpack.c.l.b16 %v1899
    %v2703 = vunpack.c.h.b16 %v1899
    %v2704 = vunpack.c.l.b16 %v1900
    %v2705 = vunpack.c.h.b16 %v1900
    %v2706 = vunpack.c.l.b16 %v1901
    %v2707 = vunpack.c.h.b16 %v1901
    %v2708 = vunpack.c.l.b16 %v1902
    %v2709 = vunpack.c.h.b16 %v1902
    %v2710 = vunpack.c.l.b16 %v1903
    %v2711 = vunpack.c.h.b16 %v1903
    %v2712 = vunpack.c.l.b16 %v1904
    %v2713 = vunpack.c.h.b16 %v1904
    %v2714 = vunpack.c.l.b16 %v1905
    %v2715 = vunpack.c.h.b16 %v1905
    %v2716 = vpack.c.b16 %v2212, %v2204
    %v2717 = vpack.c.b16 %v2213, %v2205
    %v2718 = vpack.c.b16 %v2214, %v2206
    %v2719 = vpack.c.b16 %v2215, %v2207
    %v2720 = vpack.c.b16 %v2216, %v2208
    %v2721 = vpack.c.b16 %v2217, %v2209
    %v2722 = vpack.c.b16 %v2218, %v2210
    %v2723 = vpack.c.b16 %v2219, %v2211
    %v2724 = vpack.c.b16 %v2228, %v2220
    %v2725 = vpack.c.b16 %v2229, %v2221
    %v2726 = vpack.c.b16 %v2230, %v2222
    %v2727 = vpack.c.b16 %v2231, %v2223
    %v2728 = vpack.c.b16 %v2232, %v2224
    %v2729 = vpack.c.b16 %v2233, %v2225
    %v2730 = vpack.c.b16 %v2234, %v2226
    %v2731 = vpack.c.b16 %v2235, %v2227
    %v2732 = vpack.c.b16 %v2244, %v2236
    %v2733 = vpack.c.b16 %v2245, %v2237
    %v2734 = vpack.c.b16 %v2246, %v2238
    %v2735 = vpack.c.b16 %v2247, %v2239
    %v2736 = vpack.c.b16 %v2248, %v2240
    %v2737 = vpack.c.b16 %v2249, %v2241
    %v2738 = vpack.c.b16 %v2250, %v2242
    %v2739 = vpack.c.b16 %v2251, %v2243
    %v2740 = vpack.c.b16 %v2260, %v2252
    %v2741 = vpack.c.b16 %v2261, %v2253
    %v2742 = vpack.c.b16 %v2262, %v2254
    %v2743 = vpack.c.b16 %v2263, %v2255
    %v2744 = vpack.c.b16 %v2264, %v2256
    %v2745 = vpack.c.b16 %v2265, %v2257
    %v2746 = vpack.c.b16 %v2266, %v2258
    %v2747 = vpack.c.b16 %v2267, %v2259
    %v2748 = vpack.c.b16 %v2276, %v2268
    %v2749 = vpack.c.b16 %v2277, %v2269
    %v2750 = vpack.c.b16 %v2278, %v2270
    %v2751 = vpack.c.b16 %v2279, %v2271
    %v2752 = vpack.c.b16 %v2280, %v2272
    %v2753 = vpack.c.b16 %v2281, %v2273
    %v2754 = vpack.c.b16 %v2282, %v2274
    %v2755 = vpack.c.b16 %v2283, %v2275
    %v2756 = vpack.c.b16 %v2292, %v2284
    %v2757 = vpack.c.b16 %v2293, %v2285
    %v2758 = vpack.c.b16 %v2294, %v2286
    %v2759 = vpack.c.b16 %v2295, %v2287
    %v2760 = vpack.c.b16 %v2296, %v2288
    %v2761 = vpack.c.b16 %v2297, %v2289
    %v2762 = vpack.c.b16 %v2298, %v2290
    %v2763 = vpack.c.b16 %v2299, %v2291
    %v2764 = vpack.c.b16 %v2308, %v2300
    %v2765 = vpack.c.b16 %v2309, %v2301
    %v2766 = vpack.c.b16 %v2310, %v2302
    %v2767 = vpack.c.b16 %v2311, %v2303
    %v2768 = vpack.c.b16 %v2312, %v2304
    %v2769 = vpack.c.b16 %v2313, %v2305
    %v2770 = vpack.c.b16 %v2314, %v2306
    %v2771 = vpack.c.b16 %v2315, %v2307
    %v2772 = vpack.c.b16 %v2324, %v2316
    %v2773 = vpack.c.b16 %v2325, %v2317
    %v2774 = vpack.c.b16 %v2326, %v2318
    %v2775 = vpack.c.b16 %v2327, %v2319
    %v2776 = vpack.c.b16 %v2328, %v2320
    %v2777 = vpack.c.b16 %v2329, %v2321
    %v2778 = vpack.c.b16 %v2330, %v2322
    %v2779 = vpack.c.b16 %v2331, %v2323
    %v2780 = vpack.c.b16 %v2340, %v2332
    %v2781 = vpack.c.b16 %v2341, %v2333
    %v2782 = vpack.c.b16 %v2342, %v2334
    %v2783 = vpack.c.b16 %v2343, %v2335
    %v2784 = vpack.c.b16 %v2344, %v2336
    %v2785 = vpack.c.b16 %v2345, %v2337
    %v2786 = vpack.c.b16 %v2346, %v2338
    %v2787 = vpack.c.b16 %v2347, %v2339
    %v2788 = vpack.c.b16 %v2356, %v2348
    %v2789 = vpack.c.b16 %v2357, %v2349
    %v2790 = vpack.c.b16 %v2358, %v2350
    %v2791 = vpack.c.b16 %v2359, %v2351
    %v2792 = vpack.c.b16 %v2360, %v2352
    %v2793 = vpack.c.b16 %v2361, %v2353
    %v2794 = vpack.c.b16 %v2362, %v2354
    %v2795 = vpack.c.b16 %v2363, %v2355
    %v2796 = vpack.c.b16 %v2372, %v2364
    %v2797 = vpack.c.b16 %v2373, %v2365
    %v2798 = vpack.c.b16 %v2374, %v2366
    %v2799 = vpack.c.b16 %v2375, %v2367
    %v2800 = vpack.c.b16 %v2376, %v2368
    %v2801 = vpack.c.b16 %v2377, %v2369
    %v2802 = vpack.c.b16 %v2378, %v2370
    %v2803 = vpack.c.b16 %v2379, %v2371
    %v2804 = vpack.c.b16 %v2388, %v2380
    %v2805 = vpack.c.b16 %v2389, %v2381
    %v2806 = vpack.c.b16 %v2390, %v2382
    %v2807 = vpack.c.b16 %v2391, %v2383
    %v2808 = vpack.c.b16 %v2392, %v2384
    %v2809 = vpack.c.b16 %v2393, %v2385
    %v2810 = vpack.c.b16 %v2394, %v2386
    %v2811 = vpack.c.b16 %v2395, %v2387
    %v2812 = vpack.c.b16 %v2404, %v2396
    %v2813 = vpack.c.b16 %v2405, %v2397
    %v2814 = vpack.c.b16 %v2406, %v2398
    %v2815 = vpack.c.b16 %v2407, %v2399
    %v2816 = vpack.c.b16 %v2408, %v2400
    %v2817 = vpack.c.b16 %v2409, %v2401
    %v2818 = vpack.c.b16 %v2410, %v2402
    %v2819 = vpack.c.b16 %v2411, %v2403
    %v2820 = vpack.c.b16 %v2420, %v2412
    %v2821 = vpack.c.b16 %v2421, %v2413
    %v2822 = vpack.c.b16 %v2422, %v2414
    %v2823 = vpack.c.b16 %v2423, %v2415
    %v2824 = vpack.c.b16 %v2424, %v2416
    %v2825 = vpack.c.b16 %v2425, %v2417
    %v2826 = vpack.c.b16 %v2426, %v2418
    %v2827 = vpack.c.b16 %v2427, %v2419
    %v2828 = vpack.c.b16 %v2436, %v2428
    %v2829 = vpack.c.b16 %v2437, %v2429
    %v2830 = vpack.c.b16 %v2438, %v2430
    %v2831 = vpack.c.b16 %v2439, %v2431
    %v2832 = vpack.c.b16 %v2440, %v2432
    %v2833 = vpack.c.b16 %v2441, %v2433
    %v2834 = vpack.c.b16 %v2442, %v2434
    %v2835 = vpack.c.b16 %v2443, %v2435
    %v2836 = vpack.c.b16 %v2452, %v2444
    %v2837 = vpack.c.b16 %v2453, %v2445
    %v2838 = vpack.c.b16 %v2454, %v2446
    %v2839 = vpack.c.b16 %v2455, %v2447
    %v2840 = vpack.c.b16 %v2456, %v2448
    %v2841 = vpack.c.b16 %v2457, %v2449
    %v2842 = vpack.c.b16 %v2458, %v2450
    %v2843 = vpack.c.b16 %v2459, %v2451
    %v2844 = vpack.c.b16 %v2468, %v2460
    %v2845 = vpack.c.b16 %v2469, %v2461
    %v2846 = vpack.c.b16 %v2470, %v2462
    %v2847 = vpack.c.b16 %v2471, %v2463
    %v2848 = vpack.c.b16 %v2472, %v2464
    %v2849 = vpack.c.b16 %v2473, %v2465
    %v2850 = vpack.c.b16 %v2474, %v2466
    %v2851 = vpack.c.b16 %v2475, %v2467
    %v2852 = vpack.c.b16 %v2484, %v2476
    %v2853 = vpack.c.b16 %v2485, %v2477
    %v2854 = vpack.c.b16 %v2486, %v2478
    %v2855 = vpack.c.b16 %v2487, %v2479
    %v2856 = vpack.c.b16 %v2488, %v2480
    %v2857 = vpack.c.b16 %v2489, %v2481
    %v2858 = vpack.c.b16 %v2490, %v2482
    %v2859 = vpack.c.b16 %v2491, %v2483
    %v2860 = vpack.c.b16 %v2500, %v2492
    %v2861 = vpack.c.b16 %v2501, %v2493
    %v2862 = vpack.c.b16 %v2502, %v2494
    %v2863 = vpack.c.b16 %v2503, %v2495
    %v2864 = vpack.c.b16 %v2504, %v2496
    %v2865 = vpack.c.b16 %v2505, %v2497
    %v2866 = vpack.c.b16 %v2506, %v2498
    %v2867 = vpack.c.b16 %v2507, %v2499
    %v2868 = vpack.c.b16 %v2516, %v2508
    %v2869 = vpack.c.b16 %v2517, %v2509
    %v2870 = vpack.c.b16 %v2518, %v2510
    %v2871 = vpack.c.b16 %v2519, %v2511
    %v2872 = vpack.c.b16 %v2520, %v2512
    %v2873 = vpack.c.b16 %v2521, %v2513
    %v2874 = vpack.c.b16 %v2522, %v2514
    %v2875 = vpack.c.b16 %v2523, %v2515
    %v2876 = vpack.c.b16 %v2532, %v2524
    %v2877 = vpack.c.b16 %v2533, %v2525
    %v2878 = vpack.c.b16 %v2534, %v2526
    %v2879 = vpack.c.b16 %v2535, %v2527
    %v2880 = vpack.c.b16 %v2536, %v2528
    %v2881 = vpack.c.b16 %v2537, %v2529
    %v2882 = vpack.c.b16 %v2538, %v2530
    %v2883 = vpack.c.b16 %v2539, %v2531
    %v2884 = vpack.c.b16 %v2548, %v2540
    %v2885 = vpack.c.b16 %v2549, %v2541
    %v2886 = vpack.c.b16 %v2550, %v2542
    %v2887 = vpack.c.b16 %v2551, %v2543
    %v2888 = vpack.c.b16 %v2552, %v2544
    %v2889 = vpack.c.b16 %v2553, %v2545
    %v2890 = vpack.c.b16 %v2554, %v2546
    %v2891 = vpack.c.b16 %v2555, %v2547
    %v2892 = vpack.c.b16 %v2564, %v2556
    %v2893 = vpack.c.b16 %v2565, %v2557
    %v2894 = vpack.c.b16 %v2566, %v2558
    %v2895 = vpack.c.b16 %v2567, %v2559
    %v2896 = vpack.c.b16 %v2568, %v2560
    %v2897 = vpack.c.b16 %v2569, %v2561
    %v2898 = vpack.c.b16 %v2570, %v2562
    %v2899 = vpack.c.b16 %v2571, %v2563
    %v2900 = vpack.c.b16 %v2580, %v2572
    %v2901 = vpack.c.b16 %v2581, %v2573
    %v2902 = vpack.c.b16 %v2582, %v2574
    %v2903 = vpack.c.b16 %v2583, %v2575
    %v2904 = vpack.c.b16 %v2584, %v2576
    %v2905 = vpack.c.b16 %v2585, %v2577
    %v2906 = vpack.c.b16 %v2586, %v2578
    %v2907 = vpack.c.b16 %v2587, %v2579
    %v2908 = vpack.c.b16 %v2596, %v2588
    %v2909 = vpack.c.b16 %v2597, %v2589
    %v2910 = vpack.c.b16 %v2598, %v2590
    %v2911 = vpack.c.b16 %v2599, %v2591
    %v2912 = vpack.c.b16 %v2600, %v2592
    %v2913 = vpack.c.b16 %v2601, %v2593
    %v2914 = vpack.c.b16 %v2602, %v2594
    %v2915 = vpack.c.b16 %v2603, %v2595
    %v2916 = vpack.c.b16 %v2612, %v2604
    %v2917 = vpack.c.b16 %v2613, %v2605
    %v2918 = vpack.c.b16 %v2614, %v2606
    %v2919 = vpack.c.b16 %v2615, %v2607
    %v2920 = vpack.c.b16 %v2616, %v2608
    %v2921 = vpack.c.b16 %v2617, %v2609
    %v2922 = vpack.c.b16 %v2618, %v2610
    %v2923 = vpack.c.b16 %v2619, %v2611
    %v2924 = vpack.c.b16 %v2628, %v2620
    %v2925 = vpack.c.b16 %v2629, %v2621
    %v2926 = vpack.c.b16 %v2630, %v2622
    %v2927 = vpack.c.b16 %v2631, %v2623
    %v2928 = vpack.c.b16 %v2632, %v2624
    %v2929 = vpack.c.b16 %v2633, %v2625
    %v2930 = vpack.c.b16 %v2634, %v2626
    %v2931 = vpack.c.b16 %v2635, %v2627
    %v2932 = vpack.c.b16 %v2644, %v2636
    %v2933 = vpack.c.b16 %v2645, %v2637
    %v2934 = vpack.c.b16 %v2646, %v2638
    %v2935 = vpack.c.b16 %v2647, %v2639
    %v2936 = vpack.c.b16 %v2648, %v2640
    %v2937 = vpack.c.b16 %v2649, %v2641
    %v2938 = vpack.c.b16 %v2650, %v2642
    %v2939 = vpack.c.b16 %v2651, %v2643
    %v2940 = vpack.c.b16 %v2660, %v2652
    %v2941 = vpack.c.b16 %v2661, %v2653
    %v2942 = vpack.c.b16 %v2662, %v2654
    %v2943 = vpack.c.b16 %v2663, %v2655
    %v2944 = vpack.c.b16 %v2664, %v2656
    %v2945 = vpack.c.b16 %v2665, %v2657
    %v2946 = vpack.c.b16 %v2666, %v2658
    %v2947 = vpack.c.b16 %v2667, %v2659
    %v2948 = vpack.c.b16 %v2676, %v2668
    %v2949 = vpack.c.b16 %v2677, %v2669
    %v2950 = vpack.c.b16 %v2678, %v2670
    %v2951 = vpack.c.b16 %v2679, %v2671
    %v2952 = vpack.c.b16 %v2680, %v2672
    %v2953 = vpack.c.b16 %v2681, %v2673
    %v2954 = vpack.c.b16 %v2682, %v2674
    %v2955 = vpack.c.b16 %v2683, %v2675
    %v2956 = vpack.c.b16 %v2692, %v2684
    %v2957 = vpack.c.b16 %v2693, %v2685
    %v2958 = vpack.c.b16 %v2694, %v2686
    %v2959 = vpack.c.b16 %v2695, %v2687
    %v2960 = vpack.c.b16 %v2696, %v2688
    %v2961 = vpack.c.b16 %v2697, %v2689
    %v2962 = vpack.c.b16 %v2698, %v2690
    %v2963 = vpack.c.b16 %v2699, %v2691
    %v2964 = vpack.c.b16 %v2708, %v2700
    %v2965 = vpack.c.b16 %v2709, %v2701
    %v2966 = vpack.c.b16 %v2710, %v2702
    %v2967 = vpack.c.b16 %v2711, %v2703
    %v2968 = vpack.c.b16 %v2712, %v2704
    %v2969 = vpack.c.b16 %v2713, %v2705
    %v2970 = vpack.c.b16 %v2714, %v2706
    %v2971 = vpack.c.b16 %v2715, %v2707
    %3228 = vmatprep.subr.bf16.mxu0 %v2717
    %3229 = vmatpush1.bf16.msra.mxu0 %v2716
    %3230 = vmatprep.subr.bf16.mxu0 %v2725
    %3231 = vmatpush1.bf16.msra.mxu0 %v2724
    %3232 = vmatprep.subr.bf16.mxu0 %v2733
    %3233 = vmatpush1.bf16.msra.mxu0 %v2732
    %3234 = vmatprep.subr.bf16.mxu0 %v2741
    %3235 = vmatpush1.bf16.msra.mxu0 %v2740
    %3236 = vmatprep.subr.bf16.mxu0 %v2749
    %3237 = vmatpush1.bf16.msra.mxu0 %v2748
    %3238 = vmatprep.subr.bf16.mxu0 %v2757
    %3239 = vmatpush1.bf16.msra.mxu0 %v2756
    %3240 = vmatprep.subr.bf16.mxu0 %v2765
    %3241 = vmatpush1.bf16.msra.mxu0 %v2764
    %3242 = vmatprep.subr.bf16.mxu0 %v2773
    %3243 = vmatpush1.bf16.msra.mxu0 %v2772
    %3244 = vmatprep.subr.bf16.mxu0 %v2781
    %3245 = vmatpush1.bf16.msra.mxu0 %v2780
    %3246 = vmatprep.subr.bf16.mxu0 %v2789
    %3247 = vmatpush1.bf16.msra.mxu0 %v2788
    %3248 = vmatprep.subr.bf16.mxu0 %v2797
    %3249 = vmatpush1.bf16.msra.mxu0 %v2796
    %3250 = vmatprep.subr.bf16.mxu0 %v2805
    %3251 = vmatpush1.bf16.msra.mxu0 %v2804
    %3252 = vmatprep.subr.bf16.mxu0 %v2813
    %3253 = vmatpush1.bf16.msra.mxu0 %v2812
    %3254 = vmatprep.subr.bf16.mxu0 %v2821
    %3255 = vmatpush1.bf16.msra.mxu0 %v2820
    %3256 = vmatprep.subr.bf16.mxu0 %v2829
    %3257 = vmatpush1.bf16.msra.mxu0 %v2828
    %3258 = vmatprep.subr.bf16.mxu0 %v2837
    %3259 = vmatpush1.bf16.msra.mxu0 %v2836
    %3260 = vmatprep.mubr.bf16.mxu0 %v1635
    %3261 = vmatmul.mubr.bf16.gmra.mrb[0].mxu0 %v1634
    %v3262 = vpop.f32.mrb[0].mxu0
    %v3263 = vadd.f32 %v1911, %v3262
    %v3264 = vpop.f32.mrb[0].mxu0
    %v3265 = vadd.f32 %v1915, %v3264
    %v3266 = vpop.f32.mrb[0].mxu0
    %v3267 = vadd.f32 %v1911, %v3266
    %v3268 = vpop.f32.mrb[0].mxu0
    %v3269 = vadd.f32 %v1915, %v3268
    %3270 = vmatprep.mubr.bf16.mxu0 %v1639
    %3271 = vmatmul.mubr.bf16.gmra.mrb[0].mxu0 %v1638
    %v3272 = vpop.f32.mrb[0].mxu0
    %v3273 = vadd.f32 %v1911, %v3272
    %v3274 = vpop.f32.mrb[0].mxu0
    %v3275 = vadd.f32 %v1915, %v3274
    %v3276 = vpop.f32.mrb[0].mxu0
    %v3277 = vadd.f32 %v1911, %v3276
    %v3278 = vpop.f32.mrb[0].mxu0
    %v3279 = vadd.f32 %v1915, %v3278
    %3280 = vmatprep.mubr.bf16.mxu0 %v1643
    %3281 = vmatmul.mubr.bf16.gmra.mrb[0].mxu0 %v1642
    %v3282 = vpop.f32.mrb[0].mxu0
    %v3283 = vadd.f32 %v1911, %v3282
    %v3284 = vpop.f32.mrb[0].mxu0
    %v3285 = vadd.f32 %v1915, %v3284
    %v3286 = vpop.f32.mrb[0].mxu0
    %v3287 = vadd.f32 %v1911, %v3286
    %v3288 = vpop.f32.mrb[0].mxu0
    %v3289 = vadd.f32 %v1915, %v3288
    %3290 = vmatprep.mubr.bf16.mxu0 %v1647
    %3291 = vmatmul.mubr.bf16.gmra.mrb[0].mxu0 %v1646
    %v3292 = vpop.f32.mrb[0].mxu0
    %v3293 = vadd.f32 %v1911, %v3292
    %v3294 = vpop.f32.mrb[0].mxu0
    %v3295 = vadd.f32 %v1915, %v3294
    %v3296 = vpop.f32.mrb[0].mxu0
    %v3297 = vadd.f32 %v1911, %v3296
    %v3298 = vpop.f32.mrb[0].mxu0
    %v3299 = vadd.f32 %v1915, %v3298
    %3300 = vdwg.mxu0
    %3301 = vmatprep.subr.bf16.mxu0 %v2845
    %3302 = vmatpush1.bf16.msra.mxu0 %v2844
    %3303 = vmatprep.subr.bf16.mxu0 %v2853
    %3304 = vmatpush1.bf16.msra.mxu0 %v2852
    %3305 = vmatprep.subr.bf16.mxu0 %v2861
    %3306 = vmatpush1.bf16.msra.mxu0 %v2860
    %3307 = vmatprep.subr.bf16.mxu0 %v2869
    %3308 = vmatpush1.bf16.msra.mxu0 %v2868
    %3309 = vmatprep.subr.bf16.mxu0 %v2877
    %3310 = vmatpush1.bf16.msra.mxu0 %v2876
    %3311 = vmatprep.subr.bf16.mxu0 %v2885
    %3312 = vmatpush1.bf16.msra.mxu0 %v2884
    %3313 = vmatprep.subr.bf16.mxu0 %v2893
    %3314 = vmatpush1.bf16.msra.mxu0 %v2892
    %3315 = vmatprep.subr.bf16.mxu0 %v2901
    %3316 = vmatpush1.bf16.msra.mxu0 %v2900
    %3317 = vmatprep.subr.bf16.mxu0 %v2909
    %3318 = vmatpush1.bf16.msra.mxu0 %v2908
    %3319 = vmatprep.subr.bf16.mxu0 %v2917
    %3320 = vmatpush1.bf16.msra.mxu0 %v2916
    %3321 = vmatprep.subr.bf16.mxu0 %v2925
    %3322 = vmatpush1.bf16.msra.mxu0 %v2924
    %3323 = vmatprep.subr.bf16.mxu0 %v2933
    %3324 = vmatpush1.bf16.msra.mxu0 %v2932
    %3325 = vmatprep.subr.bf16.mxu0 %v2941
    %3326 = vmatpush1.bf16.msra.mxu0 %v2940
    %3327 = vmatprep.subr.bf16.mxu0 %v2949
    %3328 = vmatpush1.bf16.msra.mxu0 %v2948
    %3329 = vmatprep.subr.bf16.mxu0 %v2957
    %3330 = vmatpush1.bf16.msra.mxu0 %v2956
    %3331 = vmatprep.subr.bf16.mxu0 %v2965
    %3332 = vmatpush1.bf16.msra.mxu0 %v2964
    %3333 = vmatprep.mubr.bf16.mxu0 %v1637
    %3334 = vmatmul.mubr.bf16.gmra.mrb[0].mxu0 %v1636
    %v3335 = vpop.f32.mrb[0].mxu0
    %v3336 = vadd.f32 %v3263, %v3335
    %v3337 = vpop.f32.mrb[0].mxu0
    %v3338 = vadd.f32 %v3265, %v3337
    %v3339 = vpop.f32.mrb[0].mxu0
    %v3340 = vadd.f32 %v3267, %v3339
    %v3341 = vpop.f32.mrb[0].mxu0
    %v3342 = vadd.f32 %v3269, %v3341
    %3343 = vmatprep.mubr.bf16.mxu0 %v1641
    %3344 = vmatmul.mubr.bf16.gmra.mrb[0].mxu0 %v1640
    %v3345 = vpop.f32.mrb[0].mxu0
    %v3346 = vadd.f32 %v3273, %v3345
    %v3347 = vpop.f32.mrb[0].mxu0
    %v3348 = vadd.f32 %v3275, %v3347
    %v3349 = vpop.f32.mrb[0].mxu0
    %v3350 = vadd.f32 %v3277, %v3349
    %v3351 = vpop.f32.mrb[0].mxu0
    %v3352 = vadd.f32 %v3279, %v3351
    %3353 = vmatprep.mubr.bf16.mxu0 %v1645
    %3354 = vmatmul.mubr.bf16.gmra.mrb[0].mxu0 %v1644
    %v3355 = vpop.f32.mrb[0].mxu0
    %v3356 = vadd.f32 %v3283, %v3355
    %v3357 = vpop.f32.mrb[0].mxu0
    %v3358 = vadd.f32 %v3285, %v3357
    %v3359 = vpop.f32.mrb[0].mxu0
    %v3360 = vadd.f32 %v3287, %v3359
    %v3361 = vpop.f32.mrb[0].mxu0
    %v3362 = vadd.f32 %v3289, %v3361
    %3363 = vmatprep.mubr.bf16.mxu0 %v1649
    %3364 = vmatmul.mubr.bf16.gmra.mrb[0].mxu0 %v1648
    %v3365 = vpop.f32.mrb[0].mxu0
    %v3366 = vadd.f32 %v3293, %v3365
    %v3367 = vpop.f32.mrb[0].mxu0
    %v3368 = vadd.f32 %v3295, %v3367
    %v3369 = vpop.f32.mrb[0].mxu0
    %v3370 = vadd.f32 %v3297, %v3369
    %v3371 = vpop.f32.mrb[0].mxu0
    %v3372 = vadd.f32 %v3299, %v3371
    %3373 = vdwg.mxu0
    %3374 = vmatprep.subr.bf16.mxu0 %v2719
    %3375 = vmatpush1.bf16.msra.mxu0 %v2718
    %3376 = vmatprep.subr.bf16.mxu0 %v2727
    %3377 = vmatpush1.bf16.msra.mxu0 %v2726
    %3378 = vmatprep.subr.bf16.mxu0 %v2735
    %3379 = vmatpush1.bf16.msra.mxu0 %v2734
    %3380 = vmatprep.subr.bf16.mxu0 %v2743
    %3381 = vmatpush1.bf16.msra.mxu0 %v2742
    %3382 = vmatprep.subr.bf16.mxu0 %v2751
    %3383 = vmatpush1.bf16.msra.mxu0 %v2750
    %3384 = vmatprep.subr.bf16.mxu0 %v2759
    %3385 = vmatpush1.bf16.msra.mxu0 %v2758
    %3386 = vmatprep.subr.bf16.mxu0 %v2767
    %3387 = vmatpush1.bf16.msra.mxu0 %v2766
    %3388 = vmatprep.subr.bf16.mxu0 %v2775
    %3389 = vmatpush1.bf16.msra.mxu0 %v2774
    %3390 = vmatprep.subr.bf16.mxu0 %v2783
    %3391 = vmatpush1.bf16.msra.mxu0 %v2782
    %3392 = vmatprep.subr.bf16.mxu0 %v2791
    %3393 = vmatpush1.bf16.msra.mxu0 %v2790
    %3394 = vmatprep.subr.bf16.mxu0 %v2799
    %3395 = vmatpush1.bf16.msra.mxu0 %v2798
    %3396 = vmatprep.subr.bf16.mxu0 %v2807
    %3397 = vmatpush1.bf16.msra.mxu0 %v2806
    %3398 = vmatprep.subr.bf16.mxu0 %v2815
    %3399 = vmatpush1.bf16.msra.mxu0 %v2814
    %3400 = vmatprep.subr.bf16.mxu0 %v2823
    %3401 = vmatpush1.bf16.msra.mxu0 %v2822
    %3402 = vmatprep.subr.bf16.mxu0 %v2831
    %3403 = vmatpush1.bf16.msra.mxu0 %v2830
    %3404 = vmatprep.subr.bf16.mxu0 %v2839
    %3405 = vmatpush1.bf16.msra.mxu0 %v2838
    %3406 = vmatprep.mubr.bf16.mxu0 %v1635
    %3407 = vmatmul.mubr.bf16.gmra.mrb[0].mxu0 %v1634
    %v3408 = vpop.f32.mrb[0].mxu0
    %v3409 = vadd.f32 %v1919, %v3408
    %v3410 = vpop.f32.mrb[0].mxu0
    %v3411 = vadd.f32 %v1923, %v3410
    %v3412 = vpop.f32.mrb[0].mxu0
    %v3413 = vadd.f32 %v1919, %v3412
    %v3414 = vpop.f32.mrb[0].mxu0
    %v3415 = vadd.f32 %v1923, %v3414
    %3416 = vmatprep.mubr.bf16.mxu0 %v1639
    %3417 = vmatmul.mubr.bf16.gmra.mrb[0].mxu0 %v1638
    %v3418 = vpop.f32.mrb[0].mxu0
    %v3419 = vadd.f32 %v1919, %v3418
    %v3420 = vpop.f32.mrb[0].mxu0
    %v3421 = vadd.f32 %v1923, %v3420
    %v3422 = vpop.f32.mrb[0].mxu0
    %v3423 = vadd.f32 %v1919, %v3422
    %v3424 = vpop.f32.mrb[0].mxu0
    %v3425 = vadd.f32 %v1923, %v3424
    %3426 = vmatprep.mubr.bf16.mxu0 %v1643
    %3427 = vmatmul.mubr.bf16.gmra.mrb[0].mxu0 %v1642
    %v3428 = vpop.f32.mrb[0].mxu0
    %v3429 = vadd.f32 %v1919, %v3428
    %v3430 = vpop.f32.mrb[0].mxu0
    %v3431 = vadd.f32 %v1923, %v3430
    %v3432 = vpop.f32.mrb[0].mxu0
    %v3433 = vadd.f32 %v1919, %v3432
    %v3434 = vpop.f32.mrb[0].mxu0
    %v3435 = vadd.f32 %v1923, %v3434
    %3436 = vmatprep.mubr.bf16.mxu0 %v1647
    %3437 = vmatmul.mubr.bf16.gmra.mrb[0].mxu0 %v1646
    %v3438 = vpop.f32.mrb[0].mxu0
    %v3439 = vadd.f32 %v1919, %v3438
    %v3440 = vpop.f32.mrb[0].mxu0
    %v3441 = vadd.f32 %v1923, %v3440
    %v3442 = vpop.f32.mrb[0].mxu0
    %v3443 = vadd.f32 %v1919, %v3442
    %v3444 = vpop.f32.mrb[0].mxu0
    %v3445 = vadd.f32 %v1923, %v3444
    %3446 = vdwg.mxu0
    %3447 = vmatprep.subr.bf16.mxu0 %v2847
    %3448 = vmatpush1.bf16.msra.mxu0 %v2846
    %3449 = vmatprep.subr.bf16.mxu0 %v2855
    %3450 = vmatpush1.bf16.msra.mxu0 %v2854
    %3451 = vmatprep.subr.bf16.mxu0 %v2863
    %3452 = vmatpush1.bf16.msra.mxu0 %v2862
    %3453 = vmatprep.subr.bf16.mxu0 %v2871
    %3454 = vmatpush1.bf16.msra.mxu0 %v2870
    %3455 = vmatprep.subr.bf16.mxu0 %v2879
    %3456 = vmatpush1.bf16.msra.mxu0 %v2878
    %3457 = vmatprep.subr.bf16.mxu0 %v2887
    %3458 = vmatpush1.bf16.msra.mxu0 %v2886
    %3459 = vmatprep.subr.bf16.mxu0 %v2895
    %3460 = vmatpush1.bf16.msra.mxu0 %v2894
    %3461 = vmatprep.subr.bf16.mxu0 %v2903
    %3462 = vmatpush1.bf16.msra.mxu0 %v2902
    %3463 = vmatprep.subr.bf16.mxu0 %v2911
    %3464 = vmatpush1.bf16.msra.mxu0 %v2910
    %3465 = vmatprep.subr.bf16.mxu0 %v2919
    %3466 = vmatpush1.bf16.msra.mxu0 %v2918
    %3467 = vmatprep.subr.bf16.mxu0 %v2927
    %3468 = vmatpush1.bf16.msra.mxu0 %v2926
    %3469 = vmatprep.subr.bf16.mxu0 %v2935
    %3470 = vmatpush1.bf16.msra.mxu0 %v2934
    %3471 = vmatprep.subr.bf16.mxu0 %v2943
    %3472 = vmatpush1.bf16.msra.mxu0 %v2942
    %3473 = vmatprep.subr.bf16.mxu0 %v2951
    %3474 = vmatpush1.bf16.msra.mxu0 %v2950
    %3475 = vmatprep.subr.bf16.mxu0 %v2959
    %3476 = vmatpush1.bf16.msra.mxu0 %v2958
    %3477 = vmatprep.subr.bf16.mxu0 %v2967
    %3478 = vmatpush1.bf16.msra.mxu0 %v2966
    %3479 = vmatprep.mubr.bf16.mxu0 %v1637
    %3480 = vmatmul.mubr.bf16.gmra.mrb[0].mxu0 %v1636
    %v3481 = vpop.f32.mrb[0].mxu0
    %v3482 = vadd.f32 %v3409, %v3481
    %v3483 = vpop.f32.mrb[0].mxu0
    %v3484 = vadd.f32 %v3411, %v3483
    %v3485 = vpop.f32.mrb[0].mxu0
    %v3486 = vadd.f32 %v3413, %v3485
    %v3487 = vpop.f32.mrb[0].mxu0
    %v3488 = vadd.f32 %v3415, %v3487
    %3489 = vmatprep.mubr.bf16.mxu0 %v1641
    %3490 = vmatmul.mubr.bf16.gmra.mrb[0].mxu0 %v1640
    %v3491 = vpop.f32.mrb[0].mxu0
    %v3492 = vadd.f32 %v3419, %v3491
    %v3493 = vpop.f32.mrb[0].mxu0
    %v3494 = vadd.f32 %v3421, %v3493
    %v3495 = vpop.f32.mrb[0].mxu0
    %v3496 = vadd.f32 %v3423, %v3495
    %v3497 = vpop.f32.mrb[0].mxu0
    %v3498 = vadd.f32 %v3425, %v3497
    %3499 = vmatprep.mubr.bf16.mxu0 %v1645
    %3500 = vmatmul.mubr.bf16.gmra.mrb[0].mxu0 %v1644
    %v3501 = vpop.f32.mrb[0].mxu0
    %v3502 = vadd.f32 %v3429, %v3501
    %v3503 = vpop.f32.mrb[0].mxu0
    %v3504 = vadd.f32 %v3431, %v3503
    %v3505 = vpop.f32.mrb[0].mxu0
    %v3506 = vadd.f32 %v3433, %v3505
    %v3507 = vpop.f32.mrb[0].mxu0
    %v3508 = vadd.f32 %v3435, %v3507
    %3509 = vmatprep.mubr.bf16.mxu0 %v1649
    %3510 = vmatmul.mubr.bf16.gmra.mrb[0].mxu0 %v1648
    %v3511 = vpop.f32.mrb[0].mxu0
    %v3512 = vadd.f32 %v3439, %v3511
    %v3513 = vpop.f32.mrb[0].mxu0
    %v3514 = vadd.f32 %v3441, %v3513
    %v3515 = vpop.f32.mrb[0].mxu0
    %v3516 = vadd.f32 %v3443, %v3515
    %v3517 = vpop.f32.mrb[0].mxu0
    %v3518 = vadd.f32 %v3445, %v3517
    %3519 = vdwg.mxu0
    %3520 = vmatprep.subr.bf16.mxu0 %v2721
    %3521 = vmatpush1.bf16.msra.mxu0 %v2720
    %3522 = vmatprep.subr.bf16.mxu0 %v2729
    %3523 = vmatpush1.bf16.msra.mxu0 %v2728
    %3524 = vmatprep.subr.bf16.mxu0 %v2737
    %3525 = vmatpush1.bf16.msra.mxu0 %v2736
    %3526 = vmatprep.subr.bf16.mxu0 %v2745
    %3527 = vmatpush1.bf16.msra.mxu0 %v2744
    %3528 = vmatprep.subr.bf16.mxu0 %v2753
    %3529 = vmatpush1.bf16.msra.mxu0 %v2752
    %3530 = vmatprep.subr.bf16.mxu0 %v2761
    %3531 = vmatpush1.bf16.msra.mxu0 %v2760
    %3532 = vmatprep.subr.bf16.mxu0 %v2769
    %3533 = vmatpush1.bf16.msra.mxu0 %v2768
    %3534 = vmatprep.subr.bf16.mxu0 %v2777
    %3535 = vmatpush1.bf16.msra.mxu0 %v2776
    %3536 = vmatprep.subr.bf16.mxu0 %v2785
    %3537 = vmatpush1.bf16.msra.mxu0 %v2784
    %3538 = vmatprep.subr.bf16.mxu0 %v2793
    %3539 = vmatpush1.bf16.msra.mxu0 %v2792
    %3540 = vmatprep.subr.bf16.mxu0 %v2801
    %3541 = vmatpush1.bf16.msra.mxu0 %v2800
    %3542 = vmatprep.subr.bf16.mxu0 %v2809
    %3543 = vmatpush1.bf16.msra.mxu0 %v2808
    %3544 = vmatprep.subr.bf16.mxu0 %v2817
    %3545 = vmatpush1.bf16.msra.mxu0 %v2816
    %3546 = vmatprep.subr.bf16.mxu0 %v2825
    %3547 = vmatpush1.bf16.msra.mxu0 %v2824
    %3548 = vmatprep.subr.bf16.mxu0 %v2833
    %3549 = vmatpush1.bf16.msra.mxu0 %v2832
    %3550 = vmatprep.subr.bf16.mxu0 %v2841
    %3551 = vmatpush1.bf16.msra.mxu0 %v2840
    %3552 = vmatprep.mubr.bf16.mxu0 %v1635
    %3553 = vmatmul.mubr.bf16.gmra.mrb[0].mxu0 %v1634
    %v3554 = vpop.f32.mrb[0].mxu0
    %v3555 = vadd.f32 %v1927, %v3554
    %v3556 = vpop.f32.mrb[0].mxu0
    %v3557 = vadd.f32 %v1931, %v3556
    %v3558 = vpop.f32.mrb[0].mxu0
    %v3559 = vadd.f32 %v1927, %v3558
    %v3560 = vpop.f32.mrb[0].mxu0
    %v3561 = vadd.f32 %v1931, %v3560
    %3562 = vmatprep.mubr.bf16.mxu0 %v1639
    %3563 = vmatmul.mubr.bf16.gmra.mrb[0].mxu0 %v1638
    %v3564 = vpop.f32.mrb[0].mxu0
    %v3565 = vadd.f32 %v1927, %v3564
    %v3566 = vpop.f32.mrb[0].mxu0
    %v3567 = vadd.f32 %v1931, %v3566
    %v3568 = vpop.f32.mrb[0].mxu0
    %v3569 = vadd.f32 %v1927, %v3568
    %v3570 = vpop.f32.mrb[0].mxu0
    %v3571 = vadd.f32 %v1931, %v3570
    %3572 = vmatprep.mubr.bf16.mxu0 %v1643
    %3573 = vmatmul.mubr.bf16.gmra.mrb[0].mxu0 %v1642
    %v3574 = vpop.f32.mrb[0].mxu0
    %v3575 = vadd.f32 %v1927, %v3574
    %v3576 = vpop.f32.mrb[0].mxu0
    %v3577 = vadd.f32 %v1931, %v3576
    %v3578 = vpop.f32.mrb[0].mxu0
    %v3579 = vadd.f32 %v1927, %v3578
    %v3580 = vpop.f32.mrb[0].mxu0
    %v3581 = vadd.f32 %v1931, %v3580
    %3582 = vmatprep.mubr.bf16.mxu0 %v1647
    %3583 = vmatmul.mubr.bf16.gmra.mrb[0].mxu0 %v1646
    %v3584 = vpop.f32.mrb[0].mxu0
    %v3585 = vadd.f32 %v1927, %v3584
    %v3586 = vpop.f32.mrb[0].mxu0
    %v3587 = vadd.f32 %v1931, %v3586
    %v3588 = vpop.f32.mrb[0].mxu0
    %v3589 = vadd.f32 %v1927, %v3588
    %v3590 = vpop.f32.mrb[0].mxu0
    %v3591 = vadd.f32 %v1931, %v3590
    %3592 = vdwg.mxu0
    %3593 = vmatprep.subr.bf16.mxu0 %v2849
    %3594 = vmatpush1.bf16.msra.mxu0 %v2848
    %3595 = vmatprep.subr.bf16.mxu0 %v2857
    %3596 = vmatpush1.bf16.msra.mxu0 %v2856
    %3597 = vmatprep.subr.bf16.mxu0 %v2865
    %3598 = vmatpush1.bf16.msra.mxu0 %v2864
    %3599 = vmatprep.subr.bf16.mxu0 %v2873
    %3600 = vmatpush1.bf16.msra.mxu0 %v2872
    %3601 = vmatprep.subr.bf16.mxu0 %v2881
    %3602 = vmatpush1.bf16.msra.mxu0 %v2880
    %3603 = vmatprep.subr.bf16.mxu0 %v2889
    %3604 = vmatpush1.bf16.msra.mxu0 %v2888
    %3605 = vmatprep.subr.bf16.mxu0 %v2897
    %3606 = vmatpush1.bf16.msra.mxu0 %v2896
    %3607 = vmatprep.subr.bf16.mxu0 %v2905
    %3608 = vmatpush1.bf16.msra.mxu0 %v2904
    %3609 = vmatprep.subr.bf16.mxu0 %v2913
    %3610 = vmatpush1.bf16.msra.mxu0 %v2912
    %3611 = vmatprep.subr.bf16.mxu0 %v2921
    %3612 = vmatpush1.bf16.msra.mxu0 %v2920
    %3613 = vmatprep.subr.bf16.mxu0 %v2929
    %3614 = vmatpush1.bf16.msra.mxu0 %v2928
    %3615 = vmatprep.subr.bf16.mxu0 %v2937
    %3616 = vmatpush1.bf16.msra.mxu0 %v2936
    %3617 = vmatprep.subr.bf16.mxu0 %v2945
    %3618 = vmatpush1.bf16.msra.mxu0 %v2944
    %3619 = vmatprep.subr.bf16.mxu0 %v2953
    %3620 = vmatpush1.bf16.msra.mxu0 %v2952
    %3621 = vmatprep.subr.bf16.mxu0 %v2961
    %3622 = vmatpush1.bf16.msra.mxu0 %v2960
    %3623 = vmatprep.subr.bf16.mxu0 %v2969
    %3624 = vmatpush1.bf16.msra.mxu0 %v2968
    %3625 = vmatprep.mubr.bf16.mxu0 %v1637
    %3626 = vmatmul.mubr.bf16.gmra.mrb[0].mxu0 %v1636
    %v3627 = vpop.f32.mrb[0].mxu0
    %v3628 = vadd.f32 %v3555, %v3627
    %v3629 = vpop.f32.mrb[0].mxu0
    %v3630 = vadd.f32 %v3557, %v3629
    %v3631 = vpop.f32.mrb[0].mxu0
    %v3632 = vadd.f32 %v3559, %v3631
    %v3633 = vpop.f32.mrb[0].mxu0
    %v3634 = vadd.f32 %v3561, %v3633
    %3635 = vmatprep.mubr.bf16.mxu0 %v1641
    %3636 = vmatmul.mubr.bf16.gmra.mrb[0].mxu0 %v1640
    %v3637 = vpop.f32.mrb[0].mxu0
    %v3638 = vadd.f32 %v3565, %v3637
    %v3639 = vpop.f32.mrb[0].mxu0
    %v3640 = vadd.f32 %v3567, %v3639
    %v3641 = vpop.f32.mrb[0].mxu0
    %v3642 = vadd.f32 %v3569, %v3641
    %v3643 = vpop.f32.mrb[0].mxu0
    %v3644 = vadd.f32 %v3571, %v3643
    %3645 = vmatprep.mubr.bf16.mxu0 %v1645
    %3646 = vmatmul.mubr.bf16.gmra.mrb[0].mxu0 %v1644
    %v3647 = vpop.f32.mrb[0].mxu0
    %v3648 = vadd.f32 %v3575, %v3647
    %v3649 = vpop.f32.mrb[0].mxu0
    %v3650 = vadd.f32 %v3577, %v3649
    %v3651 = vpop.f32.mrb[0].mxu0
    %v3652 = vadd.f32 %v3579, %v3651
    %v3653 = vpop.f32.mrb[0].mxu0
    %v3654 = vadd.f32 %v3581, %v3653
    %3655 = vmatprep.mubr.bf16.mxu0 %v1649
    %3656 = vmatmul.mubr.bf16.gmra.mrb[0].mxu0 %v1648
    %v3657 = vpop.f32.mrb[0].mxu0
    %v3658 = vadd.f32 %v3585, %v3657
    %v3659 = vpop.f32.mrb[0].mxu0
    %v3660 = vadd.f32 %v3587, %v3659
    %v3661 = vpop.f32.mrb[0].mxu0
    %v3662 = vadd.f32 %v3589, %v3661
    %v3663 = vpop.f32.mrb[0].mxu0
    %v3664 = vadd.f32 %v3591, %v3663
    %3665 = vdwg.mxu0
    %3666 = vmatprep.subr.bf16.mxu0 %v2723
    %3667 = vmatpush1.bf16.msra.mxu0 %v2722
    %3668 = vmatprep.subr.bf16.mxu0 %v2731
    %3669 = vmatpush1.bf16.msra.mxu0 %v2730
    %3670 = vmatprep.subr.bf16.mxu0 %v2739
    %3671 = vmatpush1.bf16.msra.mxu0 %v2738
    %3672 = vmatprep.subr.bf16.mxu0 %v2747
    %3673 = vmatpush1.bf16.msra.mxu0 %v2746
    %3674 = vmatprep.subr.bf16.mxu0 %v2755
    %3675 = vmatpush1.bf16.msra.mxu0 %v2754
    %3676 = vmatprep.subr.bf16.mxu0 %v2763
    %3677 = vmatpush1.bf16.msra.mxu0 %v2762
    %3678 = vmatprep.subr.bf16.mxu0 %v2771
    %3679 = vmatpush1.bf16.msra.mxu0 %v2770
    %3680 = vmatprep.subr.bf16.mxu0 %v2779
    %3681 = vmatpush1.bf16.msra.mxu0 %v2778
    %3682 = vmatprep.subr.bf16.mxu0 %v2787
    %3683 = vmatpush1.bf16.msra.mxu0 %v2786
    %3684 = vmatprep.subr.bf16.mxu0 %v2795
    %3685 = vmatpush1.bf16.msra.mxu0 %v2794
    %3686 = vmatprep.subr.bf16.mxu0 %v2803
    %3687 = vmatpush1.bf16.msra.mxu0 %v2802
    %3688 = vmatprep.subr.bf16.mxu0 %v2811
    %3689 = vmatpush1.bf16.msra.mxu0 %v2810
    %3690 = vmatprep.subr.bf16.mxu0 %v2819
    %3691 = vmatpush1.bf16.msra.mxu0 %v2818
    %3692 = vmatprep.subr.bf16.mxu0 %v2827
    %3693 = vmatpush1.bf16.msra.mxu0 %v2826
    %3694 = vmatprep.subr.bf16.mxu0 %v2835
    %3695 = vmatpush1.bf16.msra.mxu0 %v2834
    %3696 = vmatprep.subr.bf16.mxu0 %v2843
    %3697 = vmatpush1.bf16.msra.mxu0 %v2842
    %3698 = vmatprep.mubr.bf16.mxu0 %v1635
    %3699 = vmatmul.mubr.bf16.gmra.mrb[0].mxu0 %v1634
    %v3700 = vpop.f32.mrb[0].mxu0
    %v3701 = vadd.f32 %v1935, %v3700
    %v3702 = vpop.f32.mrb[0].mxu0
    %v3703 = vadd.f32 %v1939, %v3702
    %v3704 = vpop.f32.mrb[0].mxu0
    %v3705 = vadd.f32 %v1935, %v3704
    %v3706 = vpop.f32.mrb[0].mxu0
    %v3707 = vadd.f32 %v1939, %v3706
    %3708 = vmatprep.mubr.bf16.mxu0 %v1639
    %3709 = vmatmul.mubr.bf16.gmra.mrb[0].mxu0 %v1638
    %v3710 = vpop.f32.mrb[0].mxu0
    %v3711 = vadd.f32 %v1935, %v3710
    %v3712 = vpop.f32.mrb[0].mxu0
    %v3713 = vadd.f32 %v1939, %v3712
    %v3714 = vpop.f32.mrb[0].mxu0
    %v3715 = vadd.f32 %v1935, %v3714
    %v3716 = vpop.f32.mrb[0].mxu0
    %v3717 = vadd.f32 %v1939, %v3716
    %3718 = vmatprep.mubr.bf16.mxu0 %v1643
    %3719 = vmatmul.mubr.bf16.gmra.mrb[0].mxu0 %v1642
    %v3720 = vpop.f32.mrb[0].mxu0
    %v3721 = vadd.f32 %v1935, %v3720
    %v3722 = vpop.f32.mrb[0].mxu0
    %v3723 = vadd.f32 %v1939, %v3722
    %v3724 = vpop.f32.mrb[0].mxu0
    %v3725 = vadd.f32 %v1935, %v3724
    %v3726 = vpop.f32.mrb[0].mxu0
    %v3727 = vadd.f32 %v1939, %v3726
    %3728 = vmatprep.mubr.bf16.mxu0 %v1647
    %3729 = vmatmul.mubr.bf16.gmra.mrb[0].mxu0 %v1646
    %v3730 = vpop.f32.mrb[0].mxu0
    %v3731 = vadd.f32 %v1935, %v3730
    %v3732 = vpop.f32.mrb[0].mxu0
    %v3733 = vadd.f32 %v1939, %v3732
    %v3734 = vpop.f32.mrb[0].mxu0
    %v3735 = vadd.f32 %v1935, %v3734
    %v3736 = vpop.f32.mrb[0].mxu0
    %v3737 = vadd.f32 %v1939, %v3736
    %3738 = vdwg.mxu0
    %3739 = vmatprep.subr.bf16.mxu0 %v2851
    %3740 = vmatpush1.bf16.msra.mxu0 %v2850
    %3741 = vmatprep.subr.bf16.mxu0 %v2859
    %3742 = vmatpush1.bf16.msra.mxu0 %v2858
    %3743 = vmatprep.subr.bf16.mxu0 %v2867
    %3744 = vmatpush1.bf16.msra.mxu0 %v2866
    %3745 = vmatprep.subr.bf16.mxu0 %v2875
    %3746 = vmatpush1.bf16.msra.mxu0 %v2874
    %3747 = vmatprep.subr.bf16.mxu0 %v2883
    %3748 = vmatpush1.bf16.msra.mxu0 %v2882
    %3749 = vmatprep.subr.bf16.mxu0 %v2891
    %3750 = vmatpush1.bf16.msra.mxu0 %v2890
    %3751 = vmatprep.subr.bf16.mxu0 %v2899
    %3752 = vmatpush1.bf16.msra.mxu0 %v2898
    %3753 = vmatprep.subr.bf16.mxu0 %v2907
    %3754 = vmatpush1.bf16.msra.mxu0 %v2906
    %3755 = vmatprep.subr.bf16.mxu0 %v2915
    %3756 = vmatpush1.bf16.msra.mxu0 %v2914
    %3757 = vmatprep.subr.bf16.mxu0 %v2923
    %3758 = vmatpush1.bf16.msra.mxu0 %v2922
    %3759 = vmatprep.subr.bf16.mxu0 %v2931
    %3760 = vmatpush1.bf16.msra.mxu0 %v2930
    %3761 = vmatprep.subr.bf16.mxu0 %v2939
    %3762 = vmatpush1.bf16.msra.mxu0 %v2938
    %3763 = vmatprep.subr.bf16.mxu0 %v2947
    %3764 = vmatpush1.bf16.msra.mxu0 %v2946
    %3765 = vmatprep.subr.bf16.mxu0 %v2955
    %3766 = vmatpush1.bf16.msra.mxu0 %v2954
    %3767 = vmatprep.subr.bf16.mxu0 %v2963
    %3768 = vmatpush1.bf16.msra.mxu0 %v2962
    %3769 = vmatprep.subr.bf16.mxu0 %v2971
    %3770 = vmatpush1.bf16.msra.mxu0 %v2970
    %3771 = vmatprep.mubr.bf16.mxu0 %v1637
    %3772 = vmatmul.mubr.bf16.gmra.mrb[0].mxu0 %v1636
    %v3773 = vpop.f32.mrb[0].mxu0
    %v3774 = vadd.f32 %v3701, %v3773
    %v3775 = vpop.f32.mrb[0].mxu0
    %v3776 = vadd.f32 %v3703, %v3775
    %v3777 = vpop.f32.mrb[0].mxu0
    %v3778 = vadd.f32 %v3705, %v3777
    %v3779 = vpop.f32.mrb[0].mxu0
    %v3780 = vadd.f32 %v3707, %v3779
    %3781 = vmatprep.mubr.bf16.mxu0 %v1641
    %3782 = vmatmul.mubr.bf16.gmra.mrb[0].mxu0 %v1640
    %v3783 = vpop.f32.mrb[0].mxu0
    %v3784 = vadd.f32 %v3711, %v3783
    %v3785 = vpop.f32.mrb[0].mxu0
    %v3786 = vadd.f32 %v3713, %v3785
    %v3787 = vpop.f32.mrb[0].mxu0
    %v3788 = vadd.f32 %v3715, %v3787
    %v3789 = vpop.f32.mrb[0].mxu0
    %v3790 = vadd.f32 %v3717, %v3789
    %3791 = vmatprep.mubr.bf16.mxu0 %v1645
    %3792 = vmatmul.mubr.bf16.gmra.mrb[0].mxu0 %v1644
    %v3793 = vpop.f32.mrb[0].mxu0
    %v3794 = vadd.f32 %v3721, %v3793
    %v3795 = vpop.f32.mrb[0].mxu0
    %v3796 = vadd.f32 %v3723, %v3795
    %v3797 = vpop.f32.mrb[0].mxu0
    %v3798 = vadd.f32 %v3725, %v3797
    %v3799 = vpop.f32.mrb[0].mxu0
    %v3800 = vadd.f32 %v3727, %v3799
    %3801 = vmatprep.mubr.bf16.mxu0 %v1649
    %3802 = vmatmul.mubr.bf16.gmra.mrb[0].mxu0 %v1648
    %v3803 = vpop.f32.mrb[0].mxu0
    %v3804 = vadd.f32 %v3731, %v3803
    %v3805 = vpop.f32.mrb[0].mxu0
    %v3806 = vadd.f32 %v3733, %v3805
    %v3807 = vpop.f32.mrb[0].mxu0
    %v3808 = vadd.f32 %v3735, %v3807
    %v3809 = vpop.f32.mrb[0].mxu0
    %v3810 = vadd.f32 %v3737, %v3809
    %3811 = vdwg.mxu0
    %v3812 = vadd.f32 %v3336, %v3340
    %v3813 = vadd.f32 %v3812, %v3346
    %v3814 = vadd.f32 %v3813, %v3350
    %v3815 = vadd.f32 %v3814, %v3356
    %v3816 = vadd.f32 %v3815, %v3360
    %v3817 = vadd.f32 %v3816, %v3366
    %v3818 = vadd.f32 %v3817, %v3370
    %v3819 = vrot.slane %v3818, 4
    %v3820 = vadd.f32 %v3818, %v3819
    %v3821 = vrot.slane %v3820, 2
    %v3822 = vadd.f32 %v3820, %v3821
    %v3823 = vrot.slane %v3822, 1
    %v3824 = vadd.f32 %v3822, %v3823
    %v3825 = vadd.f32 %v3338, %v3342
    %v3826 = vadd.f32 %v3825, %v3348
    %v3827 = vadd.f32 %v3826, %v3352
    %v3828 = vadd.f32 %v3827, %v3358
    %v3829 = vadd.f32 %v3828, %v3362
    %v3830 = vadd.f32 %v3829, %v3368
    %v3831 = vadd.f32 %v3830, %v3372
    %v3832 = vrot.slane %v3831, 4
    %v3833 = vadd.f32 %v3831, %v3832
    %v3834 = vrot.slane %v3833, 2
    %v3835 = vadd.f32 %v3833, %v3834
    %v3836 = vrot.slane %v3835, 1
    %v3837 = vadd.f32 %v3835, %v3836
    %v3838 = vadd.f32 %v3482, %v3486
    %v3839 = vadd.f32 %v3838, %v3492
    %v3840 = vadd.f32 %v3839, %v3496
    %v3841 = vadd.f32 %v3840, %v3502
    %v3842 = vadd.f32 %v3841, %v3506
    %v3843 = vadd.f32 %v3842, %v3512
    %v3844 = vadd.f32 %v3843, %v3516
    %v3845 = vrot.slane %v3844, 4
    %v3846 = vadd.f32 %v3844, %v3845
    %v3847 = vrot.slane %v3846, 2
    %v3848 = vadd.f32 %v3846, %v3847
    %v3849 = vrot.slane %v3848, 1
    %v3850 = vadd.f32 %v3848, %v3849
    %v3851 = vadd.f32 %v3484, %v3488
    %v3852 = vadd.f32 %v3851, %v3494
    %v3853 = vadd.f32 %v3852, %v3498
    %v3854 = vadd.f32 %v3853, %v3504
    %v3855 = vadd.f32 %v3854, %v3508
    %v3856 = vadd.f32 %v3855, %v3514
    %v3857 = vadd.f32 %v3856, %v3518
    %v3858 = vrot.slane %v3857, 4
    %v3859 = vadd.f32 %v3857, %v3858
    %v3860 = vrot.slane %v3859, 2
    %v3861 = vadd.f32 %v3859, %v3860
    %v3862 = vrot.slane %v3861, 1
    %v3863 = vadd.f32 %v3861, %v3862
    %v3864 = vadd.f32 %v3628, %v3632
    %v3865 = vadd.f32 %v3864, %v3638
    %v3866 = vadd.f32 %v3865, %v3642
    %v3867 = vadd.f32 %v3866, %v3648
    %v3868 = vadd.f32 %v3867, %v3652
    %v3869 = vadd.f32 %v3868, %v3658
    %v3870 = vadd.f32 %v3869, %v3662
    %v3871 = vrot.slane %v3870, 4
    %v3872 = vadd.f32 %v3870, %v3871
    %v3873 = vrot.slane %v3872, 2
    %v3874 = vadd.f32 %v3872, %v3873
    %v3875 = vrot.slane %v3874, 1
    %v3876 = vadd.f32 %v3874, %v3875
    %v3877 = vadd.f32 %v3630, %v3634
    %v3878 = vadd.f32 %v3877, %v3640
    %v3879 = vadd.f32 %v3878, %v3644
    %v3880 = vadd.f32 %v3879, %v3650
    %v3881 = vadd.f32 %v3880, %v3654
    %v3882 = vadd.f32 %v3881, %v3660
    %v3883 = vadd.f32 %v3882, %v3664
    %v3884 = vrot.slane %v3883, 4
    %v3885 = vadd.f32 %v3883, %v3884
    %v3886 = vrot.slane %v3885, 2
    %v3887 = vadd.f32 %v3885, %v3886
    %v3888 = vrot.slane %v3887, 1
    %v3889 = vadd.f32 %v3887, %v3888
    %v3890 = vadd.f32 %v3774, %v3778
    %v3891 = vadd.f32 %v3890, %v3784
    %v3892 = vadd.f32 %v3891, %v3788
    %v3893 = vadd.f32 %v3892, %v3794
    %v3894 = vadd.f32 %v3893, %v3798
    %v3895 = vadd.f32 %v3894, %v3804
    %v3896 = vadd.f32 %v3895, %v3808
    %v3897 = vrot.slane %v3896, 4
    %v3898 = vadd.f32 %v3896, %v3897
    %v3899 = vrot.slane %v3898, 2
    %v3900 = vadd.f32 %v3898, %v3899
    %v3901 = vrot.slane %v3900, 1
    %v3902 = vadd.f32 %v3900, %v3901
    %v3903 = vadd.f32 %v3776, %v3780
    %v3904 = vadd.f32 %v3903, %v3786
    %v3905 = vadd.f32 %v3904, %v3790
    %v3906 = vadd.f32 %v3905, %v3796
    %v3907 = vadd.f32 %v3906, %v3800
    %v3908 = vadd.f32 %v3907, %v3806
    %v3909 = vadd.f32 %v3908, %v3810
    %v3910 = vrot.slane %v3909, 4
    %v3911 = vadd.f32 %v3909, %v3910
    %v3912 = vrot.slane %v3911, 2
    %v3913 = vadd.f32 %v3911, %v3912
    %v3914 = vrot.slane %v3913, 1
    %v3915 = vadd.f32 %v3913, %v3914
    %v3916 = vmul.f32 %v3824, 0.015625
    %v3917 = vmul.f32 %v3837, 0.015625
    %v3918 = vmul.f32 %v3850, 0.015625
    %v3919 = vmul.f32 %v3863, 0.015625
    %v3920 = vmul.f32 %v3876, 0.015625
    %v3921 = vmul.f32 %v3889, 0.015625
    %v3922 = vmul.f32 %v3902, 0.015625
    %v3923 = vmul.f32 %v3915, 0.015625
    %v3924 = vsub.f32 %v3336, %v3916
    %v3925 = vsub.f32 %v3338, %v3917
    %v3926 = vsub.f32 %v3482, %v3918
    %v3927 = vsub.f32 %v3484, %v3919
    %v3928 = vsub.f32 %v3628, %v3920
    %v3929 = vsub.f32 %v3630, %v3921
    %v3930 = vsub.f32 %v3774, %v3922
    %v3931 = vsub.f32 %v3776, %v3923
    %v3932 = vsub.f32 %v3340, %v3916
    %v3933 = vsub.f32 %v3342, %v3917
    %v3934 = vsub.f32 %v3486, %v3918
    %v3935 = vsub.f32 %v3488, %v3919
    %v3936 = vsub.f32 %v3632, %v3920
    %v3937 = vsub.f32 %v3634, %v3921
    %v3938 = vsub.f32 %v3778, %v3922
    %v3939 = vsub.f32 %v3780, %v3923
    %v3940 = vsub.f32 %v3346, %v3916
    %v3941 = vsub.f32 %v3348, %v3917
    %v3942 = vsub.f32 %v3492, %v3918
    %v3943 = vsub.f32 %v3494, %v3919
    %v3944 = vsub.f32 %v3638, %v3920
    %v3945 = vsub.f32 %v3640, %v3921
    %v3946 = vsub.f32 %v3784, %v3922
    %v3947 = vsub.f32 %v3786, %v3923
    %v3948 = vsub.f32 %v3350, %v3916
    %v3949 = vsub.f32 %v3352, %v3917
    %v3950 = vsub.f32 %v3496, %v3918
    %v3951 = vsub.f32 %v3498, %v3919
    %v3952 = vsub.f32 %v3642, %v3920
    %v3953 = vsub.f32 %v3644, %v3921
    %v3954 = vsub.f32 %v3788, %v3922
    %v3955 = vsub.f32 %v3790, %v3923
    %v3956 = vsub.f32 %v3356, %v3916
    %v3957 = vsub.f32 %v3358, %v3917
    %v3958 = vsub.f32 %v3502, %v3918
    %v3959 = vsub.f32 %v3504, %v3919
    %v3960 = vsub.f32 %v3648, %v3920
    %v3961 = vsub.f32 %v3650, %v3921
    %v3962 = vsub.f32 %v3794, %v3922
    %v3963 = vsub.f32 %v3796, %v3923
    %v3964 = vsub.f32 %v3360, %v3916
    %v3965 = vsub.f32 %v3362, %v3917
    %v3966 = vsub.f32 %v3506, %v3918
    %v3967 = vsub.f32 %v3508, %v3919
    %v3968 = vsub.f32 %v3652, %v3920
    %v3969 = vsub.f32 %v3654, %v3921
    %v3970 = vsub.f32 %v3798, %v3922
    %v3971 = vsub.f32 %v3800, %v3923
    %v3972 = vsub.f32 %v3366, %v3916
    %v3973 = vsub.f32 %v3368, %v3917
    %v3974 = vsub.f32 %v3512, %v3918
    %v3975 = vsub.f32 %v3514, %v3919
    %v3976 = vsub.f32 %v3658, %v3920
    %v3977 = vsub.f32 %v3660, %v3921
    %v3978 = vsub.f32 %v3804, %v3922
    %v3979 = vsub.f32 %v3806, %v3923
    %v3980 = vsub.f32 %v3370, %v3916
    %v3981 = vsub.f32 %v3372, %v3917
    %v3982 = vsub.f32 %v3516, %v3918
    %v3983 = vsub.f32 %v3518, %v3919
    %v3984 = vsub.f32 %v3662, %v3920
    %v3985 = vsub.f32 %v3664, %v3921
    %v3986 = vsub.f32 %v3808, %v3922
    %v3987 = vsub.f32 %v3810, %v3923
    %v3988 = vmul.f32 %v3924, %v3924
    %v3989 = vmul.f32 %v3925, %v3925
    %v3990 = vmul.f32 %v3926, %v3926
    %v3991 = vmul.f32 %v3927, %v3927
    %v3992 = vmul.f32 %v3928, %v3928
    %v3993 = vmul.f32 %v3929, %v3929
    %v3994 = vmul.f32 %v3930, %v3930
    %v3995 = vmul.f32 %v3931, %v3931
    %v3996 = vmul.f32 %v3932, %v3932
    %v3997 = vmul.f32 %v3933, %v3933
    %v3998 = vmul.f32 %v3934, %v3934
    %v3999 = vmul.f32 %v3935, %v3935
    %v4000 = vmul.f32 %v3936, %v3936
    %v4001 = vmul.f32 %v3937, %v3937
    %v4002 = vmul.f32 %v3938, %v3938
    %v4003 = vmul.f32 %v3939, %v3939
    %v4004 = vmul.f32 %v3940, %v3940
    %v4005 = vmul.f32 %v3941, %v3941
    %v4006 = vmul.f32 %v3942, %v3942
    %v4007 = vmul.f32 %v3943, %v3943
    %v4008 = vmul.f32 %v3944, %v3944
    %v4009 = vmul.f32 %v3945, %v3945
    %v4010 = vmul.f32 %v3946, %v3946
    %v4011 = vmul.f32 %v3947, %v3947
    %v4012 = vmul.f32 %v3948, %v3948
    %v4013 = vmul.f32 %v3949, %v3949
    %v4014 = vmul.f32 %v3950, %v3950
    %v4015 = vmul.f32 %v3951, %v3951
    %v4016 = vmul.f32 %v3952, %v3952
    %v4017 = vmul.f32 %v3953, %v3953
    %v4018 = vmul.f32 %v3954, %v3954
    %v4019 = vmul.f32 %v3955, %v3955
    %v4020 = vmul.f32 %v3956, %v3956
    %v4021 = vmul.f32 %v3957, %v3957
    %v4022 = vmul.f32 %v3958, %v3958
    %v4023 = vmul.f32 %v3959, %v3959
    %v4024 = vmul.f32 %v3960, %v3960
    %v4025 = vmul.f32 %v3961, %v3961
    %v4026 = vmul.f32 %v3962, %v3962
    %v4027 = vmul.f32 %v3963, %v3963
    %v4028 = vmul.f32 %v3964, %v3964
    %v4029 = vmul.f32 %v3965, %v3965
    %v4030 = vmul.f32 %v3966, %v3966
    %v4031 = vmul.f32 %v3967, %v3967
    %v4032 = vmul.f32 %v3968, %v3968
    %v4033 = vmul.f32 %v3969, %v3969
    %v4034 = vmul.f32 %v3970, %v3970
    %v4035 = vmul.f32 %v3971, %v3971
    %v4036 = vmul.f32 %v3972, %v3972
    %v4037 = vmul.f32 %v3973, %v3973
    %v4038 = vmul.f32 %v3974, %v3974
    %v4039 = vmul.f32 %v3975, %v3975
    %v4040 = vmul.f32 %v3976, %v3976
    %v4041 = vmul.f32 %v3977, %v3977
    %v4042 = vmul.f32 %v3978, %v3978
    %v4043 = vmul.f32 %v3979, %v3979
    %v4044 = vmul.f32 %v3980, %v3980
    %v4045 = vmul.f32 %v3981, %v3981
    %v4046 = vmul.f32 %v3982, %v3982
    %v4047 = vmul.f32 %v3983, %v3983
    %v4048 = vmul.f32 %v3984, %v3984
    %v4049 = vmul.f32 %v3985, %v3985
    %v4050 = vmul.f32 %v3986, %v3986
    %v4051 = vmul.f32 %v3987, %v3987
    %v4052 = vadd.f32 %v3988, %v3996
    %v4053 = vadd.f32 %v4052, %v4004
    %v4054 = vadd.f32 %v4053, %v4012
    %v4055 = vadd.f32 %v4054, %v4020
    %v4056 = vadd.f32 %v4055, %v4028
    %v4057 = vadd.f32 %v4056, %v4036
    %v4058 = vadd.f32 %v4057, %v4044
    %v4059 = vrot.slane %v4058, 4
    %v4060 = vadd.f32 %v4058, %v4059
    %v4061 = vrot.slane %v4060, 2
    %v4062 = vadd.f32 %v4060, %v4061
    %v4063 = vrot.slane %v4062, 1
    %v4064 = vadd.f32 %v4062, %v4063
    %v4065 = vadd.f32 %v3989, %v3997
    %v4066 = vadd.f32 %v4065, %v4005
    %v4067 = vadd.f32 %v4066, %v4013
    %v4068 = vadd.f32 %v4067, %v4021
    %v4069 = vadd.f32 %v4068, %v4029
    %v4070 = vadd.f32 %v4069, %v4037
    %v4071 = vadd.f32 %v4070, %v4045
    %v4072 = vrot.slane %v4071, 4
    %v4073 = vadd.f32 %v4071, %v4072
    %v4074 = vrot.slane %v4073, 2
    %v4075 = vadd.f32 %v4073, %v4074
    %v4076 = vrot.slane %v4075, 1
    %v4077 = vadd.f32 %v4075, %v4076
    %v4078 = vadd.f32 %v3990, %v3998
    %v4079 = vadd.f32 %v4078, %v4006
    %v4080 = vadd.f32 %v4079, %v4014
    %v4081 = vadd.f32 %v4080, %v4022
    %v4082 = vadd.f32 %v4081, %v4030
    %v4083 = vadd.f32 %v4082, %v4038
    %v4084 = vadd.f32 %v4083, %v4046
    %v4085 = vrot.slane %v4084, 4
    %v4086 = vadd.f32 %v4084, %v4085
    %v4087 = vrot.slane %v4086, 2
    %v4088 = vadd.f32 %v4086, %v4087
    %v4089 = vrot.slane %v4088, 1
    %v4090 = vadd.f32 %v4088, %v4089
    %v4091 = vadd.f32 %v3991, %v3999
    %v4092 = vadd.f32 %v4091, %v4007
    %v4093 = vadd.f32 %v4092, %v4015
    %v4094 = vadd.f32 %v4093, %v4023
    %v4095 = vadd.f32 %v4094, %v4031
    %v4096 = vadd.f32 %v4095, %v4039
    %v4097 = vadd.f32 %v4096, %v4047
    %v4098 = vrot.slane %v4097, 4
    %v4099 = vadd.f32 %v4097, %v4098
    %v4100 = vrot.slane %v4099, 2
    %v4101 = vadd.f32 %v4099, %v4100
    %v4102 = vrot.slane %v4101, 1
    %v4103 = vadd.f32 %v4101, %v4102
    %v4104 = vadd.f32 %v3992, %v4000
    %v4105 = vadd.f32 %v4104, %v4008
    %v4106 = vadd.f32 %v4105, %v4016
    %v4107 = vadd.f32 %v4106, %v4024
    %v4108 = vadd.f32 %v4107, %v4032
    %v4109 = vadd.f32 %v4108, %v4040
    %v4110 = vadd.f32 %v4109, %v4048
    %v4111 = vrot.slane %v4110, 4
    %v4112 = vadd.f32 %v4110, %v4111
    %v4113 = vrot.slane %v4112, 2
    %v4114 = vadd.f32 %v4112, %v4113
    %v4115 = vrot.slane %v4114, 1
    %v4116 = vadd.f32 %v4114, %v4115
    %v4117 = vadd.f32 %v3993, %v4001
    %v4118 = vadd.f32 %v4117, %v4009
    %v4119 = vadd.f32 %v4118, %v4017
    %v4120 = vadd.f32 %v4119, %v4025
    %v4121 = vadd.f32 %v4120, %v4033
    %v4122 = vadd.f32 %v4121, %v4041
    %v4123 = vadd.f32 %v4122, %v4049
    %v4124 = vrot.slane %v4123, 4
    %v4125 = vadd.f32 %v4123, %v4124
    %v4126 = vrot.slane %v4125, 2
    %v4127 = vadd.f32 %v4125, %v4126
    %v4128 = vrot.slane %v4127, 1
    %v4129 = vadd.f32 %v4127, %v4128
    %v4130 = vadd.f32 %v3994, %v4002
    %v4131 = vadd.f32 %v4130, %v4010
    %v4132 = vadd.f32 %v4131, %v4018
    %v4133 = vadd.f32 %v4132, %v4026
    %v4134 = vadd.f32 %v4133, %v4034
    %v4135 = vadd.f32 %v4134, %v4042
    %v4136 = vadd.f32 %v4135, %v4050
    %v4137 = vrot.slane %v4136, 4
    %v4138 = vadd.f32 %v4136, %v4137
    %v4139 = vrot.slane %v4138, 2
    %v4140 = vadd.f32 %v4138, %v4139
    %v4141 = vrot.slane %v4140, 1
    %v4142 = vadd.f32 %v4140, %v4141
    %v4143 = vadd.f32 %v3995, %v4003
    %v4144 = vadd.f32 %v4143, %v4011
    %v4145 = vadd.f32 %v4144, %v4019
    %v4146 = vadd.f32 %v4145, %v4027
    %v4147 = vadd.f32 %v4146, %v4035
    %v4148 = vadd.f32 %v4147, %v4043
    %v4149 = vadd.f32 %v4148, %v4051
    %v4150 = vrot.slane %v4149, 4
    %v4151 = vadd.f32 %v4149, %v4150
    %v4152 = vrot.slane %v4151, 2
    %v4153 = vadd.f32 %v4151, %v4152
    %v4154 = vrot.slane %v4153, 1
    %v4155 = vadd.f32 %v4153, %v4154
    %v4156 = vmul.f32 %v4064, 0.015625
    %v4157 = vmul.f32 %v4077, 0.015625
    %v4158 = vmul.f32 %v4090, 0.015625
    %v4159 = vmul.f32 %v4103, 0.015625
    %v4160 = vmul.f32 %v4116, 0.015625
    %v4161 = vmul.f32 %v4129, 0.015625
    %v4162 = vmul.f32 %v4142, 0.015625
    %v4163 = vmul.f32 %v4155, 0.015625
    %v4164 = vld [vmem:[%s13] sm:$0xff]
    %v4165 = vadd.f32 %v4156, 1e-05
    %v4166 = vadd.f32 %v4157, 1e-05
    %v4167 = vadd.f32 %v4158, 1e-05
    %v4168 = vadd.f32 %v4159, 1e-05
    %v4169 = vadd.f32 %v4160, 1e-05
    %v4170 = vadd.f32 %v4161, 1e-05
    %v4171 = vadd.f32 %v4162, 1e-05
    %v4172 = vadd.f32 %v4163, 1e-05
    %v4173 = vrsqrt.pop %v4165
    %v4174 = vrsqrt.pop %v4166
    %v4175 = vrsqrt.pop %v4167
    %v4176 = vrsqrt.pop %v4168
    %v4177 = vrsqrt.pop %v4169
    %v4178 = vrsqrt.pop %v4170
    %v4179 = vrsqrt.pop %v4171
    %v4180 = vrsqrt.pop %v4172
    %v4189 = vcombine.low %v4173, %v4174
    %v4190 = vcombine.low %v4175, %v4176
    %v4191 = vcombine.low %v4177, %v4178
    %v4192 = vcombine.low %v4179, %v4180
    %v4194 = vunpack.c.l.s4 1966171168
    %v4195 = vunpack.c.0.s8 %v4194
    %v4196 = vlaneseq
    %v4197 = vshrl.u32 %v4196, 7
    %v4198 = vsub.s32 %v4195, %v4197
    %v4199 = vrot.slane %v4189, %v4198
    %v4201 = vunpack.c.l.s4 1966171168
    %v4202 = vunpack.c.0.s8 %v4201
    %v4203 = vlaneseq
    %v4204 = vshrl.u32 %v4203, 7
    %v4205 = vsub.s32 %v4202, %v4204
    %v4206 = vrot.slane %v4190, %v4205
    %v4208 = vunpack.c.l.s4 1966171168
    %v4209 = vunpack.c.0.s8 %v4208
    %v4210 = vlaneseq
    %v4211 = vshrl.u32 %v4210, 7
    %v4212 = vsub.s32 %v4209, %v4211
    %v4213 = vrot.slane %v4191, %v4212
    %v4215 = vunpack.c.l.s4 1966171168
    %v4216 = vunpack.c.0.s8 %v4215
    %v4217 = vlaneseq
    %v4218 = vshrl.u32 %v4217, 7
    %v4219 = vsub.s32 %v4216, %v4218
    %v4220 = vrot.slane %v4192, %v4219
    %v4221 = vcombine.low %v4199, %v4206
    %v4222 = vcombine.low %v4213, %v4220
    %v4224 = vunpack.c.l.s4 1966171168
    %v4225 = vunpack.c.0.s8 %v4224
    %v4226 = vlaneseq
    %v4227 = vshrl.u32 %v4226, 7
    %v4228 = vsub.s32 %v4225, %v4227
    %v4229 = vrot.slane %v4221, %v4228
    %v4231 = vunpack.c.l.s4 1966171168
    %v4232 = vunpack.c.0.s8 %v4231
    %v4233 = vlaneseq
    %v4234 = vshrl.u32 %v4233, 7
    %v4235 = vsub.s32 %v4232, %v4234
    %v4236 = vrot.slane %v4222, %v4235
    %v4237 = vcombine.low %v4229, %v4236
    %v4239 = vmul.f32 %v4164, %v4237
    %v4241 = vlaneseq
    %v4242 = vshrl.u32 %v4241, 7
    %v4243 = vsub.s32 0, %v4242
    %v4244 = vrot.slane %v4239, %v4243
    %v4245 = vlaneseq
    %v4246 = vshrl.u32 %v4245, 7
    %v4247 = vsub.s32 1, %v4246
    %v4248 = vrot.slane %v4239, %v4247
    %v4249 = vlaneseq
    %v4250 = vshrl.u32 %v4249, 7
    %v4251 = vsub.s32 2, %v4250
    %v4252 = vrot.slane %v4239, %v4251
    %v4253 = vlaneseq
    %v4254 = vshrl.u32 %v4253, 7
    %v4255 = vsub.s32 3, %v4254
    %v4256 = vrot.slane %v4239, %v4255
    %v4257 = vlaneseq
    %v4258 = vshrl.u32 %v4257, 7
    %v4259 = vsub.s32 4, %v4258
    %v4260 = vrot.slane %v4239, %v4259
    %v4261 = vlaneseq
    %v4262 = vshrl.u32 %v4261, 7
    %v4263 = vsub.s32 5, %v4262
    %v4264 = vrot.slane %v4239, %v4263
    %v4265 = vlaneseq
    %v4266 = vshrl.u32 %v4265, 7
    %v4267 = vsub.s32 6, %v4266
    %v4268 = vrot.slane %v4239, %v4267
    %v4269 = vlaneseq
    %v4270 = vshrl.u32 %v4269, 7
    %v4271 = vsub.s32 7, %v4270
    %v4272 = vrot.slane %v4239, %v4271
    %v4281 = vmul.f32 %v3924, %v4244
    %v4282 = vmul.f32 %v3925, %v4248
    %v4283 = vmul.f32 %v3926, %v4252
    %v4284 = vmul.f32 %v3927, %v4256
    %v4285 = vmul.f32 %v3928, %v4260
    %v4286 = vmul.f32 %v3929, %v4264
    %v4287 = vmul.f32 %v3930, %v4268
    %v4288 = vmul.f32 %v3931, %v4272
    %v4289 = vmul.f32 %v3932, %v4244
    %v4290 = vmul.f32 %v3933, %v4248
    %v4291 = vmul.f32 %v3934, %v4252
    %v4292 = vmul.f32 %v3935, %v4256
    %v4293 = vmul.f32 %v3936, %v4260
    %v4294 = vmul.f32 %v3937, %v4264
    %v4295 = vmul.f32 %v3938, %v4268
    %v4296 = vmul.f32 %v3939, %v4272
    %v4297 = vmul.f32 %v3940, %v4244
    %v4298 = vmul.f32 %v3941, %v4248
    %v4299 = vmul.f32 %v3942, %v4252
    %v4300 = vmul.f32 %v3943, %v4256
    %v4301 = vmul.f32 %v3944, %v4260
    %v4302 = vmul.f32 %v3945, %v4264
    %v4303 = vmul.f32 %v3946, %v4268
    %v4304 = vmul.f32 %v3947, %v4272
    %v4305 = vmul.f32 %v3948, %v4244
    %v4306 = vmul.f32 %v3949, %v4248
    %v4307 = vmul.f32 %v3950, %v4252
    %v4308 = vmul.f32 %v3951, %v4256
    %v4309 = vmul.f32 %v3952, %v4260
    %v4310 = vmul.f32 %v3953, %v4264
    %v4311 = vmul.f32 %v3954, %v4268
    %v4312 = vmul.f32 %v3955, %v4272
    %v4313 = vmul.f32 %v3956, %v4244
    %v4314 = vmul.f32 %v3957, %v4248
    %v4315 = vmul.f32 %v3958, %v4252
    %v4316 = vmul.f32 %v3959, %v4256
    %v4317 = vmul.f32 %v3960, %v4260
    %v4318 = vmul.f32 %v3961, %v4264
    %v4319 = vmul.f32 %v3962, %v4268
    %v4320 = vmul.f32 %v3963, %v4272
    %v4321 = vmul.f32 %v3964, %v4244
    %v4322 = vmul.f32 %v3965, %v4248
    %v4323 = vmul.f32 %v3966, %v4252
    %v4324 = vmul.f32 %v3967, %v4256
    %v4325 = vmul.f32 %v3968, %v4260
    %v4326 = vmul.f32 %v3969, %v4264
    %v4327 = vmul.f32 %v3970, %v4268
    %v4328 = vmul.f32 %v3971, %v4272
    %v4329 = vmul.f32 %v3972, %v4244
    %v4330 = vmul.f32 %v3973, %v4248
    %v4331 = vmul.f32 %v3974, %v4252
    %v4332 = vmul.f32 %v3975, %v4256
    %v4333 = vmul.f32 %v3976, %v4260
    %v4334 = vmul.f32 %v3977, %v4264
    %v4335 = vmul.f32 %v3978, %v4268
    %v4336 = vmul.f32 %v3979, %v4272
    %v4337 = vmul.f32 %v3980, %v4244
    %v4338 = vmul.f32 %v3981, %v4248
    %v4339 = vmul.f32 %v3982, %v4252
    %v4340 = vmul.f32 %v3983, %v4256
    %v4341 = vmul.f32 %v3984, %v4260
    %v4342 = vmul.f32 %v3985, %v4264
    %v4343 = vmul.f32 %v3986, %v4268
    %v4344 = vmul.f32 %v3987, %v4272
    %v4345 = vld [vmem:[%s14] sm:$0xff]
    %v4347 = vlaneseq
    %v4348 = vshrl.u32 %v4347, 7
    %v4349 = vsub.s32 0, %v4348
    %v4350 = vrot.slane %v4345, %v4349
    %v4351 = vlaneseq
    %v4352 = vshrl.u32 %v4351, 7
    %v4353 = vsub.s32 1, %v4352
    %v4354 = vrot.slane %v4345, %v4353
    %v4355 = vlaneseq
    %v4356 = vshrl.u32 %v4355, 7
    %v4357 = vsub.s32 2, %v4356
    %v4358 = vrot.slane %v4345, %v4357
    %v4359 = vlaneseq
    %v4360 = vshrl.u32 %v4359, 7
    %v4361 = vsub.s32 3, %v4360
    %v4362 = vrot.slane %v4345, %v4361
    %v4363 = vlaneseq
    %v4364 = vshrl.u32 %v4363, 7
    %v4365 = vsub.s32 4, %v4364
    %v4366 = vrot.slane %v4345, %v4365
    %v4367 = vlaneseq
    %v4368 = vshrl.u32 %v4367, 7
    %v4369 = vsub.s32 5, %v4368
    %v4370 = vrot.slane %v4345, %v4369
    %v4371 = vlaneseq
    %v4372 = vshrl.u32 %v4371, 7
    %v4373 = vsub.s32 6, %v4372
    %v4374 = vrot.slane %v4345, %v4373
    %v4375 = vlaneseq
    %v4376 = vshrl.u32 %v4375, 7
    %v4377 = vsub.s32 7, %v4376
    %v4378 = vrot.slane %v4345, %v4377
    %v4387 = vadd.f32 %v4281, %v4350
    %v4388 = vadd.f32 %v4282, %v4354
    %v4389 = vadd.f32 %v4283, %v4358
    %v4390 = vadd.f32 %v4284, %v4362
    %v4391 = vadd.f32 %v4285, %v4366
    %v4392 = vadd.f32 %v4286, %v4370
    %v4393 = vadd.f32 %v4287, %v4374
    %v4394 = vadd.f32 %v4288, %v4378
    %v4395 = vadd.f32 %v4289, %v4350
    %v4396 = vadd.f32 %v4290, %v4354
    %v4397 = vadd.f32 %v4291, %v4358
    %v4398 = vadd.f32 %v4292, %v4362
    %v4399 = vadd.f32 %v4293, %v4366
    %v4400 = vadd.f32 %v4294, %v4370
    %v4401 = vadd.f32 %v4295, %v4374
    %v4402 = vadd.f32 %v4296, %v4378
    %v4403 = vadd.f32 %v4297, %v4350
    %v4404 = vadd.f32 %v4298, %v4354
    %v4405 = vadd.f32 %v4299, %v4358
    %v4406 = vadd.f32 %v4300, %v4362
    %v4407 = vadd.f32 %v4301, %v4366
    %v4408 = vadd.f32 %v4302, %v4370
    %v4409 = vadd.f32 %v4303, %v4374
    %v4410 = vadd.f32 %v4304, %v4378
    %v4411 = vadd.f32 %v4305, %v4350
    %v4412 = vadd.f32 %v4306, %v4354
    %v4413 = vadd.f32 %v4307, %v4358
    %v4414 = vadd.f32 %v4308, %v4362
    %v4415 = vadd.f32 %v4309, %v4366
    %v4416 = vadd.f32 %v4310, %v4370
    %v4417 = vadd.f32 %v4311, %v4374
    %v4418 = vadd.f32 %v4312, %v4378
    %v4419 = vadd.f32 %v4313, %v4350
    %v4420 = vadd.f32 %v4314, %v4354
    %v4421 = vadd.f32 %v4315, %v4358
    %v4422 = vadd.f32 %v4316, %v4362
    %v4423 = vadd.f32 %v4317, %v4366
    %v4424 = vadd.f32 %v4318, %v4370
    %v4425 = vadd.f32 %v4319, %v4374
    %v4426 = vadd.f32 %v4320, %v4378
    %v4427 = vadd.f32 %v4321, %v4350
    %v4428 = vadd.f32 %v4322, %v4354
    %v4429 = vadd.f32 %v4323, %v4358
    %v4430 = vadd.f32 %v4324, %v4362
    %v4431 = vadd.f32 %v4325, %v4366
    %v4432 = vadd.f32 %v4326, %v4370
    %v4433 = vadd.f32 %v4327, %v4374
    %v4434 = vadd.f32 %v4328, %v4378
    %v4435 = vadd.f32 %v4329, %v4350
    %v4436 = vadd.f32 %v4330, %v4354
    %v4437 = vadd.f32 %v4331, %v4358
    %v4438 = vadd.f32 %v4332, %v4362
    %v4439 = vadd.f32 %v4333, %v4366
    %v4440 = vadd.f32 %v4334, %v4370
    %v4441 = vadd.f32 %v4335, %v4374
    %v4442 = vadd.f32 %v4336, %v4378
    %v4443 = vadd.f32 %v4337, %v4350
    %v4444 = vadd.f32 %v4338, %v4354
    %v4445 = vadd.f32 %v4339, %v4358
    %v4446 = vadd.f32 %v4340, %v4362
    %v4447 = vadd.f32 %v4341, %v4366
    %v4448 = vadd.f32 %v4342, %v4370
    %v4449 = vadd.f32 %v4343, %v4374
    %v4450 = vadd.f32 %v4344, %v4378
    %v4451 = vmax.f32 %v4387, 0.0
    %v4452 = vmax.f32 %v4388, 0.0
    %v4453 = vmax.f32 %v4389, 0.0
    %v4454 = vmax.f32 %v4390, 0.0
    %v4455 = vmax.f32 %v4391, 0.0
    %v4456 = vmax.f32 %v4392, 0.0
    %v4457 = vmax.f32 %v4393, 0.0
    %v4458 = vmax.f32 %v4394, 0.0
    %v4459 = vmax.f32 %v4395, 0.0
    %v4460 = vmax.f32 %v4396, 0.0
    %v4461 = vmax.f32 %v4397, 0.0
    %v4462 = vmax.f32 %v4398, 0.0
    %v4463 = vmax.f32 %v4399, 0.0
    %v4464 = vmax.f32 %v4400, 0.0
    %v4465 = vmax.f32 %v4401, 0.0
    %v4466 = vmax.f32 %v4402, 0.0
    %v4467 = vmax.f32 %v4403, 0.0
    %v4468 = vmax.f32 %v4404, 0.0
    %v4469 = vmax.f32 %v4405, 0.0
    %v4470 = vmax.f32 %v4406, 0.0
    %v4471 = vmax.f32 %v4407, 0.0
    %v4472 = vmax.f32 %v4408, 0.0
    %v4473 = vmax.f32 %v4409, 0.0
    %v4474 = vmax.f32 %v4410, 0.0
    %v4475 = vmax.f32 %v4411, 0.0
    %v4476 = vmax.f32 %v4412, 0.0
    %v4477 = vmax.f32 %v4413, 0.0
    %v4478 = vmax.f32 %v4414, 0.0
    %v4479 = vmax.f32 %v4415, 0.0
    %v4480 = vmax.f32 %v4416, 0.0
    %v4481 = vmax.f32 %v4417, 0.0
    %v4482 = vmax.f32 %v4418, 0.0
    %v4483 = vmax.f32 %v4419, 0.0
    %v4484 = vmax.f32 %v4420, 0.0
    %v4485 = vmax.f32 %v4421, 0.0
    %v4486 = vmax.f32 %v4422, 0.0
    %v4487 = vmax.f32 %v4423, 0.0
    %v4488 = vmax.f32 %v4424, 0.0
    %v4489 = vmax.f32 %v4425, 0.0
    %v4490 = vmax.f32 %v4426, 0.0
    %v4491 = vmax.f32 %v4427, 0.0
    %v4492 = vmax.f32 %v4428, 0.0
    %v4493 = vmax.f32 %v4429, 0.0
    %v4494 = vmax.f32 %v4430, 0.0
    %v4495 = vmax.f32 %v4431, 0.0
    %v4496 = vmax.f32 %v4432, 0.0
    %v4497 = vmax.f32 %v4433, 0.0
    %v4498 = vmax.f32 %v4434, 0.0
    %v4499 = vmax.f32 %v4435, 0.0
    %v4500 = vmax.f32 %v4436, 0.0
    %v4501 = vmax.f32 %v4437, 0.0
    %v4502 = vmax.f32 %v4438, 0.0
    %v4503 = vmax.f32 %v4439, 0.0
    %v4504 = vmax.f32 %v4440, 0.0
    %v4505 = vmax.f32 %v4441, 0.0
    %v4506 = vmax.f32 %v4442, 0.0
    %v4507 = vmax.f32 %v4443, 0.0
    %v4508 = vmax.f32 %v4444, 0.0
    %v4509 = vmax.f32 %v4445, 0.0
    %v4510 = vmax.f32 %v4446, 0.0
    %v4511 = vmax.f32 %v4447, 0.0
    %v4512 = vmax.f32 %v4448, 0.0
    %v4513 = vmax.f32 %v4449, 0.0
    %v4514 = vmax.f32 %v4450, 0.0
    %v4515 = vpack.c.bf16 %v4459, %v4451
    %v4516 = vpack.c.bf16 %v4460, %v4452
    %v4517 = vpack.c.bf16 %v4461, %v4453
    %v4518 = vpack.c.bf16 %v4462, %v4454
    %v4519 = vpack.c.bf16 %v4463, %v4455
    %v4520 = vpack.c.bf16 %v4464, %v4456
    %v4521 = vpack.c.bf16 %v4465, %v4457
    %v4522 = vpack.c.bf16 %v4466, %v4458
    %v4523 = vpack.c.bf16 %v4475, %v4467
    %v4524 = vpack.c.bf16 %v4476, %v4468
    %v4525 = vpack.c.bf16 %v4477, %v4469
    %v4526 = vpack.c.bf16 %v4478, %v4470
    %v4527 = vpack.c.bf16 %v4479, %v4471
    %v4528 = vpack.c.bf16 %v4480, %v4472
    %v4529 = vpack.c.bf16 %v4481, %v4473
    %v4530 = vpack.c.bf16 %v4482, %v4474
    %v4531 = vpack.c.bf16 %v4491, %v4483
    %v4532 = vpack.c.bf16 %v4492, %v4484
    %v4533 = vpack.c.bf16 %v4493, %v4485
    %v4534 = vpack.c.bf16 %v4494, %v4486
    %v4535 = vpack.c.bf16 %v4495, %v4487
    %v4536 = vpack.c.bf16 %v4496, %v4488
    %v4537 = vpack.c.bf16 %v4497, %v4489
    %v4538 = vpack.c.bf16 %v4498, %v4490
    %v4539 = vpack.c.bf16 %v4507, %v4499
    %v4540 = vpack.c.bf16 %v4508, %v4500
    %v4541 = vpack.c.bf16 %v4509, %v4501
    %v4542 = vpack.c.bf16 %v4510, %v4502
    %v4543 = vpack.c.bf16 %v4511, %v4503
    %v4544 = vpack.c.bf16 %v4512, %v4504
    %v4545 = vpack.c.bf16 %v4513, %v4505
    %v4546 = vpack.c.bf16 %v4514, %v4506
    %v4547 = vld [vmem:[#allocation16] sm:$0xff]
    %v4548 = vld [vmem:[#allocation16 + $0x8] sm:$0xff]
    %v4549 = vld [vmem:[#allocation16 + $0x10] sm:$0xff]
    %v4550 = vld [vmem:[#allocation16 + $0x18] sm:$0xff]
    %v4551 = vld [vmem:[#allocation16 + $0x20] sm:$0xff]
    %v4552 = vld [vmem:[#allocation16 + $0x28] sm:$0xff]
    %v4553 = vld [vmem:[#allocation16 + $0x30] sm:$0xff]
    %v4554 = vld [vmem:[#allocation16 + $0x38] sm:$0xff]
    %v4555 = vld [vmem:[#allocation16 + $0x40] sm:$0xff]
    %v4556 = vld [vmem:[#allocation16 + $0x48] sm:$0xff]
    %v4557 = vld [vmem:[#allocation16 + $0x50] sm:$0xff]
    %v4558 = vld [vmem:[#allocation16 + $0x58] sm:$0xff]
    %v4559 = vld [vmem:[#allocation16 + $0x60] sm:$0xff]
    %v4560 = vld [vmem:[#allocation16 + $0x68] sm:$0xff]
    %v4561 = vld [vmem:[#allocation16 + $0x70] sm:$0xff]
    %v4562 = vld [vmem:[#allocation16 + $0x78] sm:$0xff]
    %v4563 = vld [vmem:[#allocation16 + $0x80] sm:$0xff]
    %v4564 = vld [vmem:[#allocation16 + $0x88] sm:$0xff]
    %v4565 = vld [vmem:[#allocation16 + $0x90] sm:$0xff]
    %v4566 = vld [vmem:[#allocation16 + $0x98] sm:$0xff]
    %v4567 = vld [vmem:[#allocation16 + $0xa0] sm:$0xff]
    %v4568 = vld [vmem:[#allocation16 + $0xa8] sm:$0xff]
    %v4569 = vld [vmem:[#allocation16 + $0xb0] sm:$0xff]
    %v4570 = vld [vmem:[#allocation16 + $0xb8] sm:$0xff]
    %v4571 = vld [vmem:[#allocation16 + $0xc0] sm:$0xff]
    %v4572 = vld [vmem:[#allocation16 + $0xc8] sm:$0xff]
    %v4573 = vld [vmem:[#allocation16 + $0xd0] sm:$0xff]
    %v4574 = vld [vmem:[#allocation16 + $0xd8] sm:$0xff]
    %v4575 = vld [vmem:[#allocation16 + $0xe0] sm:$0xff]
    %v4576 = vld [vmem:[#allocation16 + $0xe8] sm:$0xff]
    %v4577 = vld [vmem:[#allocation16 + $0xf0] sm:$0xff]
    %v4578 = vld [vmem:[#allocation16 + $0xf8] sm:$0xff]
    %v4579 = vld [vmem:[#allocation16 + $0x100] sm:$0xff]
    %v4580 = vld [vmem:[#allocation16 + $0x108] sm:$0xff]
    %v4581 = vld [vmem:[#allocation16 + $0x110] sm:$0xff]
    %v4582 = vld [vmem:[#allocation16 + $0x118] sm:$0xff]
    %v4583 = vld [vmem:[#allocation16 + $0x120] sm:$0xff]
    %v4584 = vld [vmem:[#allocation16 + $0x128] sm:$0xff]
    %v4585 = vld [vmem:[#allocation16 + $0x130] sm:$0xff]
    %v4586 = vld [vmem:[#allocation16 + $0x138] sm:$0xff]
    %v4587 = vld [vmem:[#allocation16 + $0x140] sm:$0xff]
    %v4588 = vld [vmem:[#allocation16 + $0x148] sm:$0xff]
    %v4589 = vld [vmem:[#allocation16 + $0x150] sm:$0xff]
    %v4590 = vld [vmem:[#allocation16 + $0x158] sm:$0xff]
    %v4591 = vld [vmem:[#allocation16 + $0x160] sm:$0xff]
    %v4592 = vld [vmem:[#allocation16 + $0x168] sm:$0xff]
    %v4593 = vld [vmem:[#allocation16 + $0x170] sm:$0xff]
    %v4594 = vld [vmem:[#allocation16 + $0x178] sm:$0xff]
    %v4595 = vld [vmem:[#allocation16 + $0x180] sm:$0xff]
    %v4596 = vld [vmem:[#allocation16 + $0x188] sm:$0xff]
    %v4597 = vld [vmem:[#allocation16 + $0x190] sm:$0xff]
    %v4598 = vld [vmem:[#allocation16 + $0x198] sm:$0xff]
    %v4599 = vld [vmem:[#allocation16 + $0x1a0] sm:$0xff]
    %v4600 = vld [vmem:[#allocation16 + $0x1a8] sm:$0xff]
    %v4601 = vld [vmem:[#allocation16 + $0x1b0] sm:$0xff]
    %v4602 = vld [vmem:[#allocation16 + $0x1b8] sm:$0xff]
    %v4603 = vld [vmem:[#allocation16 + $0x1c0] sm:$0xff]
    %v4604 = vld [vmem:[#allocation16 + $0x1c8] sm:$0xff]
    %v4605 = vld [vmem:[#allocation16 + $0x1d0] sm:$0xff]
    %v4606 = vld [vmem:[#allocation16 + $0x1d8] sm:$0xff]
    %v4607 = vld [vmem:[#allocation16 + $0x1e0] sm:$0xff]
    %v4608 = vld [vmem:[#allocation16 + $0x1e8] sm:$0xff]
    %v4609 = vld [vmem:[#allocation16 + $0x1f0] sm:$0xff]
    %v4610 = vld [vmem:[#allocation16 + $0x1f8] sm:$0xff]
    %v4611 = vld [vmem:[#allocation16 + $0x200] sm:$0xff]
    %v4612 = vld [vmem:[#allocation16 + $0x208] sm:$0xff]
    %v4613 = vld [vmem:[#allocation16 + $0x210] sm:$0xff]
    %v4614 = vld [vmem:[#allocation16 + $0x218] sm:$0xff]
    %v4615 = vld [vmem:[#allocation16 + $0x220] sm:$0xff]
    %v4616 = vld [vmem:[#allocation16 + $0x228] sm:$0xff]
    %v4617 = vld [vmem:[#allocation16 + $0x230] sm:$0xff]
    %v4618 = vld [vmem:[#allocation16 + $0x238] sm:$0xff]
    %v4619 = vld [vmem:[#allocation16 + $0x240] sm:$0xff]
    %v4620 = vld [vmem:[#allocation16 + $0x248] sm:$0xff]
    %v4621 = vld [vmem:[#allocation16 + $0x250] sm:$0xff]
    %v4622 = vld [vmem:[#allocation16 + $0x258] sm:$0xff]
    %v4623 = vld [vmem:[#allocation16 + $0x260] sm:$0xff]
    %v4624 = vld [vmem:[#allocation16 + $0x268] sm:$0xff]
    %v4625 = vld [vmem:[#allocation16 + $0x270] sm:$0xff]
    %v4626 = vld [vmem:[#allocation16 + $0x278] sm:$0xff]
    %v4627 = vld [vmem:[#allocation16 + $0x280] sm:$0xff]
    %v4628 = vld [vmem:[#allocation16 + $0x288] sm:$0xff]
    %v4629 = vld [vmem:[#allocation16 + $0x290] sm:$0xff]
    %v4630 = vld [vmem:[#allocation16 + $0x298] sm:$0xff]
    %v4631 = vld [vmem:[#allocation16 + $0x2a0] sm:$0xff]
    %v4632 = vld [vmem:[#allocation16 + $0x2a8] sm:$0xff]
    %v4633 = vld [vmem:[#allocation16 + $0x2b0] sm:$0xff]
    %v4634 = vld [vmem:[#allocation16 + $0x2b8] sm:$0xff]
    %v4635 = vld [vmem:[#allocation16 + $0x2c0] sm:$0xff]
    %v4636 = vld [vmem:[#allocation16 + $0x2c8] sm:$0xff]
    %v4637 = vld [vmem:[#allocation16 + $0x2d0] sm:$0xff]
    %v4638 = vld [vmem:[#allocation16 + $0x2d8] sm:$0xff]
    %v4639 = vld [vmem:[#allocation16 + $0x2e0] sm:$0xff]
    %v4640 = vld [vmem:[#allocation16 + $0x2e8] sm:$0xff]
    %v4641 = vld [vmem:[#allocation16 + $0x2f0] sm:$0xff]
    %v4642 = vld [vmem:[#allocation16 + $0x2f8] sm:$0xff]
    %v4643 = vld [vmem:[#allocation16 + $0x300] sm:$0xff]
    %v4644 = vld [vmem:[#allocation16 + $0x308] sm:$0xff]
    %v4645 = vld [vmem:[#allocation16 + $0x310] sm:$0xff]
    %v4646 = vld [vmem:[#allocation16 + $0x318] sm:$0xff]
    %v4647 = vld [vmem:[#allocation16 + $0x320] sm:$0xff]
    %v4648 = vld [vmem:[#allocation16 + $0x328] sm:$0xff]
    %v4649 = vld [vmem:[#allocation16 + $0x330] sm:$0xff]
    %v4650 = vld [vmem:[#allocation16 + $0x338] sm:$0xff]
    %v4651 = vld [vmem:[#allocation16 + $0x340] sm:$0xff]
    %v4652 = vld [vmem:[#allocation16 + $0x348] sm:$0xff]
    %v4653 = vld [vmem:[#allocation16 + $0x350] sm:$0xff]
    %v4654 = vld [vmem:[#allocation16 + $0x358] sm:$0xff]
    %v4655 = vld [vmem:[#allocation16 + $0x360] sm:$0xff]
    %v4656 = vld [vmem:[#allocation16 + $0x368] sm:$0xff]
    %v4657 = vld [vmem:[#allocation16 + $0x370] sm:$0xff]
    %v4658 = vld [vmem:[#allocation16 + $0x378] sm:$0xff]
    %v4659 = vld [vmem:[#allocation16 + $0x380] sm:$0xff]
    %v4660 = vld [vmem:[#allocation16 + $0x388] sm:$0xff]
    %v4661 = vld [vmem:[#allocation16 + $0x390] sm:$0xff]
    %v4662 = vld [vmem:[#allocation16 + $0x398] sm:$0xff]
    %v4663 = vld [vmem:[#allocation16 + $0x3a0] sm:$0xff]
    %v4664 = vld [vmem:[#allocation16 + $0x3a8] sm:$0xff]
    %v4665 = vld [vmem:[#allocation16 + $0x3b0] sm:$0xff]
    %v4666 = vld [vmem:[#allocation16 + $0x3b8] sm:$0xff]
    %v4667 = vld [vmem:[#allocation16 + $0x3c0] sm:$0xff]
    %v4668 = vld [vmem:[#allocation16 + $0x3c8] sm:$0xff]
    %v4669 = vld [vmem:[#allocation16 + $0x3d0] sm:$0xff]
    %v4670 = vld [vmem:[#allocation16 + $0x3d8] sm:$0xff]
    %v4671 = vld [vmem:[#allocation16 + $0x3e0] sm:$0xff]
    %v4672 = vld [vmem:[#allocation16 + $0x3e8] sm:$0xff]
    %v4673 = vld [vmem:[#allocation16 + $0x3f0] sm:$0xff]
    %v4674 = vld [vmem:[#allocation16 + $0x3f8] sm:$0xff]
    %v4675 = vld [vmem:[#allocation18] sm:$0x3]
    %v4677 = vlaneseq
    %v4678 = vshrl.u32 %v4677, 7
    %v4679 = vsub.s32 0, %v4678
    %v4680 = vrot.slane %v4675, %v4679
    %v4681 = vlaneseq
    %v4682 = vshrl.u32 %v4681, 7
    %v4683 = vsub.s32 1, %v4682
    %v4684 = vrot.slane %v4675, %v4683
    %v4815 = vunpack.c.l.b16 %v4547
    %v4816 = vunpack.c.h.b16 %v4547
    %v4817 = vunpack.c.l.b16 %v4548
    %v4818 = vunpack.c.h.b16 %v4548
    %v4819 = vunpack.c.l.b16 %v4549
    %v4820 = vunpack.c.h.b16 %v4549
    %v4821 = vunpack.c.l.b16 %v4550
    %v4822 = vunpack.c.h.b16 %v4550
    %v4823 = vunpack.c.l.b16 %v4551
    %v4824 = vunpack.c.h.b16 %v4551
    %v4825 = vunpack.c.l.b16 %v4552
    %v4826 = vunpack.c.h.b16 %v4552
    %v4827 = vunpack.c.l.b16 %v4553
    %v4828 = vunpack.c.h.b16 %v4553
    %v4829 = vunpack.c.l.b16 %v4554
    %v4830 = vunpack.c.h.b16 %v4554
    %v4831 = vunpack.c.l.b16 %v4555
    %v4832 = vunpack.c.h.b16 %v4555
    %v4833 = vunpack.c.l.b16 %v4556
    %v4834 = vunpack.c.h.b16 %v4556
    %v4835 = vunpack.c.l.b16 %v4557
    %v4836 = vunpack.c.h.b16 %v4557
    %v4837 = vunpack.c.l.b16 %v4558
    %v4838 = vunpack.c.h.b16 %v4558
    %v4839 = vunpack.c.l.b16 %v4559
    %v4840 = vunpack.c.h.b16 %v4559
    %v4841 = vunpack.c.l.b16 %v4560
    %v4842 = vunpack.c.h.b16 %v4560
    %v4843 = vunpack.c.l.b16 %v4561
    %v4844 = vunpack.c.h.b16 %v4561
    %v4845 = vunpack.c.l.b16 %v4562
    %v4846 = vunpack.c.h.b16 %v4562
    %v4847 = vunpack.c.l.b16 %v4563
    %v4848 = vunpack.c.h.b16 %v4563
    %v4849 = vunpack.c.l.b16 %v4564
    %v4850 = vunpack.c.h.b16 %v4564
    %v4851 = vunpack.c.l.b16 %v4565
    %v4852 = vunpack.c.h.b16 %v4565
    %v4853 = vunpack.c.l.b16 %v4566
    %v4854 = vunpack.c.h.b16 %v4566
    %v4855 = vunpack.c.l.b16 %v4567
    %v4856 = vunpack.c.h.b16 %v4567
    %v4857 = vunpack.c.l.b16 %v4568
    %v4858 = vunpack.c.h.b16 %v4568
    %v4859 = vunpack.c.l.b16 %v4569
    %v4860 = vunpack.c.h.b16 %v4569
    %v4861 = vunpack.c.l.b16 %v4570
    %v4862 = vunpack.c.h.b16 %v4570
    %v4863 = vunpack.c.l.b16 %v4571
    %v4864 = vunpack.c.h.b16 %v4571
    %v4865 = vunpack.c.l.b16 %v4572
    %v4866 = vunpack.c.h.b16 %v4572
    %v4867 = vunpack.c.l.b16 %v4573
    %v4868 = vunpack.c.h.b16 %v4573
    %v4869 = vunpack.c.l.b16 %v4574
    %v4870 = vunpack.c.h.b16 %v4574
    %v4871 = vunpack.c.l.b16 %v4575
    %v4872 = vunpack.c.h.b16 %v4575
    %v4873 = vunpack.c.l.b16 %v4576
    %v4874 = vunpack.c.h.b16 %v4576
    %v4875 = vunpack.c.l.b16 %v4577
    %v4876 = vunpack.c.h.b16 %v4577
    %v4877 = vunpack.c.l.b16 %v4578
    %v4878 = vunpack.c.h.b16 %v4578
    %v4879 = vunpack.c.l.b16 %v4579
    %v4880 = vunpack.c.h.b16 %v4579
    %v4881 = vunpack.c.l.b16 %v4580
    %v4882 = vunpack.c.h.b16 %v4580
    %v4883 = vunpack.c.l.b16 %v4581
    %v4884 = vunpack.c.h.b16 %v4581
    %v4885 = vunpack.c.l.b16 %v4582
    %v4886 = vunpack.c.h.b16 %v4582
    %v4887 = vunpack.c.l.b16 %v4583
    %v4888 = vunpack.c.h.b16 %v4583
    %v4889 = vunpack.c.l.b16 %v4584
    %v4890 = vunpack.c.h.b16 %v4584
    %v4891 = vunpack.c.l.b16 %v4585
    %v4892 = vunpack.c.h.b16 %v4585
    %v4893 = vunpack.c.l.b16 %v4586
    %v4894 = vunpack.c.h.b16 %v4586
    %v4895 = vunpack.c.l.b16 %v4587
    %v4896 = vunpack.c.h.b16 %v4587
    %v4897 = vunpack.c.l.b16 %v4588
    %v4898 = vunpack.c.h.b16 %v4588
    %v4899 = vunpack.c.l.b16 %v4589
    %v4900 = vunpack.c.h.b16 %v4589
    %v4901 = vunpack.c.l.b16 %v4590
    %v4902 = vunpack.c.h.b16 %v4590
    %v4903 = vunpack.c.l.b16 %v4591
    %v4904 = vunpack.c.h.b16 %v4591
    %v4905 = vunpack.c.l.b16 %v4592
    %v4906 = vunpack.c.h.b16 %v4592
    %v4907 = vunpack.c.l.b16 %v4593
    %v4908 = vunpack.c.h.b16 %v4593
    %v4909 = vunpack.c.l.b16 %v4594
    %v4910 = vunpack.c.h.b16 %v4594
    %v4911 = vunpack.c.l.b16 %v4595
    %v4912 = vunpack.c.h.b16 %v4595
    %v4913 = vunpack.c.l.b16 %v4596
    %v4914 = vunpack.c.h.b16 %v4596
    %v4915 = vunpack.c.l.b16 %v4597
    %v4916 = vunpack.c.h.b16 %v4597
    %v4917 = vunpack.c.l.b16 %v4598
    %v4918 = vunpack.c.h.b16 %v4598
    %v4919 = vunpack.c.l.b16 %v4599
    %v4920 = vunpack.c.h.b16 %v4599
    %v4921 = vunpack.c.l.b16 %v4600
    %v4922 = vunpack.c.h.b16 %v4600
    %v4923 = vunpack.c.l.b16 %v4601
    %v4924 = vunpack.c.h.b16 %v4601
    %v4925 = vunpack.c.l.b16 %v4602
    %v4926 = vunpack.c.h.b16 %v4602
    %v4927 = vunpack.c.l.b16 %v4603
    %v4928 = vunpack.c.h.b16 %v4603
    %v4929 = vunpack.c.l.b16 %v4604
    %v4930 = vunpack.c.h.b16 %v4604
    %v4931 = vunpack.c.l.b16 %v4605
    %v4932 = vunpack.c.h.b16 %v4605
    %v4933 = vunpack.c.l.b16 %v4606
    %v4934 = vunpack.c.h.b16 %v4606
    %v4935 = vunpack.c.l.b16 %v4607
    %v4936 = vunpack.c.h.b16 %v4607
    %v4937 = vunpack.c.l.b16 %v4608
    %v4938 = vunpack.c.h.b16 %v4608
    %v4939 = vunpack.c.l.b16 %v4609
    %v4940 = vunpack.c.h.b16 %v4609
    %v4941 = vunpack.c.l.b16 %v4610
    %v4942 = vunpack.c.h.b16 %v4610
    %v4943 = vunpack.c.l.b16 %v4611
    %v4944 = vunpack.c.h.b16 %v4611
    %v4945 = vunpack.c.l.b16 %v4612
    %v4946 = vunpack.c.h.b16 %v4612
    %v4947 = vunpack.c.l.b16 %v4613
    %v4948 = vunpack.c.h.b16 %v4613
    %v4949 = vunpack.c.l.b16 %v4614
    %v4950 = vunpack.c.h.b16 %v4614
    %v4951 = vunpack.c.l.b16 %v4615
    %v4952 = vunpack.c.h.b16 %v4615
    %v4953 = vunpack.c.l.b16 %v4616
    %v4954 = vunpack.c.h.b16 %v4616
    %v4955 = vunpack.c.l.b16 %v4617
    %v4956 = vunpack.c.h.b16 %v4617
    %v4957 = vunpack.c.l.b16 %v4618
    %v4958 = vunpack.c.h.b16 %v4618
    %v4959 = vunpack.c.l.b16 %v4619
    %v4960 = vunpack.c.h.b16 %v4619
    %v4961 = vunpack.c.l.b16 %v4620
    %v4962 = vunpack.c.h.b16 %v4620
    %v4963 = vunpack.c.l.b16 %v4621
    %v4964 = vunpack.c.h.b16 %v4621
    %v4965 = vunpack.c.l.b16 %v4622
    %v4966 = vunpack.c.h.b16 %v4622
    %v4967 = vunpack.c.l.b16 %v4623
    %v4968 = vunpack.c.h.b16 %v4623
    %v4969 = vunpack.c.l.b16 %v4624
    %v4970 = vunpack.c.h.b16 %v4624
    %v4971 = vunpack.c.l.b16 %v4625
    %v4972 = vunpack.c.h.b16 %v4625
    %v4973 = vunpack.c.l.b16 %v4626
    %v4974 = vunpack.c.h.b16 %v4626
    %v4975 = vunpack.c.l.b16 %v4627
    %v4976 = vunpack.c.h.b16 %v4627
    %v4977 = vunpack.c.l.b16 %v4628
    %v4978 = vunpack.c.h.b16 %v4628
    %v4979 = vunpack.c.l.b16 %v4629
    %v4980 = vunpack.c.h.b16 %v4629
    %v4981 = vunpack.c.l.b16 %v4630
    %v4982 = vunpack.c.h.b16 %v4630
    %v4983 = vunpack.c.l.b16 %v4631
    %v4984 = vunpack.c.h.b16 %v4631
    %v4985 = vunpack.c.l.b16 %v4632
    %v4986 = vunpack.c.h.b16 %v4632
    %v4987 = vunpack.c.l.b16 %v4633
    %v4988 = vunpack.c.h.b16 %v4633
    %v4989 = vunpack.c.l.b16 %v4634
    %v4990 = vunpack.c.h.b16 %v4634
    %v4991 = vunpack.c.l.b16 %v4635
    %v4992 = vunpack.c.h.b16 %v4635
    %v4993 = vunpack.c.l.b16 %v4636
    %v4994 = vunpack.c.h.b16 %v4636
    %v4995 = vunpack.c.l.b16 %v4637
    %v4996 = vunpack.c.h.b16 %v4637
    %v4997 = vunpack.c.l.b16 %v4638
    %v4998 = vunpack.c.h.b16 %v4638
    %v4999 = vunpack.c.l.b16 %v4639
    %v5000 = vunpack.c.h.b16 %v4639
    %v5001 = vunpack.c.l.b16 %v4640
    %v5002 = vunpack.c.h.b16 %v4640
    %v5003 = vunpack.c.l.b16 %v4641
    %v5004 = vunpack.c.h.b16 %v4641
    %v5005 = vunpack.c.l.b16 %v4642
    %v5006 = vunpack.c.h.b16 %v4642
    %v5007 = vunpack.c.l.b16 %v4643
    %v5008 = vunpack.c.h.b16 %v4643
    %v5009 = vunpack.c.l.b16 %v4644
    %v5010 = vunpack.c.h.b16 %v4644
    %v5011 = vunpack.c.l.b16 %v4645
    %v5012 = vunpack.c.h.b16 %v4645
    %v5013 = vunpack.c.l.b16 %v4646
    %v5014 = vunpack.c.h.b16 %v4646
    %v5015 = vunpack.c.l.b16 %v4647
    %v5016 = vunpack.c.h.b16 %v4647
    %v5017 = vunpack.c.l.b16 %v4648
    %v5018 = vunpack.c.h.b16 %v4648
    %v5019 = vunpack.c.l.b16 %v4649
    %v5020 = vunpack.c.h.b16 %v4649
    %v5021 = vunpack.c.l.b16 %v4650
    %v5022 = vunpack.c.h.b16 %v4650
    %v5023 = vunpack.c.l.b16 %v4651
    %v5024 = vunpack.c.h.b16 %v4651
    %v5025 = vunpack.c.l.b16 %v4652
    %v5026 = vunpack.c.h.b16 %v4652
    %v5027 = vunpack.c.l.b16 %v4653
    %v5028 = vunpack.c.h.b16 %v4653
    %v5029 = vunpack.c.l.b16 %v4654
    %v5030 = vunpack.c.h.b16 %v4654
    %v5031 = vunpack.c.l.b16 %v4655
    %v5032 = vunpack.c.h.b16 %v4655
    %v5033 = vunpack.c.l.b16 %v4656
    %v5034 = vunpack.c.h.b16 %v4656
    %v5035 = vunpack.c.l.b16 %v4657
    %v5036 = vunpack.c.h.b16 %v4657
    %v5037 = vunpack.c.l.b16 %v4658
    %v5038 = vunpack.c.h.b16 %v4658
    %v5039 = vunpack.c.l.b16 %v4659
    %v5040 = vunpack.c.h.b16 %v4659
    %v5041 = vunpack.c.l.b16 %v4660
    %v5042 = vunpack.c.h.b16 %v4660
    %v5043 = vunpack.c.l.b16 %v4661
    %v5044 = vunpack.c.h.b16 %v4661
    %v5045 = vunpack.c.l.b16 %v4662
    %v5046 = vunpack.c.h.b16 %v4662
    %v5047 = vunpack.c.l.b16 %v4663
    %v5048 = vunpack.c.h.b16 %v4663
    %v5049 = vunpack.c.l.b16 %v4664
    %v5050 = vunpack.c.h.b16 %v4664
    %v5051 = vunpack.c.l.b16 %v4665
    %v5052 = vunpack.c.h.b16 %v4665
    %v5053 = vunpack.c.l.b16 %v4666
    %v5054 = vunpack.c.h.b16 %v4666
    %v5055 = vunpack.c.l.b16 %v4667
    %v5056 = vunpack.c.h.b16 %v4667
    %v5057 = vunpack.c.l.b16 %v4668
    %v5058 = vunpack.c.h.b16 %v4668
    %v5059 = vunpack.c.l.b16 %v4669
    %v5060 = vunpack.c.h.b16 %v4669
    %v5061 = vunpack.c.l.b16 %v4670
    %v5062 = vunpack.c.h.b16 %v4670
    %v5063 = vunpack.c.l.b16 %v4671
    %v5064 = vunpack.c.h.b16 %v4671
    %v5065 = vunpack.c.l.b16 %v4672
    %v5066 = vunpack.c.h.b16 %v4672
    %v5067 = vunpack.c.l.b16 %v4673
    %v5068 = vunpack.c.h.b16 %v4673
    %v5069 = vunpack.c.l.b16 %v4674
    %v5070 = vunpack.c.h.b16 %v4674
    %v5071 = vpack.c.b16 %v4817, %v4815
    %v5072 = vpack.c.b16 %v4818, %v4816
    %v5073 = vpack.c.b16 %v4821, %v4819
    %v5074 = vpack.c.b16 %v4822, %v4820
    %v5075 = vpack.c.b16 %v4825, %v4823
    %v5076 = vpack.c.b16 %v4826, %v4824
    %v5077 = vpack.c.b16 %v4829, %v4827
    %v5078 = vpack.c.b16 %v4830, %v4828
    %v5079 = vpack.c.b16 %v4833, %v4831
    %v5080 = vpack.c.b16 %v4834, %v4832
    %v5081 = vpack.c.b16 %v4837, %v4835
    %v5082 = vpack.c.b16 %v4838, %v4836
    %v5083 = vpack.c.b16 %v4841, %v4839
    %v5084 = vpack.c.b16 %v4842, %v4840
    %v5085 = vpack.c.b16 %v4845, %v4843
    %v5086 = vpack.c.b16 %v4846, %v4844
    %v5087 = vpack.c.b16 %v4849, %v4847
    %v5088 = vpack.c.b16 %v4850, %v4848
    %v5089 = vpack.c.b16 %v4853, %v4851
    %v5090 = vpack.c.b16 %v4854, %v4852
    %v5091 = vpack.c.b16 %v4857, %v4855
    %v5092 = vpack.c.b16 %v4858, %v4856
    %v5093 = vpack.c.b16 %v4861, %v4859
    %v5094 = vpack.c.b16 %v4862, %v4860
    %v5095 = vpack.c.b16 %v4865, %v4863
    %v5096 = vpack.c.b16 %v4866, %v4864
    %v5097 = vpack.c.b16 %v4869, %v4867
    %v5098 = vpack.c.b16 %v4870, %v4868
    %v5099 = vpack.c.b16 %v4873, %v4871
    %v5100 = vpack.c.b16 %v4874, %v4872
    %v5101 = vpack.c.b16 %v4877, %v4875
    %v5102 = vpack.c.b16 %v4878, %v4876
    %v5103 = vpack.c.b16 %v4881, %v4879
    %v5104 = vpack.c.b16 %v4882, %v4880
    %v5105 = vpack.c.b16 %v4885, %v4883
    %v5106 = vpack.c.b16 %v4886, %v4884
    %v5107 = vpack.c.b16 %v4889, %v4887
    %v5108 = vpack.c.b16 %v4890, %v4888
    %v5109 = vpack.c.b16 %v4893, %v4891
    %v5110 = vpack.c.b16 %v4894, %v4892
    %v5111 = vpack.c.b16 %v4897, %v4895
    %v5112 = vpack.c.b16 %v4898, %v4896
    %v5113 = vpack.c.b16 %v4901, %v4899
    %v5114 = vpack.c.b16 %v4902, %v4900
    %v5115 = vpack.c.b16 %v4905, %v4903
    %v5116 = vpack.c.b16 %v4906, %v4904
    %v5117 = vpack.c.b16 %v4909, %v4907
    %v5118 = vpack.c.b16 %v4910, %v4908
    %v5119 = vpack.c.b16 %v4913, %v4911
    %v5120 = vpack.c.b16 %v4914, %v4912
    %v5121 = vpack.c.b16 %v4917, %v4915
    %v5122 = vpack.c.b16 %v4918, %v4916
    %v5123 = vpack.c.b16 %v4921, %v4919
    %v5124 = vpack.c.b16 %v4922, %v4920
    %v5125 = vpack.c.b16 %v4925, %v4923
    %v5126 = vpack.c.b16 %v4926, %v4924
    %v5127 = vpack.c.b16 %v4929, %v4927
    %v5128 = vpack.c.b16 %v4930, %v4928
    %v5129 = vpack.c.b16 %v4933, %v4931
    %v5130 = vpack.c.b16 %v4934, %v4932
    %v5131 = vpack.c.b16 %v4937, %v4935
    %v5132 = vpack.c.b16 %v4938, %v4936
    %v5133 = vpack.c.b16 %v4941, %v4939
    %v5134 = vpack.c.b16 %v4942, %v4940
    %v5135 = vpack.c.b16 %v4945, %v4943
    %v5136 = vpack.c.b16 %v4946, %v4944
    %v5137 = vpack.c.b16 %v4949, %v4947
    %v5138 = vpack.c.b16 %v4950, %v4948
    %v5139 = vpack.c.b16 %v4953, %v4951
    %v5140 = vpack.c.b16 %v4954, %v4952
    %v5141 = vpack.c.b16 %v4957, %v4955
    %v5142 = vpack.c.b16 %v4958, %v4956
    %v5143 = vpack.c.b16 %v4961, %v4959
    %v5144 = vpack.c.b16 %v4962, %v4960
    %v5145 = vpack.c.b16 %v4965, %v4963
    %v5146 = vpack.c.b16 %v4966, %v4964
    %v5147 = vpack.c.b16 %v4969, %v4967
    %v5148 = vpack.c.b16 %v4970, %v4968
    %v5149 = vpack.c.b16 %v4973, %v4971
    %v5150 = vpack.c.b16 %v4974, %v4972
    %v5151 = vpack.c.b16 %v4977, %v4975
    %v5152 = vpack.c.b16 %v4978, %v4976
    %v5153 = vpack.c.b16 %v4981, %v4979
    %v5154 = vpack.c.b16 %v4982, %v4980
    %v5155 = vpack.c.b16 %v4985, %v4983
    %v5156 = vpack.c.b16 %v4986, %v4984
    %v5157 = vpack.c.b16 %v4989, %v4987
    %v5158 = vpack.c.b16 %v4990, %v4988
    %v5159 = vpack.c.b16 %v4993, %v4991
    %v5160 = vpack.c.b16 %v4994, %v4992
    %v5161 = vpack.c.b16 %v4997, %v4995
    %v5162 = vpack.c.b16 %v4998, %v4996
    %v5163 = vpack.c.b16 %v5001, %v4999
    %v5164 = vpack.c.b16 %v5002, %v5000
    %v5165 = vpack.c.b16 %v5005, %v5003
    %v5166 = vpack.c.b16 %v5006, %v5004
    %v5167 = vpack.c.b16 %v5009, %v5007
    %v5168 = vpack.c.b16 %v5010, %v5008
    %v5169 = vpack.c.b16 %v5013, %v5011
    %v5170 = vpack.c.b16 %v5014, %v5012
    %v5171 = vpack.c.b16 %v5017, %v5015
    %v5172 = vpack.c.b16 %v5018, %v5016
    %v5173 = vpack.c.b16 %v5021, %v5019
    %v5174 = vpack.c.b16 %v5022, %v5020
    %v5175 = vpack.c.b16 %v5025, %v5023
    %v5176 = vpack.c.b16 %v5026, %v5024
    %v5177 = vpack.c.b16 %v5029, %v5027
    %v5178 = vpack.c.b16 %v5030, %v5028
    %v5179 = vpack.c.b16 %v5033, %v5031
    %v5180 = vpack.c.b16 %v5034, %v5032
    %v5181 = vpack.c.b16 %v5037, %v5035
    %v5182 = vpack.c.b16 %v5038, %v5036
    %v5183 = vpack.c.b16 %v5041, %v5039
    %v5184 = vpack.c.b16 %v5042, %v5040
    %v5185 = vpack.c.b16 %v5045, %v5043
    %v5186 = vpack.c.b16 %v5046, %v5044
    %v5187 = vpack.c.b16 %v5049, %v5047
    %v5188 = vpack.c.b16 %v5050, %v5048
    %v5189 = vpack.c.b16 %v5053, %v5051
    %v5190 = vpack.c.b16 %v5054, %v5052
    %v5191 = vpack.c.b16 %v5057, %v5055
    %v5192 = vpack.c.b16 %v5058, %v5056
    %v5193 = vpack.c.b16 %v5061, %v5059
    %v5194 = vpack.c.b16 %v5062, %v5060
    %v5195 = vpack.c.b16 %v5065, %v5063
    %v5196 = vpack.c.b16 %v5066, %v5064
    %v5197 = vpack.c.b16 %v5069, %v5067
    %v5198 = vpack.c.b16 %v5070, %v5068
    %5327 = vmatprep.subr.bf16.mxu0 %v5072
    %5328 = vmatpush1.bf16.msra.mxu0 %v5071
    %5329 = vmatprep.subr.bf16.mxu0 %v5074
    %5330 = vmatpush1.bf16.msra.mxu0 %v5073
    %5331 = vmatprep.subr.bf16.mxu0 %v5076
    %5332 = vmatpush1.bf16.msra.mxu0 %v5075
    %5333 = vmatprep.subr.bf16.mxu0 %v5078
    %5334 = vmatpush1.bf16.msra.mxu0 %v5077
    %5335 = vmatprep.subr.bf16.mxu0 %v5080
    %5336 = vmatpush1.bf16.msra.mxu0 %v5079
    %5337 = vmatprep.subr.bf16.mxu0 %v5082
    %5338 = vmatpush1.bf16.msra.mxu0 %v5081
    %5339 = vmatprep.subr.bf16.mxu0 %v5084
    %5340 = vmatpush1.bf16.msra.mxu0 %v5083
    %5341 = vmatprep.subr.bf16.mxu0 %v5086
    %5342 = vmatpush1.bf16.msra.mxu0 %v5085
    %5343 = vmatprep.subr.bf16.mxu0 %v5088
    %5344 = vmatpush1.bf16.msra.mxu0 %v5087
    %5345 = vmatprep.subr.bf16.mxu0 %v5090
    %5346 = vmatpush1.bf16.msra.mxu0 %v5089
    %5347 = vmatprep.subr.bf16.mxu0 %v5092
    %5348 = vmatpush1.bf16.msra.mxu0 %v5091
    %5349 = vmatprep.subr.bf16.mxu0 %v5094
    %5350 = vmatpush1.bf16.msra.mxu0 %v5093
    %5351 = vmatprep.subr.bf16.mxu0 %v5096
    %5352 = vmatpush1.bf16.msra.mxu0 %v5095
    %5353 = vmatprep.subr.bf16.mxu0 %v5098
    %5354 = vmatpush1.bf16.msra.mxu0 %v5097
    %5355 = vmatprep.subr.bf16.mxu0 %v5100
    %5356 = vmatpush1.bf16.msra.mxu0 %v5099
    %5357 = vmatprep.subr.bf16.mxu0 %v5102
    %5358 = vmatpush1.bf16.msra.mxu0 %v5101
    %5359 = vmatprep.mubr.bf16.mxu0 %v4516
    %5360 = vmatmul.mubr.bf16.gmra.mrb[0].mxu0 %v4515
    %v5361 = vpop.f32.mrb[0].mxu0
    %v5362 = vadd.f32 %v4680, %v5361
    %v5363 = vpop.f32.mrb[0].mxu0
    %v5364 = vadd.f32 %v4684, %v5363
    %v5365 = vpop.f32.mrb[0].mxu0
    %v5366 = vadd.f32 %v4680, %v5365
    %v5367 = vpop.f32.mrb[0].mxu0
    %v5368 = vadd.f32 %v4684, %v5367
    %5369 = vmatprep.mubr.bf16.mxu0 %v4524
    %5370 = vmatmul.mubr.bf16.gmra.mrb[0].mxu0 %v4523
    %v5371 = vpop.f32.mrb[0].mxu0
    %v5372 = vadd.f32 %v4680, %v5371
    %v5373 = vpop.f32.mrb[0].mxu0
    %v5374 = vadd.f32 %v4684, %v5373
    %v5375 = vpop.f32.mrb[0].mxu0
    %v5376 = vadd.f32 %v4680, %v5375
    %v5377 = vpop.f32.mrb[0].mxu0
    %v5378 = vadd.f32 %v4684, %v5377
    %5379 = vmatprep.mubr.bf16.mxu0 %v4532
    %5380 = vmatmul.mubr.bf16.gmra.mrb[0].mxu0 %v4531
    %v5381 = vpop.f32.mrb[0].mxu0
    %v5382 = vadd.f32 %v4680, %v5381
    %v5383 = vpop.f32.mrb[0].mxu0
    %v5384 = vadd.f32 %v4684, %v5383
    %v5385 = vpop.f32.mrb[0].mxu0
    %v5386 = vadd.f32 %v4680, %v5385
    %v5387 = vpop.f32.mrb[0].mxu0
    %v5388 = vadd.f32 %v4684, %v5387
    %5389 = vmatprep.mubr.bf16.mxu0 %v4540
    %5390 = vmatmul.mubr.bf16.gmra.mrb[0].mxu0 %v4539
    %v5391 = vpop.f32.mrb[0].mxu0
    %v5392 = vadd.f32 %v4680, %v5391
    %v5393 = vpop.f32.mrb[0].mxu0
    %v5394 = vadd.f32 %v4684, %v5393
    %v5395 = vpop.f32.mrb[0].mxu0
    %v5396 = vadd.f32 %v4680, %v5395
    %v5397 = vpop.f32.mrb[0].mxu0
    %v5398 = vadd.f32 %v4684, %v5397
    %5399 = vdwg.mxu0
    %5400 = vmatprep.subr.bf16.mxu0 %v5104
    %5401 = vmatpush1.bf16.msra.mxu0 %v5103
    %5402 = vmatprep.subr.bf16.mxu0 %v5106
    %5403 = vmatpush1.bf16.msra.mxu0 %v5105
    %5404 = vmatprep.subr.bf16.mxu0 %v5108
    %5405 = vmatpush1.bf16.msra.mxu0 %v5107
    %5406 = vmatprep.subr.bf16.mxu0 %v5110
    %5407 = vmatpush1.bf16.msra.mxu0 %v5109
    %5408 = vmatprep.subr.bf16.mxu0 %v5112
    %5409 = vmatpush1.bf16.msra.mxu0 %v5111
    %5410 = vmatprep.subr.bf16.mxu0 %v5114
    %5411 = vmatpush1.bf16.msra.mxu0 %v5113
    %5412 = vmatprep.subr.bf16.mxu0 %v5116
    %5413 = vmatpush1.bf16.msra.mxu0 %v5115
    %5414 = vmatprep.subr.bf16.mxu0 %v5118
    %5415 = vmatpush1.bf16.msra.mxu0 %v5117
    %5416 = vmatprep.subr.bf16.mxu0 %v5120
    %5417 = vmatpush1.bf16.msra.mxu0 %v5119
    %5418 = vmatprep.subr.bf16.mxu0 %v5122
    %5419 = vmatpush1.bf16.msra.mxu0 %v5121
    %5420 = vmatprep.subr.bf16.mxu0 %v5124
    %5421 = vmatpush1.bf16.msra.mxu0 %v5123
    %5422 = vmatprep.subr.bf16.mxu0 %v5126
    %5423 = vmatpush1.bf16.msra.mxu0 %v5125
    %5424 = vmatprep.subr.bf16.mxu0 %v5128
    %5425 = vmatpush1.bf16.msra.mxu0 %v5127
    %5426 = vmatprep.subr.bf16.mxu0 %v5130
    %5427 = vmatpush1.bf16.msra.mxu0 %v5129
    %5428 = vmatprep.subr.bf16.mxu0 %v5132
    %5429 = vmatpush1.bf16.msra.mxu0 %v5131
    %5430 = vmatprep.subr.bf16.mxu0 %v5134
    %5431 = vmatpush1.bf16.msra.mxu0 %v5133
    %5432 = vmatprep.mubr.bf16.mxu0 %v4518
    %5433 = vmatmul.mubr.bf16.gmra.mrb[0].mxu0 %v4517
    %v5434 = vpop.f32.mrb[0].mxu0
    %v5435 = vadd.f32 %v5362, %v5434
    %v5436 = vpop.f32.mrb[0].mxu0
    %v5437 = vadd.f32 %v5364, %v5436
    %v5438 = vpop.f32.mrb[0].mxu0
    %v5439 = vadd.f32 %v5366, %v5438
    %v5440 = vpop.f32.mrb[0].mxu0
    %v5441 = vadd.f32 %v5368, %v5440
    %5442 = vmatprep.mubr.bf16.mxu0 %v4526
    %5443 = vmatmul.mubr.bf16.gmra.mrb[0].mxu0 %v4525
    %v5444 = vpop.f32.mrb[0].mxu0
    %v5445 = vadd.f32 %v5372, %v5444
    %v5446 = vpop.f32.mrb[0].mxu0
    %v5447 = vadd.f32 %v5374, %v5446
    %v5448 = vpop.f32.mrb[0].mxu0
    %v5449 = vadd.f32 %v5376, %v5448
    %v5450 = vpop.f32.mrb[0].mxu0
    %v5451 = vadd.f32 %v5378, %v5450
    %5452 = vmatprep.mubr.bf16.mxu0 %v4534
    %5453 = vmatmul.mubr.bf16.gmra.mrb[0].mxu0 %v4533
    %v5454 = vpop.f32.mrb[0].mxu0
    %v5455 = vadd.f32 %v5382, %v5454
    %v5456 = vpop.f32.mrb[0].mxu0
    %v5457 = vadd.f32 %v5384, %v5456
    %v5458 = vpop.f32.mrb[0].mxu0
    %v5459 = vadd.f32 %v5386, %v5458
    %v5460 = vpop.f32.mrb[0].mxu0
    %v5461 = vadd.f32 %v5388, %v5460
    %5462 = vmatprep.mubr.bf16.mxu0 %v4542
    %5463 = vmatmul.mubr.bf16.gmra.mrb[0].mxu0 %v4541
    %v5464 = vpop.f32.mrb[0].mxu0
    %v5465 = vadd.f32 %v5392, %v5464
    %v5466 = vpop.f32.mrb[0].mxu0
    %v5467 = vadd.f32 %v5394, %v5466
    %v5468 = vpop.f32.mrb[0].mxu0
    %v5469 = vadd.f32 %v5396, %v5468
    %v5470 = vpop.f32.mrb[0].mxu0
    %v5471 = vadd.f32 %v5398, %v5470
    %5472 = vdwg.mxu0
    %5473 = vmatprep.subr.bf16.mxu0 %v5136
    %5474 = vmatpush1.bf16.msra.mxu0 %v5135
    %5475 = vmatprep.subr.bf16.mxu0 %v5138
    %5476 = vmatpush1.bf16.msra.mxu0 %v5137
    %5477 = vmatprep.subr.bf16.mxu0 %v5140
    %5478 = vmatpush1.bf16.msra.mxu0 %v5139
    %5479 = vmatprep.subr.bf16.mxu0 %v5142
    %5480 = vmatpush1.bf16.msra.mxu0 %v5141
    %5481 = vmatprep.subr.bf16.mxu0 %v5144
    %5482 = vmatpush1.bf16.msra.mxu0 %v5143
    %5483 = vmatprep.subr.bf16.mxu0 %v5146
    %5484 = vmatpush1.bf16.msra.mxu0 %v5145
    %5485 = vmatprep.subr.bf16.mxu0 %v5148
    %5486 = vmatpush1.bf16.msra.mxu0 %v5147
    %5487 = vmatprep.subr.bf16.mxu0 %v5150
    %5488 = vmatpush1.bf16.msra.mxu0 %v5149
    %5489 = vmatprep.subr.bf16.mxu0 %v5152
    %5490 = vmatpush1.bf16.msra.mxu0 %v5151
    %5491 = vmatprep.subr.bf16.mxu0 %v5154
    %5492 = vmatpush1.bf16.msra.mxu0 %v5153
    %5493 = vmatprep.subr.bf16.mxu0 %v5156
    %5494 = vmatpush1.bf16.msra.mxu0 %v5155
    %5495 = vmatprep.subr.bf16.mxu0 %v5158
    %5496 = vmatpush1.bf16.msra.mxu0 %v5157
    %5497 = vmatprep.subr.bf16.mxu0 %v5160
    %5498 = vmatpush1.bf16.msra.mxu0 %v5159
    %5499 = vmatprep.subr.bf16.mxu0 %v5162
    %5500 = vmatpush1.bf16.msra.mxu0 %v5161
    %5501 = vmatprep.subr.bf16.mxu0 %v5164
    %5502 = vmatpush1.bf16.msra.mxu0 %v5163
    %5503 = vmatprep.subr.bf16.mxu0 %v5166
    %5504 = vmatpush1.bf16.msra.mxu0 %v5165
    %5505 = vmatprep.mubr.bf16.mxu0 %v4520
    %5506 = vmatmul.mubr.bf16.gmra.mrb[0].mxu0 %v4519
    %v5507 = vpop.f32.mrb[0].mxu0
    %v5508 = vadd.f32 %v5435, %v5507
    %v5509 = vpop.f32.mrb[0].mxu0
    %v5510 = vadd.f32 %v5437, %v5509
    %v5511 = vpop.f32.mrb[0].mxu0
    %v5512 = vadd.f32 %v5439, %v5511
    %v5513 = vpop.f32.mrb[0].mxu0
    %v5514 = vadd.f32 %v5441, %v5513
    %5515 = vmatprep.mubr.bf16.mxu0 %v4528
    %5516 = vmatmul.mubr.bf16.gmra.mrb[0].mxu0 %v4527
    %v5517 = vpop.f32.mrb[0].mxu0
    %v5518 = vadd.f32 %v5445, %v5517
    %v5519 = vpop.f32.mrb[0].mxu0
    %v5520 = vadd.f32 %v5447, %v5519
    %v5521 = vpop.f32.mrb[0].mxu0
    %v5522 = vadd.f32 %v5449, %v5521
    %v5523 = vpop.f32.mrb[0].mxu0
    %v5524 = vadd.f32 %v5451, %v5523
    %5525 = vmatprep.mubr.bf16.mxu0 %v4536
    %5526 = vmatmul.mubr.bf16.gmra.mrb[0].mxu0 %v4535
    %v5527 = vpop.f32.mrb[0].mxu0
    %v5528 = vadd.f32 %v5455, %v5527
    %v5529 = vpop.f32.mrb[0].mxu0
    %v5530 = vadd.f32 %v5457, %v5529
    %v5531 = vpop.f32.mrb[0].mxu0
    %v5532 = vadd.f32 %v5459, %v5531
    %v5533 = vpop.f32.mrb[0].mxu0
    %v5534 = vadd.f32 %v5461, %v5533
    %5535 = vmatprep.mubr.bf16.mxu0 %v4544
    %5536 = vmatmul.mubr.bf16.gmra.mrb[0].mxu0 %v4543
    %v5537 = vpop.f32.mrb[0].mxu0
    %v5538 = vadd.f32 %v5465, %v5537
    %v5539 = vpop.f32.mrb[0].mxu0
    %v5540 = vadd.f32 %v5467, %v5539
    %v5541 = vpop.f32.mrb[0].mxu0
    %v5542 = vadd.f32 %v5469, %v5541
    %v5543 = vpop.f32.mrb[0].mxu0
    %v5544 = vadd.f32 %v5471, %v5543
    %5545 = vdwg.mxu0
    %5546 = vmatprep.subr.bf16.mxu0 %v5168
    %5547 = vmatpush1.bf16.msra.mxu0 %v5167
    %5548 = vmatprep.subr.bf16.mxu0 %v5170
    %5549 = vmatpush1.bf16.msra.mxu0 %v5169
    %5550 = vmatprep.subr.bf16.mxu0 %v5172
    %5551 = vmatpush1.bf16.msra.mxu0 %v5171
    %5552 = vmatprep.subr.bf16.mxu0 %v5174
    %5553 = vmatpush1.bf16.msra.mxu0 %v5173
    %5554 = vmatprep.subr.bf16.mxu0 %v5176
    %5555 = vmatpush1.bf16.msra.mxu0 %v5175
    %5556 = vmatprep.subr.bf16.mxu0 %v5178
    %5557 = vmatpush1.bf16.msra.mxu0 %v5177
    %5558 = vmatprep.subr.bf16.mxu0 %v5180
    %5559 = vmatpush1.bf16.msra.mxu0 %v5179
    %5560 = vmatprep.subr.bf16.mxu0 %v5182
    %5561 = vmatpush1.bf16.msra.mxu0 %v5181
    %5562 = vmatprep.subr.bf16.mxu0 %v5184
    %5563 = vmatpush1.bf16.msra.mxu0 %v5183
    %5564 = vmatprep.subr.bf16.mxu0 %v5186
    %5565 = vmatpush1.bf16.msra.mxu0 %v5185
    %5566 = vmatprep.subr.bf16.mxu0 %v5188
    %5567 = vmatpush1.bf16.msra.mxu0 %v5187
    %5568 = vmatprep.subr.bf16.mxu0 %v5190
    %5569 = vmatpush1.bf16.msra.mxu0 %v5189
    %5570 = vmatprep.subr.bf16.mxu0 %v5192
    %5571 = vmatpush1.bf16.msra.mxu0 %v5191
    %5572 = vmatprep.subr.bf16.mxu0 %v5194
    %5573 = vmatpush1.bf16.msra.mxu0 %v5193
    %5574 = vmatprep.subr.bf16.mxu0 %v5196
    %5575 = vmatpush1.bf16.msra.mxu0 %v5195
    %5576 = vmatprep.subr.bf16.mxu0 %v5198
    %5577 = vmatpush1.bf16.msra.mxu0 %v5197
    %5578 = vmatprep.mubr.bf16.mxu0 %v4522
    %5579 = vmatmul.mubr.bf16.gmra.mrb[0].mxu0 %v4521
    %v5580 = vpop.f32.mrb[0].mxu0
    %v5581 = vadd.f32 %v5508, %v5580
    %v5582 = vpop.f32.mrb[0].mxu0
    %v5583 = vadd.f32 %v5510, %v5582
    %v5584 = vpop.f32.mrb[0].mxu0
    %v5585 = vadd.f32 %v5512, %v5584
    %v5586 = vpop.f32.mrb[0].mxu0
    %v5587 = vadd.f32 %v5514, %v5586
    %5588 = vmatprep.mubr.bf16.mxu0 %v4530
    %5589 = vmatmul.mubr.bf16.gmra.mrb[0].mxu0 %v4529
    %v5590 = vpop.f32.mrb[0].mxu0
    %v5591 = vadd.f32 %v5518, %v5590
    %v5592 = vpop.f32.mrb[0].mxu0
    %v5593 = vadd.f32 %v5520, %v5592
    %v5594 = vpop.f32.mrb[0].mxu0
    %v5595 = vadd.f32 %v5522, %v5594
    %v5596 = vpop.f32.mrb[0].mxu0
    %v5597 = vadd.f32 %v5524, %v5596
    %5598 = vmatprep.mubr.bf16.mxu0 %v4538
    %5599 = vmatmul.mubr.bf16.gmra.mrb[0].mxu0 %v4537
    %v5600 = vpop.f32.mrb[0].mxu0
    %v5601 = vadd.f32 %v5528, %v5600
    %v5602 = vpop.f32.mrb[0].mxu0
    %v5603 = vadd.f32 %v5530, %v5602
    %v5604 = vpop.f32.mrb[0].mxu0
    %v5605 = vadd.f32 %v5532, %v5604
    %v5606 = vpop.f32.mrb[0].mxu0
    %v5607 = vadd.f32 %v5534, %v5606
    %5608 = vmatprep.mubr.bf16.mxu0 %v4546
    %5609 = vmatmul.mubr.bf16.gmra.mrb[0].mxu0 %v4545
    %v5610 = vpop.f32.mrb[0].mxu0
    %v5611 = vadd.f32 %v5538, %v5610
    %v5612 = vpop.f32.mrb[0].mxu0
    %v5613 = vadd.f32 %v5540, %v5612
    %v5614 = vpop.f32.mrb[0].mxu0
    %v5615 = vadd.f32 %v5542, %v5614
    %v5616 = vpop.f32.mrb[0].mxu0
    %v5617 = vadd.f32 %v5544, %v5616
    %5618 = vdwg.mxu0
    %v5619 = vtanh.pop %v5581
    %v5620 = vtanh.pop %v5583
    %v5621 = vtanh.pop %v5585
    %v5622 = vtanh.pop %v5587
    %v5623 = vtanh.pop %v5591
    %v5624 = vtanh.pop %v5593
    %v5625 = vtanh.pop %v5595
    %v5626 = vtanh.pop %v5597
    %v5627 = vtanh.pop %v5601
    %v5628 = vtanh.pop %v5603
    %v5629 = vtanh.pop %v5605
    %v5630 = vtanh.pop %v5607
    %v5631 = vtanh.pop %v5611
    %v5632 = vtanh.pop %v5613
    %v5633 = vtanh.pop %v5615
    %v5634 = vtanh.pop %v5617
    %5635 = vst [vmem:[%s17] sm:$0xff] %v5619
    %5636 = vst [vmem:[%s17 + $0x8] sm:$0xff] %v5620
    %5637 = vst [vmem:[%s17 + $0x10] sm:$0xff] %v5621
    %5638 = vst [vmem:[%s17 + $0x18] sm:$0xff] %v5622
    %5639 = vst [vmem:[%s17 + $0x20] sm:$0xff] %v5623
    %5640 = vst [vmem:[%s17 + $0x28] sm:$0xff] %v5624
    %5641 = vst [vmem:[%s17 + $0x30] sm:$0xff] %v5625
    %5642 = vst [vmem:[%s17 + $0x38] sm:$0xff] %v5626
    %5643 = vst [vmem:[%s17 + $0x40] sm:$0xff] %v5627
    %5644 = vst [vmem:[%s17 + $0x48] sm:$0xff] %v5628
    %5645 = vst [vmem:[%s17 + $0x50] sm:$0xff] %v5629
    %5646 = vst [vmem:[%s17 + $0x58] sm:$0xff] %v5630
    %5647 = vst [vmem:[%s17 + $0x60] sm:$0xff] %v5631
    %5648 = vst [vmem:[%s17 + $0x68] sm:$0xff] %v5632
    %5649 = vst [vmem:[%s17 + $0x70] sm:$0xff] %v5633
    %5650 = vst [vmem:[%s17 + $0x78] sm:$0xff] %v5634
    // Predicated region
    $region114: #{generator_forward.1} parent=1 // pred_check
      _
    $region115: #{generator_forward.1} parent=1 // pred_check_branch
      %5652 = sbr.rel (0) target = $region117
    $region116: #{generator_forward.1} parent=1 // pred_region
      _
    $region117: #{generator_forward.1} parent=1 // pred_fallthru
      _
    // Predicated region
    $region118: #{generator_forward.1} parent=1 // pred_check
      _
    $region119: #{generator_forward.1} parent=1 // pred_check_branch
      %5654 = sbr.rel (0) target = $region121
    $region120: #{generator_forward.1} parent=1 // pred_region
      _
    $region121: #{generator_forward.1} parent=1 // pred_fallthru
      _
    %5655 = vsyncpa [#allocation3], 1
    %5656 = vsyncpa [#allocation5], 1
    %5657 = vsyncpa [#allocation8], 1
    %5658 = vsyncpa [#allocation11], 1
    %5659 = vsyncpa [#allocation14], 1
    %5660 = vsyncpa [#allocation17], 1

</llo_original>
